<compile_context>
chip_gen: v6e
topology: v6e:2x2x1
jax: 0.10.0
libtpu: 0.0.40
codegen_flags: <defaults>
</compile_context>

<pallas_src>
import math

import jax
import jax.numpy as jnp
from jax.experimental import pallas as pl
from jax.experimental.pallas import tpu as pltpu

NUM_LAYERS = 2
DIM = 32          # hidden_size == input_size == dim
SEQ = 8
BATCH = 2

SUBLANE = 8       # f32 sublane granule
LANE = 128        # lane width


def _vmem_spec():
    return pl.BlockSpec(memory_space=pltpu.MemorySpace.VMEM)


def _hbm_spec():
    return pl.BlockSpec(memory_space=pl.ANY)


# --------------------------- fused Pallas kernel ------------------------------

def blstm_fused_kernel(xin1_ref, h0_ref, c0_ref,
                       wih1_ref, whh1_ref, b1_ref,
                       wih2_hbm, whh2_hbm, b2_ref,
                       wl_hbm, bl_ref,
                       y_ref, hn_ref, cn_ref,
                       xp_scr, xin2_scr, out2_scr,
                       wih2_v, whh2_v, wl_v, dma_sem):
    # xin1_ref : (T*Bp, 2D)   feature-stacked input [x(t) | x(T-1-t)]
    # h0/c0    : (L, Bp, 2H)  packed initial state [fwd | bwd] per layer
    # wih1     : (2D, 8H)     block-structured projection (interleaved gate cols)
    # whh{1,2} : (2H, 8H)     block-diagonal recurrent weights (interleaved cols)
    # b{1,2}   : (1, 8H)      (b_ih + b_hh), both directions, interleaved cols
    # wih2_hbm : (4H, 8H)     layer-2 projection (HBM, DMA'd under layer-1)
    # wl_hbm   : (2H, 128)    final Linear, lane-padded (HBM, DMA'd)
    # bl       : (1, 128)
    # y_ref    : (T*Bp, 128)
    # hn/cn    : (L, Bp, 2H)
    Bp = h0_ref.shape[1]
    H2 = h0_ref.shape[2]
    H = H2 // 2
    N = xin1_ref.shape[0]
    T = N // Bp
    G2 = 2 * H                      # one gate block (both directions)

    # Kick off layer-2 / Linear weight DMAs so they overlap the layer-1 recurrence.
    copies = [
        pltpu.make_async_copy(wih2_hbm, wih2_v, dma_sem.at[0]),
        pltpu.make_async_copy(whh2_hbm, whh2_v, dma_sem.at[1]),
        pltpu.make_async_copy(wl_hbm, wl_v, dma_sem.at[2]),
    ]
    for cp in copies:
        cp.start()

    def run_layer(layer, whh, write_step):
        h_p = h0_ref[layer]         # (Bp, 2H)  [h_fwd | h_bwd]
        c_p = c0_ref[layer]
        for s in range(T):          # static unroll (T small and fixed)
            rf = s * Bp
            # one contiguous (Bp, 8H) row block; time alignment already done
            gates = xp_scr[rf:rf + Bp, :] + jnp.dot(
                h_p, whh, preferred_element_type=jnp.float32)
            sig = jax.nn.sigmoid(gates[:, :3 * G2])   # i, f, o only
            g_g = jnp.tanh(gates[:, 3 * G2:])          # g only
            i_g = sig[:, 0:G2]
            f_g = sig[:, G2:2 * G2]
            o_g = sig[:, 2 * G2:3 * G2]
            c_p = f_g * c_p + i_g * g_g                # no concat: contiguous (Bp,2H)
            h_p = o_g * jnp.tanh(c_p)
            write_step(s, h_p)
        hn_ref[layer] = h_p
        cn_ref[layer] = c_p

    # ---- layer 1: one lane-dense projection for both directions ----
    xp_scr[...] = jnp.dot(xin1_ref[...], wih1_ref[...],
                          preferred_element_type=jnp.float32) + b1_ref[...]

    def write_l1(s, h_p):
        # Build the layer-2 stacked input slab [out1(t) | out1(T-1-t)] directly.
        rf = s * Bp
        rb = (T - 1 - s) * Bp
        xin2_scr[rf:rf + Bp, 0:H] = h_p[:, 0:H]            # fwd feature at time s
        xin2_scr[rb:rb + Bp, H:2 * H] = h_p[:, H:]          # bwd feature at time T-1-s
        xin2_scr[rb:rb + Bp, 2 * H:3 * H] = h_p[:, 0:H]     # reversed-time fwd feature
        xin2_scr[rf:rf + Bp, 3 * H:4 * H] = h_p[:, H:]      # reversed-time bwd feature

    run_layer(0, whh1_ref[...], write_l1)

    # ---- layer 2: weights arrived under the layer-1 recurrence ----
    copies[0].wait()
    copies[1].wait()
    xp_scr[...] = jnp.dot(xin2_scr[...], wih2_v[...],
                          preferred_element_type=jnp.float32) + b2_ref[...]

    def write_l2(s, h_p):
        rf = s * Bp
        rb = (T - 1 - s) * Bp
        out2_scr[rf:rf + Bp, 0:H] = h_p[:, 0:H]
        out2_scr[rb:rb + Bp, H:2 * H] = h_p[:, H:]

    run_layer(1, whh2_v[...], write_l2)

    # ---- final Linear fused as epilogue (lane-dense, padded to 128 cols) ----
    copies[2].wait()
    y_ref[...] = jnp.dot(out2_scr[...], wl_v[...],
                         preferred_element_type=jnp.float32) + bl_ref[...]


# ------------------------------ param handling --------------------------------

def init_params(key, dim, num_layers=NUM_LAYERS):
    H = dim
    params = {"lstm": [], "linear": None}
    n_keys = num_layers * 2 * 4 + 2
    keys = list(jax.random.split(key, n_keys))
    k = 0
    bound = 1.0 / math.sqrt(H)
    for layer in range(num_layers):
        dirs = []
        for _d in range(2):
            din = dim if layer == 0 else 2 * dim
            wih = jax.random.uniform(keys[k], (4 * H, din), jnp.float32, -bound, bound); k += 1
            whh = jax.random.uniform(keys[k], (4 * H, H), jnp.float32, -bound, bound); k += 1
            bih = jax.random.uniform(keys[k], (4 * H,), jnp.float32, -bound, bound); k += 1
            bhh = jax.random.uniform(keys[k], (4 * H,), jnp.float32, -bound, bound); k += 1
            dirs.append({
                "wih_t": wih.T,                          # (Din, 4H) cols [i f g o]
                "whh_t": whh.T,                          # (H, 4H)
                "bias": (bih + bhh).reshape(1, 4 * H),   # (1, 4H)
            })
        params["lstm"].append(dirs)
    lb = 1.0 / math.sqrt(2 * H)
    wl = jax.random.uniform(keys[k], (H, 2 * H), jnp.float32, -lb, lb); k += 1
    bl = jax.random.uniform(keys[k], (H,), jnp.float32, -lb, lb); k += 1
    params["linear"] = {"w_t": wl.T, "b": bl.reshape(1, H)}
    return params


def _reorder_ifog(w, H):
    """Reorder last-axis gate blocks from PyTorch [i f g o] to [i f o g]."""
    return jnp.concatenate([w[..., :2 * H], w[..., 3 * H:4 * H], w[..., 2 * H:3 * H]],
                           axis=-1)


def _interleave_dirs(wf, wb, H):
    """(.., 4H) fwd + (.., 4H) bwd (both [i f o g]) -> (.., 8H) direction-interleaved."""
    parts = []
    for k in range(4):
        parts.append(wf[..., k * H:(k + 1) * H])
        parts.append(wb[..., k * H:(k + 1) * H])
    return jnp.concatenate(parts, axis=-1)


def _pack_layer(fwd, bwd):
    """Pack a layer's two directions into MXU-friendly fused operands.

    Column order: [i_f i_b | f_f f_b | o_f o_b | g_f g_b] (each block H wide).
    W_ih rows: first Din rows act on the forward-time input, last Din rows on the
    time-reversed input (feature-stacked in the wrapper / layer-1 write step).
    """
    H = fwd["whh_t"].shape[0]
    z_ih = jnp.zeros_like(fwd["wih_t"])
    wih_f = _interleave_dirs(_reorder_ifog(fwd["wih_t"], H), z_ih, H)
    wih_b = _interleave_dirs(z_ih, _reorder_ifog(bwd["wih_t"], H), H)
    wih_p = jnp.concatenate([wih_f, wih_b], axis=0)                    # (2*Din, 8H)

    z_hh = jnp.zeros_like(fwd["whh_t"])
    whh_f = _interleave_dirs(_reorder_ifog(fwd["whh_t"], H), z_hh, H)
    whh_b = _interleave_dirs(z_hh, _reorder_ifog(bwd["whh_t"], H), H)
    whh_p = jnp.concatenate([whh_f, whh_b], axis=0)                    # (2H, 8H)

    b_p = _interleave_dirs(_reorder_ifog(fwd["bias"], H),
                           _reorder_ifog(bwd["bias"], H), H)           # (1, 8H)
    return wih_p, whh_p, b_p


# ------------------------------ BLSTM forward ----------------------------------

def blstm_forward(params, x, hidden=None):
    """Matches torch BLSTM.forward: returns (y, (h_n, c_n))."""
    T, B, D = x.shape
    H = D
    L = len(params["lstm"])
    assert L == 2, "fused kernel is specialized to the module default (2 layers)"

    Bp = ((B + SUBLANE - 1) // SUBLANE) * SUBLANE      # pad batch to sublane granule
    HP = LANE                                          # lane-padded Linear output

    # ---- batch padding (padded rows are zero; sliced off afterwards) ----
    if Bp != B:
        x_p = jnp.zeros((T, Bp, D), jnp.float32).at[:, :B].set(x)
    else:
        x_p = x.astype(jnp.float32)

    if hidden is None:
        h0p = jnp.zeros((L, Bp, 2 * H), jnp.float32)
        c0p = jnp.zeros((L, Bp, 2 * H), jnp.float32)
    else:
        h0, c0 = hidden                                # (2L, B, H) each
        h0p = jnp.zeros((L, Bp, 2 * H), jnp.float32).at[:, :B].set(
            jnp.concatenate([h0[0::2], h0[1::2]], axis=-1))
        c0p = jnp.zeros((L, Bp, 2 * H), jnp.float32).at[:, :B].set(
            jnp.concatenate([c0[0::2], c0[1::2]], axis=-1))

    # Feature-stacked layer-1 input: row-block t holds [x(t) | x(T-1-t)], so one
    # projection yields time-aligned pre-activations for BOTH directions.
    xin1 = jnp.concatenate([x_p, x_p[::-1]], axis=-1).reshape(T * Bp, 2 * D)

    wih1, whh1, b1 = _pack_layer(*params["lstm"][0])
    wih2, whh2, b2 = _pack_layer(*params["lstm"][1])
    wl_p = jnp.zeros((2 * H, HP), jnp.float32).at[:, :H].set(params["linear"]["w_t"])
    bl_p = jnp.zeros((1, HP), jnp.float32).at[:, :H].set(params["linear"]["b"])

    y2d, hn_p, cn_p = pl.pallas_call(
        blstm_fused_kernel,
        out_shape=(
            jax.ShapeDtypeStruct((T * Bp, HP), jnp.float32),
            jax.ShapeDtypeStruct((L, Bp, 2 * H), jnp.float32),
            jax.ShapeDtypeStruct((L, Bp, 2 * H), jnp.float32),
        ),
        in_specs=[
            _vmem_spec(),  # xin1
            _vmem_spec(),  # h0
            _vmem_spec(),  # c0
            _vmem_spec(),  # wih1
            _vmem_spec(),  # whh1
            _vmem_spec(),  # b1
            _hbm_spec(),   # wih2  (DMA'd under layer-1 recurrence)
            _hbm_spec(),   # whh2
            _vmem_spec(),  # b2
            _hbm_spec(),   # wl
            _vmem_spec(),  # bl
        ],
        out_specs=(_vmem_spec(), _vmem_spec(), _vmem_spec()),
        scratch_shapes=[
            pltpu.VMEM((T * Bp, 8 * H), jnp.float32),   # gate pre-activations
            pltpu.VMEM((T * Bp, 4 * H), jnp.float32),   # layer-2 stacked input slab
            pltpu.VMEM((T * Bp, 2 * H), jnp.float32),   # layer-2 output (time-aligned)
            pltpu.VMEM((4 * H, 8 * H), jnp.float32),    # wih2 landing buffer
            pltpu.VMEM((2 * H, 8 * H), jnp.float32),    # whh2 landing buffer
            pltpu.VMEM((2 * H, HP), jnp.float32),       # wl landing buffer
            pltpu.SemaphoreType.DMA((3,)),
        ],
    )(xin1, h0p, c0p, wih1, whh1, b1, wih2, whh2, b2, wl_p, bl_p)

    y = y2d.reshape(T, Bp, HP)[:, :B, :H]
    hn = hn_p[:, :B]
    cn = cn_p[:, :B]
    h_n = hn.reshape(L, B, 2, H).transpose(0, 2, 1, 3).reshape(2 * L, B, H)
    c_n = cn.reshape(L, B, 2, H).transpose(0, 2, 1, 3).reshape(2 * L, B, H)
    return y, (h_n, c_n)


# --------------------------- pure-JAX reference -------------------------------

def blstm_reference(params, x):
    T, B, D = x.shape
    H = D
    layer_in = x
    h_n, c_n = [], []
    for layer in range(len(params["lstm"])):
        outs = []
        for d in range(2):
            p = params["lstm"][layer][d]
            xin = layer_in if d == 0 else layer_in[::-1]
            h = jnp.zeros((B, H), jnp.float32)
            c = jnp.zeros((B, H), jnp.float32)
            hs = []
            for t in range(T):
                gates = xin[t] @ p["wih_t"] + p["bias"][0] + h @ p["whh_t"]
                i = jax.nn.sigmoid(gates[:, :H])
                f = jax.nn.sigmoid(gates[:, H:2 * H])
                g = jnp.tanh(gates[:, 2 * H:3 * H])
                o = jax.nn.sigmoid(gates[:, 3 * H:])
                c = f * c + i * g
                h = o * jnp.tanh(c)
                hs.append(h)
            out = jnp.stack(hs)
            if d == 1:
                out = out[::-1]
            outs.append(out)
            h_n.append(h)
            c_n.append(c)
        layer_in = jnp.concatenate(outs, -1)
    y = layer_in.reshape(T * B, 2 * H) @ params["linear"]["w_t"] + params["linear"]["b"][0]
    return y.reshape(T, B, H), (jnp.stack(h_n), jnp.stack(c_n))


# ----------------------------------- main --------------------------------------

if __name__ == "__main__":
    key = jax.random.PRNGKey(0)
    kx, kp = jax.random.split(key)
    x = jax.random.normal(kx, (SEQ, BATCH, DIM), dtype=jnp.float32)
    params = init_params(kp, DIM, NUM_LAYERS)

    fwd = jax.jit(blstm_forward)
    y, (h_n, c_n) = fwd(params, x)
    jax.block_until_ready((y, h_n, c_n))

    assert y.shape == (SEQ, BATCH, DIM)
    assert h_n.shape == (NUM_LAYERS * 2, BATCH, DIM)
    assert c_n.shape == (NUM_LAYERS * 2, BATCH, DIM)

    y_ref, (h_ref, c_ref) = blstm_reference(params, x)
    assert float(jnp.max(jnp.abs(y - y_ref))) < 5e-3
    assert float(jnp.max(jnp.abs(h_n - h_ref))) < 5e-3
    assert float(jnp.max(jnp.abs(c_n - c_ref))) < 5e-3

    print("KERNEL_OK")
</pallas_src>

<mosaic_0001>
module attributes {stable_mosaic.version = 11 : i64} {
  func.func @blstm_fused_kernel(%arg0: memref<64x64xf32, #tpu.memory_space<vmem>>, %arg1: memref<2x8x64xf32, #tpu.memory_space<vmem>>, %arg2: memref<2x8x64xf32, #tpu.memory_space<vmem>>, %arg3: memref<64x256xf32, #tpu.memory_space<vmem>>, %arg4: memref<64x256xf32, #tpu.memory_space<vmem>>, %arg5: memref<1x256xf32, #tpu.memory_space<vmem>>, %arg6: memref<128x256xf32, #tpu.memory_space<any>>, %arg7: memref<64x256xf32, #tpu.memory_space<any>>, %arg8: memref<1x256xf32, #tpu.memory_space<vmem>>, %arg9: memref<64x128xf32, #tpu.memory_space<any>>, %arg10: memref<1x128xf32, #tpu.memory_space<vmem>>, %arg11: memref<64x128xf32, #tpu.memory_space<vmem>>, %arg12: memref<2x8x64xf32, #tpu.memory_space<vmem>>, %arg13: memref<2x8x64xf32, #tpu.memory_space<vmem>>, %arg14: memref<64x256xf32, #tpu.memory_space<vmem>>, %arg15: memref<64x128xf32, #tpu.memory_space<vmem>>, %arg16: memref<64x64xf32, #tpu.memory_space<vmem>>, %arg17: memref<128x256xf32, #tpu.memory_space<vmem>>, %arg18: memref<64x256xf32, #tpu.memory_space<vmem>>, %arg19: memref<64x128xf32, #tpu.memory_space<vmem>>, %arg20: memref<3x!tpu.dma_semaphore, #tpu.memory_space<semaphore_mem>>) attributes {dimension_semantics = [], scalar_prefetch = 0 : i64, scratch_operands = 7 : i64, tpu.core_type = #tpu.core_type<tc>} {
    %c0_i32 = arith.constant 0 : i32
    %0 = tpu.memref_slice %arg20[%c0_i32] : memref<3x!tpu.dma_semaphore, #tpu.memory_space<semaphore_mem>> -> memref<1x!tpu.dma_semaphore, #tpu.memory_space<semaphore_mem>>
    %1 = tpu.memref_squeeze %0 : memref<1x!tpu.dma_semaphore, #tpu.memory_space<semaphore_mem>> -> memref<!tpu.dma_semaphore, #tpu.memory_space<semaphore_mem>>
    tpu.enqueue_dma source(%arg6 : memref<128x256xf32, #tpu.memory_space<any>>) target(%arg17 : memref<128x256xf32, #tpu.memory_space<vmem>>) target_semaphore(%1 : memref<!tpu.dma_semaphore, #tpu.memory_space<semaphore_mem>>)
    %c1_i32 = arith.constant 1 : i32
    %2 = tpu.memref_slice %arg20[%c1_i32] : memref<3x!tpu.dma_semaphore, #tpu.memory_space<semaphore_mem>> -> memref<1x!tpu.dma_semaphore, #tpu.memory_space<semaphore_mem>>
    %3 = tpu.memref_squeeze %2 : memref<1x!tpu.dma_semaphore, #tpu.memory_space<semaphore_mem>> -> memref<!tpu.dma_semaphore, #tpu.memory_space<semaphore_mem>>
    tpu.enqueue_dma source(%arg7 : memref<64x256xf32, #tpu.memory_space<any>>) target(%arg18 : memref<64x256xf32, #tpu.memory_space<vmem>>) target_semaphore(%3 : memref<!tpu.dma_semaphore, #tpu.memory_space<semaphore_mem>>)
    %c2_i32 = arith.constant 2 : i32
    %4 = tpu.memref_slice %arg20[%c2_i32] : memref<3x!tpu.dma_semaphore, #tpu.memory_space<semaphore_mem>> -> memref<1x!tpu.dma_semaphore, #tpu.memory_space<semaphore_mem>>
    %5 = tpu.memref_squeeze %4 : memref<1x!tpu.dma_semaphore, #tpu.memory_space<semaphore_mem>> -> memref<!tpu.dma_semaphore, #tpu.memory_space<semaphore_mem>>
    tpu.enqueue_dma source(%arg9 : memref<64x128xf32, #tpu.memory_space<any>>) target(%arg19 : memref<64x128xf32, #tpu.memory_space<vmem>>) target_semaphore(%5 : memref<!tpu.dma_semaphore, #tpu.memory_space<semaphore_mem>>)
    %c0 = arith.constant 0 : index
    %c0_0 = arith.constant 0 : index
    %6 = vector.load %arg0[%c0, %c0_0] : memref<64x64xf32, #tpu.memory_space<vmem>>, vector<64x64xf32>
    %c0_1 = arith.constant 0 : index
    %c0_2 = arith.constant 0 : index
    %7 = vector.load %arg3[%c0_1, %c0_2] : memref<64x256xf32, #tpu.memory_space<vmem>>, vector<64x256xf32>
    %cst = arith.constant dense<0.000000e+00> : vector<64x256xf32>
    %8 = tpu.matmul %6, %7, %cst {dimension_numbers = #tpu.dot_dimension_numbers<[1], [0], [0], [1], [0, 0, 1, 1], [], []>} : vector<64x64xf32>, vector<64x256xf32>, vector<64x256xf32> -> vector<64x256xf32>
    %c0_3 = arith.constant 0 : index
    %c0_4 = arith.constant 0 : index
    %9 = vector.load %arg5[%c0_3, %c0_4] : memref<1x256xf32, #tpu.memory_space<vmem>>, vector<1x256xf32>
    %10 = vector.broadcast %9 : vector<1x256xf32> to vector<64x256xf32>
    %11 = arith.addf %8, %10 : vector<64x256xf32>
    %c0_5 = arith.constant 0 : index
    %c0_6 = arith.constant 0 : index
    %12 = vector.load %arg14[%c0_5, %c0_6] : memref<64x256xf32, #tpu.memory_space<vmem>>, vector<64x256xf32>
    tpu.vector_store %arg14[%c0_5, %c0_6], %11 {strides = array<i32>} : memref<64x256xf32, #tpu.memory_space<vmem>>, vector<64x256xf32>,
    %c0_7 = arith.constant 0 : index
    %c0_8 = arith.constant 0 : index
    %13 = vector.load %arg4[%c0_7, %c0_8] : memref<64x256xf32, #tpu.memory_space<vmem>>, vector<64x256xf32>
    %c0_9 = arith.constant 0 : index
    %c0_10 = arith.constant 0 : index
    %c0_11 = arith.constant 0 : index
    %14 = vector.load %arg1[%c0_9, %c0_10, %c0_11] : memref<2x8x64xf32, #tpu.memory_space<vmem>>, vector<1x8x64xf32>
    %15 = vector.shape_cast %14 : vector<1x8x64xf32> to vector<8x64xf32>
    %c0_12 = arith.constant 0 : index
    %c0_13 = arith.constant 0 : index
    %c0_14 = arith.constant 0 : index
    %16 = vector.load %arg2[%c0_12, %c0_13, %c0_14] : memref<2x8x64xf32, #tpu.memory_space<vmem>>, vector<1x8x64xf32>
    %17 = vector.shape_cast %16 : vector<1x8x64xf32> to vector<8x64xf32>
    %c0_15 = arith.constant 0 : index
    %c0_16 = arith.constant 0 : index
    %18 = vector.load %arg14[%c0_15, %c0_16] : memref<64x256xf32, #tpu.memory_space<vmem>>, vector<8x256xf32>
    %cst_17 = arith.constant dense<0.000000e+00> : vector<8x256xf32>
    %19 = tpu.matmul %15, %13, %cst_17 {dimension_numbers = #tpu.dot_dimension_numbers<[1], [0], [0], [1], [0, 0, 1, 1], [], []>} : vector<8x64xf32>, vector<64x256xf32>, vector<8x256xf32> -> vector<8x256xf32>
    %20 = arith.addf %18, %19 : vector<8x256xf32>
    %21 = vector.extract_strided_slice %20 {offsets = [0, 0], sizes = [8, 192], strides = [1, 1]} : vector<8x256xf32> to vector<8x192xf32>
    %22 = arith.negf %21 : vector<8x192xf32>
    %23 = math.exp %22 : vector<8x192xf32>
    %cst_18 = arith.constant 1.000000e+00 : f32
    %24 = vector.broadcast %cst_18 : f32 to vector<8x192xf32>
    %25 = arith.addf %24, %23 : vector<8x192xf32>
    %26 = arith.divf %24, %25 : vector<8x192xf32>
    %27 = vector.extract_strided_slice %20 {offsets = [0, 192], sizes = [8, 64], strides = [1, 1]} : vector<8x256xf32> to vector<8x64xf32>
    %28 = math.tanh %27 : vector<8x64xf32>
    %29 = vector.extract_strided_slice %26 {offsets = [0, 0], sizes = [8, 64], strides = [1, 1]} : vector<8x192xf32> to vector<8x64xf32>
    %30 = vector.extract_strided_slice %26 {offsets = [0, 64], sizes = [8, 64], strides = [1, 1]} : vector<8x192xf32> to vector<8x64xf32>
    %31 = vector.extract_strided_slice %26 {offsets = [0, 128], sizes = [8, 64], strides = [1, 1]} : vector<8x192xf32> to vector<8x64xf32>
    %32 = arith.mulf %30, %17 : vector<8x64xf32>
    %33 = arith.mulf %29, %28 : vector<8x64xf32>
    %34 = arith.addf %32, %33 : vector<8x64xf32>
    %35 = math.tanh %34 : vector<8x64xf32>
    %36 = arith.mulf %31, %35 : vector<8x64xf32>
    %37 = vector.extract_strided_slice %36 {offsets = [0, 0], sizes = [8, 32], strides = [1, 1]} : vector<8x64xf32> to vector<8x32xf32>
    %c0_19 = arith.constant 0 : index
    %c0_20 = arith.constant 0 : index
    %38 = vector.load %arg15[%c0_19, %c0_20] : memref<64x128xf32, #tpu.memory_space<vmem>>, vector<8x32xf32>
    tpu.vector_store %arg15[%c0_19, %c0_20], %37 {strides = array<i32>} : memref<64x128xf32, #tpu.memory_space<vmem>>, vector<8x32xf32>,
    %39 = vector.extract_strided_slice %36 {offsets = [0, 32], sizes = [8, 32], strides = [1, 1]} : vector<8x64xf32> to vector<8x32xf32>
    %c56 = arith.constant 56 : index
    %c32 = arith.constant 32 : index
    %40 = vector.load %arg15[%c56, %c32] : memref<64x128xf32, #tpu.memory_space<vmem>>, vector<8x32xf32>
    tpu.vector_store %arg15[%c56, %c32], %39 {strides = array<i32>} : memref<64x128xf32, #tpu.memory_space<vmem>>, vector<8x32xf32>,
    %41 = vector.extract_strided_slice %36 {offsets = [0, 0], sizes = [8, 32], strides = [1, 1]} : vector<8x64xf32> to vector<8x32xf32>
    %c56_21 = arith.constant 56 : index
    %c64 = arith.constant 64 : index
    %42 = vector.load %arg15[%c56_21, %c64] : memref<64x128xf32, #tpu.memory_space<vmem>>, vector<8x32xf32>
    tpu.vector_store %arg15[%c56_21, %c64], %41 {strides = array<i32>} : memref<64x128xf32, #tpu.memory_space<vmem>>, vector<8x32xf32>,
    %43 = vector.extract_strided_slice %36 {offsets = [0, 32], sizes = [8, 32], strides = [1, 1]} : vector<8x64xf32> to vector<8x32xf32>
    %c0_22 = arith.constant 0 : index
    %c96 = arith.constant 96 : index
    %44 = vector.load %arg15[%c0_22, %c96] : memref<64x128xf32, #tpu.memory_space<vmem>>, vector<8x32xf32>
    tpu.vector_store %arg15[%c0_22, %c96], %43 {strides = array<i32>} : memref<64x128xf32, #tpu.memory_space<vmem>>, vector<8x32xf32>,
    %c8 = arith.constant 8 : index
    %c0_23 = arith.constant 0 : index
    %45 = vector.load %arg14[%c8, %c0_23] : memref<64x256xf32, #tpu.memory_space<vmem>>, vector<8x256xf32>
    %cst_24 = arith.constant dense<0.000000e+00> : vector<8x256xf32>
    %46 = tpu.matmul %36, %13, %cst_24 {dimension_numbers = #tpu.dot_dimension_numbers<[1], [0], [0], [1], [0, 0, 1, 1], [], []>} : vector<8x64xf32>, vector<64x256xf32>, vector<8x256xf32> -> vector<8x256xf32>
    %47 = arith.addf %45, %46 : vector<8x256xf32>
    %48 = vector.extract_strided_slice %47 {offsets = [0, 0], sizes = [8, 192], strides = [1, 1]} : vector<8x256xf32> to vector<8x192xf32>
    %49 = arith.negf %48 : vector<8x192xf32>
    %50 = math.exp %49 : vector<8x192xf32>
    %cst_25 = arith.constant 1.000000e+00 : f32
    %51 = vector.broadcast %cst_25 : f32 to vector<8x192xf32>
    %52 = arith.addf %51, %50 : vector<8x192xf32>
    %53 = arith.divf %51, %52 : vector<8x192xf32>
    %54 = vector.extract_strided_slice %47 {offsets = [0, 192], sizes = [8, 64], strides = [1, 1]} : vector<8x256xf32> to vector<8x64xf32>
    %55 = math.tanh %54 : vector<8x64xf32>
    %56 = vector.extract_strided_slice %53 {offsets = [0, 0], sizes = [8, 64], strides = [1, 1]} : vector<8x192xf32> to vector<8x64xf32>
    %57 = vector.extract_strided_slice %53 {offsets = [0, 64], sizes = [8, 64], strides = [1, 1]} : vector<8x192xf32> to vector<8x64xf32>
    %58 = vector.extract_strided_slice %53 {offsets = [0, 128], sizes = [8, 64], strides = [1, 1]} : vector<8x192xf32> to vector<8x64xf32>
    %59 = arith.mulf %57, %34 : vector<8x64xf32>
    %60 = arith.mulf %56, %55 : vector<8x64xf32>
    %61 = arith.addf %59, %60 : vector<8x64xf32>
    %62 = math.tanh %61 : vector<8x64xf32>
    %63 = arith.mulf %58, %62 : vector<8x64xf32>
    %64 = vector.extract_strided_slice %63 {offsets = [0, 0], sizes = [8, 32], strides = [1, 1]} : vector<8x64xf32> to vector<8x32xf32>
    %c8_26 = arith.constant 8 : index
    %c0_27 = arith.constant 0 : index
    %65 = vector.load %arg15[%c8_26, %c0_27] : memref<64x128xf32, #tpu.memory_space<vmem>>, vector<8x32xf32>
    tpu.vector_store %arg15[%c8_26, %c0_27], %64 {strides = array<i32>} : memref<64x128xf32, #tpu.memory_space<vmem>>, vector<8x32xf32>,
    %66 = vector.extract_strided_slice %63 {offsets = [0, 32], sizes = [8, 32], strides = [1, 1]} : vector<8x64xf32> to vector<8x32xf32>
    %c48 = arith.constant 48 : index
    %c32_28 = arith.constant 32 : index
    %67 = vector.load %arg15[%c48, %c32_28] : memref<64x128xf32, #tpu.memory_space<vmem>>, vector<8x32xf32>
    tpu.vector_store %arg15[%c48, %c32_28], %66 {strides = array<i32>} : memref<64x128xf32, #tpu.memory_space<vmem>>, vector<8x32xf32>,
    %68 = vector.extract_strided_slice %63 {offsets = [0, 0], sizes = [8, 32], strides = [1, 1]} : vector<8x64xf32> to vector<8x32xf32>
    %c48_29 = arith.constant 48 : index
    %c64_30 = arith.constant 64 : index
    %69 = vector.load %arg15[%c48_29, %c64_30] : memref<64x128xf32, #tpu.memory_space<vmem>>, vector<8x32xf32>
    tpu.vector_store %arg15[%c48_29, %c64_30], %68 {strides = array<i32>} : memref<64x128xf32, #tpu.memory_space<vmem>>, vector<8x32xf32>,
    %70 = vector.extract_strided_slice %63 {offsets = [0, 32], sizes = [8, 32], strides = [1, 1]} : vector<8x64xf32> to vector<8x32xf32>
    %c8_31 = arith.constant 8 : index
    %c96_32 = arith.constant 96 : index
    %71 = vector.load %arg15[%c8_31, %c96_32] : memref<64x128xf32, #tpu.memory_space<vmem>>, vector<8x32xf32>
    tpu.vector_store %arg15[%c8_31, %c96_32], %70 {strides = array<i32>} : memref<64x128xf32, #tpu.memory_space<vmem>>, vector<8x32xf32>,
    %c16 = arith.constant 16 : index
    %c0_33 = arith.constant 0 : index
    %72 = vector.load %arg14[%c16, %c0_33] : memref<64x256xf32, #tpu.memory_space<vmem>>, vector<8x256xf32>
    %cst_34 = arith.constant dense<0.000000e+00> : vector<8x256xf32>
    %73 = tpu.matmul %63, %13, %cst_34 {dimension_numbers = #tpu.dot_dimension_numbers<[1], [0], [0], [1], [0, 0, 1, 1], [], []>} : vector<8x64xf32>, vector<64x256xf32>, vector<8x256xf32> -> vector<8x256xf32>
    %74 = arith.addf %72, %73 : vector<8x256xf32>
    %75 = vector.extract_strided_slice %74 {offsets = [0, 0], sizes = [8, 192], strides = [1, 1]} : vector<8x256xf32> to vector<8x192xf32>
    %76 = arith.negf %75 : vector<8x192xf32>
    %77 = math.exp %76 : vector<8x192xf32>
    %cst_35 = arith.constant 1.000000e+00 : f32
    %78 = vector.broadcast %cst_35 : f32 to vector<8x192xf32>
    %79 = arith.addf %78, %77 : vector<8x192xf32>
    %80 = arith.divf %78, %79 : vector<8x192xf32>
    %81 = vector.extract_strided_slice %74 {offsets = [0, 192], sizes = [8, 64], strides = [1, 1]} : vector<8x256xf32> to vector<8x64xf32>
    %82 = math.tanh %81 : vector<8x64xf32>
    %83 = vector.extract_strided_slice %80 {offsets = [0, 0], sizes = [8, 64], strides = [1, 1]} : vector<8x192xf32> to vector<8x64xf32>
    %84 = vector.extract_strided_slice %80 {offsets = [0, 64], sizes = [8, 64], strides = [1, 1]} : vector<8x192xf32> to vector<8x64xf32>
    %85 = vector.extract_strided_slice %80 {offsets = [0, 128], sizes = [8, 64], strides = [1, 1]} : vector<8x192xf32> to vector<8x64xf32>
    %86 = arith.mulf %84, %61 : vector<8x64xf32>
    %87 = arith.mulf %83, %82 : vector<8x64xf32>
    %88 = arith.addf %86, %87 : vector<8x64xf32>
    %89 = math.tanh %88 : vector<8x64xf32>
    %90 = arith.mulf %85, %89 : vector<8x64xf32>
    %91 = vector.extract_strided_slice %90 {offsets = [0, 0], sizes = [8, 32], strides = [1, 1]} : vector<8x64xf32> to vector<8x32xf32>
    %c16_36 = arith.constant 16 : index
    %c0_37 = arith.constant 0 : index
    %92 = vector.load %arg15[%c16_36, %c0_37] : memref<64x128xf32, #tpu.memory_space<vmem>>, vector<8x32xf32>
    tpu.vector_store %arg15[%c16_36, %c0_37], %91 {strides = array<i32>} : memref<64x128xf32, #tpu.memory_space<vmem>>, vector<8x32xf32>,
    %93 = vector.extract_strided_slice %90 {offsets = [0, 32], sizes = [8, 32], strides = [1, 1]} : vector<8x64xf32> to vector<8x32xf32>
    %c40 = arith.constant 40 : index
    %c32_38 = arith.constant 32 : index
    %94 = vector.load %arg15[%c40, %c32_38] : memref<64x128xf32, #tpu.memory_space<vmem>>, vector<8x32xf32>
    tpu.vector_store %arg15[%c40, %c32_38], %93 {strides = array<i32>} : memref<64x128xf32, #tpu.memory_space<vmem>>, vector<8x32xf32>,
    %95 = vector.extract_strided_slice %90 {offsets = [0, 0], sizes = [8, 32], strides = [1, 1]} : vector<8x64xf32> to vector<8x32xf32>
    %c40_39 = arith.constant 40 : index
    %c64_40 = arith.constant 64 : index
    %96 = vector.load %arg15[%c40_39, %c64_40] : memref<64x128xf32, #tpu.memory_space<vmem>>, vector<8x32xf32>
    tpu.vector_store %arg15[%c40_39, %c64_40], %95 {strides = array<i32>} : memref<64x128xf32, #tpu.memory_space<vmem>>, vector<8x32xf32>,
    %97 = vector.extract_strided_slice %90 {offsets = [0, 32], sizes = [8, 32], strides = [1, 1]} : vector<8x64xf32> to vector<8x32xf32>
    %c16_41 = arith.constant 16 : index
    %c96_42 = arith.constant 96 : index
    %98 = vector.load %arg15[%c16_41, %c96_42] : memref<64x128xf32, #tpu.memory_space<vmem>>, vector<8x32xf32>
    tpu.vector_store %arg15[%c16_41, %c96_42], %97 {strides = array<i32>} : memref<64x128xf32, #tpu.memory_space<vmem>>, vector<8x32xf32>,
    %c24 = arith.constant 24 : index
    %c0_43 = arith.constant 0 : index
    %99 = vector.load %arg14[%c24, %c0_43] : memref<64x256xf32, #tpu.memory_space<vmem>>, vector<8x256xf32>
    %cst_44 = arith.constant dense<0.000000e+00> : vector<8x256xf32>
    %100 = tpu.matmul %90, %13, %cst_44 {dimension_numbers = #tpu.dot_dimension_numbers<[1], [0], [0], [1], [0, 0, 1, 1], [], []>} : vector<8x64xf32>, vector<64x256xf32>, vector<8x256xf32> -> vector<8x256xf32>
    %101 = arith.addf %99, %100 : vector<8x256xf32>
    %102 = vector.extract_strided_slice %101 {offsets = [0, 0], sizes = [8, 192], strides = [1, 1]} : vector<8x256xf32> to vector<8x192xf32>
    %103 = arith.negf %102 : vector<8x192xf32>
    %104 = math.exp %103 : vector<8x192xf32>
    %cst_45 = arith.constant 1.000000e+00 : f32
    %105 = vector.broadcast %cst_45 : f32 to vector<8x192xf32>
    %106 = arith.addf %105, %104 : vector<8x192xf32>
    %107 = arith.divf %105, %106 : vector<8x192xf32>
    %108 = vector.extract_strided_slice %101 {offsets = [0, 192], sizes = [8, 64], strides = [1, 1]} : vector<8x256xf32> to vector<8x64xf32>
    %109 = math.tanh %108 : vector<8x64xf32>
    %110 = vector.extract_strided_slice %107 {offsets = [0, 0], sizes = [8, 64], strides = [1, 1]} : vector<8x192xf32> to vector<8x64xf32>
    %111 = vector.extract_strided_slice %107 {offsets = [0, 64], sizes = [8, 64], strides = [1, 1]} : vector<8x192xf32> to vector<8x64xf32>
    %112 = vector.extract_strided_slice %107 {offsets = [0, 128], sizes = [8, 64], strides = [1, 1]} : vector<8x192xf32> to vector<8x64xf32>
    %113 = arith.mulf %111, %88 : vector<8x64xf32>
    %114 = arith.mulf %110, %109 : vector<8x64xf32>
    %115 = arith.addf %113, %114 : vector<8x64xf32>
    %116 = math.tanh %115 : vector<8x64xf32>
    %117 = arith.mulf %112, %116 : vector<8x64xf32>
    %118 = vector.extract_strided_slice %117 {offsets = [0, 0], sizes = [8, 32], strides = [1, 1]} : vector<8x64xf32> to vector<8x32xf32>
    %c24_46 = arith.constant 24 : index
    %c0_47 = arith.constant 0 : index
    %119 = vector.load %arg15[%c24_46, %c0_47] : memref<64x128xf32, #tpu.memory_space<vmem>>, vector<8x32xf32>
    tpu.vector_store %arg15[%c24_46, %c0_47], %118 {strides = array<i32>} : memref<64x128xf32, #tpu.memory_space<vmem>>, vector<8x32xf32>,
    %120 = vector.extract_strided_slice %117 {offsets = [0, 32], sizes = [8, 32], strides = [1, 1]} : vector<8x64xf32> to vector<8x32xf32>
    %c32_48 = arith.constant 32 : index
    %c32_49 = arith.constant 32 : index
    %121 = vector.load %arg15[%c32_48, %c32_49] : memref<64x128xf32, #tpu.memory_space<vmem>>, vector<8x32xf32>
    tpu.vector_store %arg15[%c32_48, %c32_49], %120 {strides = array<i32>} : memref<64x128xf32, #tpu.memory_space<vmem>>, vector<8x32xf32>,
    %122 = vector.extract_strided_slice %117 {offsets = [0, 0], sizes = [8, 32], strides = [1, 1]} : vector<8x64xf32> to vector<8x32xf32>
    %c32_50 = arith.constant 32 : index
    %c64_51 = arith.constant 64 : index
    %123 = vector.load %arg15[%c32_50, %c64_51] : memref<64x128xf32, #tpu.memory_space<vmem>>, vector<8x32xf32>
    tpu.vector_store %arg15[%c32_50, %c64_51], %122 {strides = array<i32>} : memref<64x128xf32, #tpu.memory_space<vmem>>, vector<8x32xf32>,
    %124 = vector.extract_strided_slice %117 {offsets = [0, 32], sizes = [8, 32], strides = [1, 1]} : vector<8x64xf32> to vector<8x32xf32>
    %c24_52 = arith.constant 24 : index
    %c96_53 = arith.constant 96 : index
    %125 = vector.load %arg15[%c24_52, %c96_53] : memref<64x128xf32, #tpu.memory_space<vmem>>, vector<8x32xf32>
    tpu.vector_store %arg15[%c24_52, %c96_53], %124 {strides = array<i32>} : memref<64x128xf32, #tpu.memory_space<vmem>>, vector<8x32xf32>,
    %c32_54 = arith.constant 32 : index
    %c0_55 = arith.constant 0 : index
    %126 = vector.load %arg14[%c32_54, %c0_55] : memref<64x256xf32, #tpu.memory_space<vmem>>, vector<8x256xf32>
    %cst_56 = arith.constant dense<0.000000e+00> : vector<8x256xf32>
    %127 = tpu.matmul %117, %13, %cst_56 {dimension_numbers = #tpu.dot_dimension_numbers<[1], [0], [0], [1], [0, 0, 1, 1], [], []>} : vector<8x64xf32>, vector<64x256xf32>, vector<8x256xf32> -> vector<8x256xf32>
    %128 = arith.addf %126, %127 : vector<8x256xf32>
    %129 = vector.extract_strided_slice %128 {offsets = [0, 0], sizes = [8, 192], strides = [1, 1]} : vector<8x256xf32> to vector<8x192xf32>
    %130 = arith.negf %129 : vector<8x192xf32>
    %131 = math.exp %130 : vector<8x192xf32>
    %cst_57 = arith.constant 1.000000e+00 : f32
    %132 = vector.broadcast %cst_57 : f32 to vector<8x192xf32>
    %133 = arith.addf %132, %131 : vector<8x192xf32>
    %134 = arith.divf %132, %133 : vector<8x192xf32>
    %135 = vector.extract_strided_slice %128 {offsets = [0, 192], sizes = [8, 64], strides = [1, 1]} : vector<8x256xf32> to vector<8x64xf32>
    %136 = math.tanh %135 : vector<8x64xf32>
    %137 = vector.extract_strided_slice %134 {offsets = [0, 0], sizes = [8, 64], strides = [1, 1]} : vector<8x192xf32> to vector<8x64xf32>
    %138 = vector.extract_strided_slice %134 {offsets = [0, 64], sizes = [8, 64], strides = [1, 1]} : vector<8x192xf32> to vector<8x64xf32>
    %139 = vector.extract_strided_slice %134 {offsets = [0, 128], sizes = [8, 64], strides = [1, 1]} : vector<8x192xf32> to vector<8x64xf32>
    %140 = arith.mulf %138, %115 : vector<8x64xf32>
    %141 = arith.mulf %137, %136 : vector<8x64xf32>
    %142 = arith.addf %140, %141 : vector<8x64xf32>
    %143 = math.tanh %142 : vector<8x64xf32>
    %144 = arith.mulf %139, %143 : vector<8x64xf32>
    %145 = vector.extract_strided_slice %144 {offsets = [0, 0], sizes = [8, 32], strides = [1, 1]} : vector<8x64xf32> to vector<8x32xf32>
    %c32_58 = arith.constant 32 : index
    %c0_59 = arith.constant 0 : index
    %146 = vector.load %arg15[%c32_58, %c0_59] : memref<64x128xf32, #tpu.memory_space<vmem>>, vector<8x32xf32>
    tpu.vector_store %arg15[%c32_58, %c0_59], %145 {strides = array<i32>} : memref<64x128xf32, #tpu.memory_space<vmem>>, vector<8x32xf32>,
    %147 = vector.extract_strided_slice %144 {offsets = [0, 32], sizes = [8, 32], strides = [1, 1]} : vector<8x64xf32> to vector<8x32xf32>
    %c24_60 = arith.constant 24 : index
    %c32_61 = arith.constant 32 : index
    %148 = vector.load %arg15[%c24_60, %c32_61] : memref<64x128xf32, #tpu.memory_space<vmem>>, vector<8x32xf32>
    tpu.vector_store %arg15[%c24_60, %c32_61], %147 {strides = array<i32>} : memref<64x128xf32, #tpu.memory_space<vmem>>, vector<8x32xf32>,
    %149 = vector.extract_strided_slice %144 {offsets = [0, 0], sizes = [8, 32], strides = [1, 1]} : vector<8x64xf32> to vector<8x32xf32>
    %c24_62 = arith.constant 24 : index
    %c64_63 = arith.constant 64 : index
    %150 = vector.load %arg15[%c24_62, %c64_63] : memref<64x128xf32, #tpu.memory_space<vmem>>, vector<8x32xf32>
    tpu.vector_store %arg15[%c24_62, %c64_63], %149 {strides = array<i32>} : memref<64x128xf32, #tpu.memory_space<vmem>>, vector<8x32xf32>,
    %151 = vector.extract_strided_slice %144 {offsets = [0, 32], sizes = [8, 32], strides = [1, 1]} : vector<8x64xf32> to vector<8x32xf32>
    %c32_64 = arith.constant 32 : index
    %c96_65 = arith.constant 96 : index
    %152 = vector.load %arg15[%c32_64, %c96_65] : memref<64x128xf32, #tpu.memory_space<vmem>>, vector<8x32xf32>
    tpu.vector_store %arg15[%c32_64, %c96_65], %151 {strides = array<i32>} : memref<64x128xf32, #tpu.memory_space<vmem>>, vector<8x32xf32>,
    %c40_66 = arith.constant 40 : index
    %c0_67 = arith.constant 0 : index
    %153 = vector.load %arg14[%c40_66, %c0_67] : memref<64x256xf32, #tpu.memory_space<vmem>>, vector<8x256xf32>
    %cst_68 = arith.constant dense<0.000000e+00> : vector<8x256xf32>
    %154 = tpu.matmul %144, %13, %cst_68 {dimension_numbers = #tpu.dot_dimension_numbers<[1], [0], [0], [1], [0, 0, 1, 1], [], []>} : vector<8x64xf32>, vector<64x256xf32>, vector<8x256xf32> -> vector<8x256xf32>
    %155 = arith.addf %153, %154 : vector<8x256xf32>
    %156 = vector.extract_strided_slice %155 {offsets = [0, 0], sizes = [8, 192], strides = [1, 1]} : vector<8x256xf32> to vector<8x192xf32>
    %157 = arith.negf %156 : vector<8x192xf32>
    %158 = math.exp %157 : vector<8x192xf32>
    %cst_69 = arith.constant 1.000000e+00 : f32
    %159 = vector.broadcast %cst_69 : f32 to vector<8x192xf32>
    %160 = arith.addf %159, %158 : vector<8x192xf32>
    %161 = arith.divf %159, %160 : vector<8x192xf32>
    %162 = vector.extract_strided_slice %155 {offsets = [0, 192], sizes = [8, 64], strides = [1, 1]} : vector<8x256xf32> to vector<8x64xf32>
    %163 = math.tanh %162 : vector<8x64xf32>
    %164 = vector.extract_strided_slice %161 {offsets = [0, 0], sizes = [8, 64], strides = [1, 1]} : vector<8x192xf32> to vector<8x64xf32>
    %165 = vector.extract_strided_slice %161 {offsets = [0, 64], sizes = [8, 64], strides = [1, 1]} : vector<8x192xf32> to vector<8x64xf32>
    %166 = vector.extract_strided_slice %161 {offsets = [0, 128], sizes = [8, 64], strides = [1, 1]} : vector<8x192xf32> to vector<8x64xf32>
    %167 = arith.mulf %165, %142 : vector<8x64xf32>
    %168 = arith.mulf %164, %163 : vector<8x64xf32>
    %169 = arith.addf %167, %168 : vector<8x64xf32>
    %170 = math.tanh %169 : vector<8x64xf32>
    %171 = arith.mulf %166, %170 : vector<8x64xf32>
    %172 = vector.extract_strided_slice %171 {offsets = [0, 0], sizes = [8, 32], strides = [1, 1]} : vector<8x64xf32> to vector<8x32xf32>
    %c40_70 = arith.constant 40 : index
    %c0_71 = arith.constant 0 : index
    %173 = vector.load %arg15[%c40_70, %c0_71] : memref<64x128xf32, #tpu.memory_space<vmem>>, vector<8x32xf32>
    tpu.vector_store %arg15[%c40_70, %c0_71], %172 {strides = array<i32>} : memref<64x128xf32, #tpu.memory_space<vmem>>, vector<8x32xf32>,
    %174 = vector.extract_strided_slice %171 {offsets = [0, 32], sizes = [8, 32], strides = [1, 1]} : vector<8x64xf32> to vector<8x32xf32>
    %c16_72 = arith.constant 16 : index
    %c32_73 = arith.constant 32 : index
    %175 = vector.load %arg15[%c16_72, %c32_73] : memref<64x128xf32, #tpu.memory_space<vmem>>, vector<8x32xf32>
    tpu.vector_store %arg15[%c16_72, %c32_73], %174 {strides = array<i32>} : memref<64x128xf32, #tpu.memory_space<vmem>>, vector<8x32xf32>,
    %176 = vector.extract_strided_slice %171 {offsets = [0, 0], sizes = [8, 32], strides = [1, 1]} : vector<8x64xf32> to vector<8x32xf32>
    %c16_74 = arith.constant 16 : index
    %c64_75 = arith.constant 64 : index
    %177 = vector.load %arg15[%c16_74, %c64_75] : memref<64x128xf32, #tpu.memory_space<vmem>>, vector<8x32xf32>
    tpu.vector_store %arg15[%c16_74, %c64_75], %176 {strides = array<i32>} : memref<64x128xf32, #tpu.memory_space<vmem>>, vector<8x32xf32>,
    %178 = vector.extract_strided_slice %171 {offsets = [0, 32], sizes = [8, 32], strides = [1, 1]} : vector<8x64xf32> to vector<8x32xf32>
    %c40_76 = arith.constant 40 : index
    %c96_77 = arith.constant 96 : index
    %179 = vector.load %arg15[%c40_76, %c96_77] : memref<64x128xf32, #tpu.memory_space<vmem>>, vector<8x32xf32>
    tpu.vector_store %arg15[%c40_76, %c96_77], %178 {strides = array<i32>} : memref<64x128xf32, #tpu.memory_space<vmem>>, vector<8x32xf32>,
    %c48_78 = arith.constant 48 : index
    %c0_79 = arith.constant 0 : index
    %180 = vector.load %arg14[%c48_78, %c0_79] : memref<64x256xf32, #tpu.memory_space<vmem>>, vector<8x256xf32>
    %cst_80 = arith.constant dense<0.000000e+00> : vector<8x256xf32>
    %181 = tpu.matmul %171, %13, %cst_80 {dimension_numbers = #tpu.dot_dimension_numbers<[1], [0], [0], [1], [0, 0, 1, 1], [], []>} : vector<8x64xf32>, vector<64x256xf32>, vector<8x256xf32> -> vector<8x256xf32>
    %182 = arith.addf %180, %181 : vector<8x256xf32>
    %183 = vector.extract_strided_slice %182 {offsets = [0, 0], sizes = [8, 192], strides = [1, 1]} : vector<8x256xf32> to vector<8x192xf32>
    %184 = arith.negf %183 : vector<8x192xf32>
    %185 = math.exp %184 : vector<8x192xf32>
    %cst_81 = arith.constant 1.000000e+00 : f32
    %186 = vector.broadcast %cst_81 : f32 to vector<8x192xf32>
    %187 = arith.addf %186, %185 : vector<8x192xf32>
    %188 = arith.divf %186, %187 : vector<8x192xf32>
    %189 = vector.extract_strided_slice %182 {offsets = [0, 192], sizes = [8, 64], strides = [1, 1]} : vector<8x256xf32> to vector<8x64xf32>
    %190 = math.tanh %189 : vector<8x64xf32>
    %191 = vector.extract_strided_slice %188 {offsets = [0, 0], sizes = [8, 64], strides = [1, 1]} : vector<8x192xf32> to vector<8x64xf32>
    %192 = vector.extract_strided_slice %188 {offsets = [0, 64], sizes = [8, 64], strides = [1, 1]} : vector<8x192xf32> to vector<8x64xf32>
    %193 = vector.extract_strided_slice %188 {offsets = [0, 128], sizes = [8, 64], strides = [1, 1]} : vector<8x192xf32> to vector<8x64xf32>
    %194 = arith.mulf %192, %169 : vector<8x64xf32>
    %195 = arith.mulf %191, %190 : vector<8x64xf32>
    %196 = arith.addf %194, %195 : vector<8x64xf32>
    %197 = math.tanh %196 : vector<8x64xf32>
    %198 = arith.mulf %193, %197 : vector<8x64xf32>
    %199 = vector.extract_strided_slice %198 {offsets = [0, 0], sizes = [8, 32], strides = [1, 1]} : vector<8x64xf32> to vector<8x32xf32>
    %c48_82 = arith.constant 48 : index
    %c0_83 = arith.constant 0 : index
    %200 = vector.load %arg15[%c48_82, %c0_83] : memref<64x128xf32, #tpu.memory_space<vmem>>, vector<8x32xf32>
    tpu.vector_store %arg15[%c48_82, %c0_83], %199 {strides = array<i32>} : memref<64x128xf32, #tpu.memory_space<vmem>>, vector<8x32xf32>,
    %201 = vector.extract_strided_slice %198 {offsets = [0, 32], sizes = [8, 32], strides = [1, 1]} : vector<8x64xf32> to vector<8x32xf32>
    %c8_84 = arith.constant 8 : index
    %c32_85 = arith.constant 32 : index
    %202 = vector.load %arg15[%c8_84, %c32_85] : memref<64x128xf32, #tpu.memory_space<vmem>>, vector<8x32xf32>
    tpu.vector_store %arg15[%c8_84, %c32_85], %201 {strides = array<i32>} : memref<64x128xf32, #tpu.memory_space<vmem>>, vector<8x32xf32>,
    %203 = vector.extract_strided_slice %198 {offsets = [0, 0], sizes = [8, 32], strides = [1, 1]} : vector<8x64xf32> to vector<8x32xf32>
    %c8_86 = arith.constant 8 : index
    %c64_87 = arith.constant 64 : index
    %204 = vector.load %arg15[%c8_86, %c64_87] : memref<64x128xf32, #tpu.memory_space<vmem>>, vector<8x32xf32>
    tpu.vector_store %arg15[%c8_86, %c64_87], %203 {strides = array<i32>} : memref<64x128xf32, #tpu.memory_space<vmem>>, vector<8x32xf32>,
    %205 = vector.extract_strided_slice %198 {offsets = [0, 32], sizes = [8, 32], strides = [1, 1]} : vector<8x64xf32> to vector<8x32xf32>
    %c48_88 = arith.constant 48 : index
    %c96_89 = arith.constant 96 : index
    %206 = vector.load %arg15[%c48_88, %c96_89] : memref<64x128xf32, #tpu.memory_space<vmem>>, vector<8x32xf32>
    tpu.vector_store %arg15[%c48_88, %c96_89], %205 {strides = array<i32>} : memref<64x128xf32, #tpu.memory_space<vmem>>, vector<8x32xf32>,
    %c56_90 = arith.constant 56 : index
    %c0_91 = arith.constant 0 : index
    %207 = vector.load %arg14[%c56_90, %c0_91] : memref<64x256xf32, #tpu.memory_space<vmem>>, vector<8x256xf32>
    %cst_92 = arith.constant dense<0.000000e+00> : vector<8x256xf32>
    %208 = tpu.matmul %198, %13, %cst_92 {dimension_numbers = #tpu.dot_dimension_numbers<[1], [0], [0], [1], [0, 0, 1, 1], [], []>} : vector<8x64xf32>, vector<64x256xf32>, vector<8x256xf32> -> vector<8x256xf32>
    %209 = arith.addf %207, %208 : vector<8x256xf32>
    %210 = vector.extract_strided_slice %209 {offsets = [0, 0], sizes = [8, 192], strides = [1, 1]} : vector<8x256xf32> to vector<8x192xf32>
    %211 = arith.negf %210 : vector<8x192xf32>
    %212 = math.exp %211 : vector<8x192xf32>
    %cst_93 = arith.constant 1.000000e+00 : f32
    %213 = vector.broadcast %cst_93 : f32 to vector<8x192xf32>
    %214 = arith.addf %213, %212 : vector<8x192xf32>
    %215 = arith.divf %213, %214 : vector<8x192xf32>
    %216 = vector.extract_strided_slice %209 {offsets = [0, 192], sizes = [8, 64], strides = [1, 1]} : vector<8x256xf32> to vector<8x64xf32>
    %217 = math.tanh %216 : vector<8x64xf32>
    %218 = vector.extract_strided_slice %215 {offsets = [0, 0], sizes = [8, 64], strides = [1, 1]} : vector<8x192xf32> to vector<8x64xf32>
    %219 = vector.extract_strided_slice %215 {offsets = [0, 64], sizes = [8, 64], strides = [1, 1]} : vector<8x192xf32> to vector<8x64xf32>
    %220 = vector.extract_strided_slice %215 {offsets = [0, 128], sizes = [8, 64], strides = [1, 1]} : vector<8x192xf32> to vector<8x64xf32>
    %221 = arith.mulf %219, %196 : vector<8x64xf32>
    %222 = arith.mulf %218, %217 : vector<8x64xf32>
    %223 = arith.addf %221, %222 : vector<8x64xf32>
    %224 = math.tanh %223 : vector<8x64xf32>
    %225 = arith.mulf %220, %224 : vector<8x64xf32>
    %226 = vector.extract_strided_slice %225 {offsets = [0, 0], sizes = [8, 32], strides = [1, 1]} : vector<8x64xf32> to vector<8x32xf32>
    %c56_94 = arith.constant 56 : index
    %c0_95 = arith.constant 0 : index
    %227 = vector.load %arg15[%c56_94, %c0_95] : memref<64x128xf32, #tpu.memory_space<vmem>>, vector<8x32xf32>
    tpu.vector_store %arg15[%c56_94, %c0_95], %226 {strides = array<i32>} : memref<64x128xf32, #tpu.memory_space<vmem>>, vector<8x32xf32>,
    %228 = vector.extract_strided_slice %225 {offsets = [0, 32], sizes = [8, 32], strides = [1, 1]} : vector<8x64xf32> to vector<8x32xf32>
    %c0_96 = arith.constant 0 : index
    %c32_97 = arith.constant 32 : index
    %229 = vector.load %arg15[%c0_96, %c32_97] : memref<64x128xf32, #tpu.memory_space<vmem>>, vector<8x32xf32>
    tpu.vector_store %arg15[%c0_96, %c32_97], %228 {strides = array<i32>} : memref<64x128xf32, #tpu.memory_space<vmem>>, vector<8x32xf32>,
    %230 = vector.extract_strided_slice %225 {offsets = [0, 0], sizes = [8, 32], strides = [1, 1]} : vector<8x64xf32> to vector<8x32xf32>
    %c0_98 = arith.constant 0 : index
    %c64_99 = arith.constant 64 : index
    %231 = vector.load %arg15[%c0_98, %c64_99] : memref<64x128xf32, #tpu.memory_space<vmem>>, vector<8x32xf32>
    tpu.vector_store %arg15[%c0_98, %c64_99], %230 {strides = array<i32>} : memref<64x128xf32, #tpu.memory_space<vmem>>, vector<8x32xf32>,
    %232 = vector.extract_strided_slice %225 {offsets = [0, 32], sizes = [8, 32], strides = [1, 1]} : vector<8x64xf32> to vector<8x32xf32>
    %c56_100 = arith.constant 56 : index
    %c96_101 = arith.constant 96 : index
    %233 = vector.load %arg15[%c56_100, %c96_101] : memref<64x128xf32, #tpu.memory_space<vmem>>, vector<8x32xf32>
    tpu.vector_store %arg15[%c56_100, %c96_101], %232 {strides = array<i32>} : memref<64x128xf32, #tpu.memory_space<vmem>>, vector<8x32xf32>,
    %c0_102 = arith.constant 0 : index
    %c0_103 = arith.constant 0 : index
    %c0_104 = arith.constant 0 : index
    %234 = vector.load %arg12[%c0_102, %c0_103, %c0_104] : memref<2x8x64xf32, #tpu.memory_space<vmem>>, vector<1x8x64xf32>
    %235 = vector.shape_cast %234 : vector<1x8x64xf32> to vector<8x64xf32>
    %236 = vector.shape_cast %225 : vector<8x64xf32> to vector<1x8x64xf32>
    tpu.vector_store %arg12[%c0_102, %c0_103, %c0_104], %236 {strides = array<i32>} : memref<2x8x64xf32, #tpu.memory_space<vmem>>, vector<1x8x64xf32>,
    %c0_105 = arith.constant 0 : index
    %c0_106 = arith.constant 0 : index
    %c0_107 = arith.constant 0 : index
    %237 = vector.load %arg13[%c0_105, %c0_106, %c0_107] : memref<2x8x64xf32, #tpu.memory_space<vmem>>, vector<1x8x64xf32>
    %238 = vector.shape_cast %237 : vector<1x8x64xf32> to vector<8x64xf32>
    %239 = vector.shape_cast %223 : vector<8x64xf32> to vector<1x8x64xf32>
    tpu.vector_store %arg13[%c0_105, %c0_106, %c0_107], %239 {strides = array<i32>} : memref<2x8x64xf32, #tpu.memory_space<vmem>>, vector<1x8x64xf32>,
    %c0_i32_108 = arith.constant 0 : i32
    %240 = tpu.memref_slice %arg20[%c0_i32_108] : memref<3x!tpu.dma_semaphore, #tpu.memory_space<semaphore_mem>> -> memref<1x!tpu.dma_semaphore, #tpu.memory_space<semaphore_mem>>
    %241 = tpu.memref_squeeze %240 : memref<1x!tpu.dma_semaphore, #tpu.memory_space<semaphore_mem>> -> memref<!tpu.dma_semaphore, #tpu.memory_space<semaphore_mem>>
    tpu.wait_dma2 semaphore(%241 : memref<!tpu.dma_semaphore, #tpu.memory_space<semaphore_mem>>) src(%arg6 : memref<128x256xf32, #tpu.memory_space<any>>) dst(%arg17 : memref<128x256xf32, #tpu.memory_space<vmem>>)
    %c1_i32_109 = arith.constant 1 : i32
    %242 = tpu.memref_slice %arg20[%c1_i32_109] : memref<3x!tpu.dma_semaphore, #tpu.memory_space<semaphore_mem>> -> memref<1x!tpu.dma_semaphore, #tpu.memory_space<semaphore_mem>>
    %243 = tpu.memref_squeeze %242 : memref<1x!tpu.dma_semaphore, #tpu.memory_space<semaphore_mem>> -> memref<!tpu.dma_semaphore, #tpu.memory_space<semaphore_mem>>
    tpu.wait_dma2 semaphore(%243 : memref<!tpu.dma_semaphore, #tpu.memory_space<semaphore_mem>>) src(%arg7 : memref<64x256xf32, #tpu.memory_space<any>>) dst(%arg18 : memref<64x256xf32, #tpu.memory_space<vmem>>)
    %c0_110 = arith.constant 0 : index
    %c0_111 = arith.constant 0 : index
    %244 = vector.load %arg15[%c0_110, %c0_111] : memref<64x128xf32, #tpu.memory_space<vmem>>, vector<64x128xf32>
    %c0_112 = arith.constant 0 : index
    %c0_113 = arith.constant 0 : index
    %245 = vector.load %arg17[%c0_112, %c0_113] : memref<128x256xf32, #tpu.memory_space<vmem>>, vector<128x256xf32>
    %cst_114 = arith.constant dense<0.000000e+00> : vector<64x256xf32>
    %246 = tpu.matmul %244, %245, %cst_114 {dimension_numbers = #tpu.dot_dimension_numbers<[1], [0], [0], [1], [0, 0, 1, 1], [], []>} : vector<64x128xf32>, vector<128x256xf32>, vector<64x256xf32> -> vector<64x256xf32>
    %c0_115 = arith.constant 0 : index
    %c0_116 = arith.constant 0 : index
    %247 = vector.load %arg8[%c0_115, %c0_116] : memref<1x256xf32, #tpu.memory_space<vmem>>, vector<1x256xf32>
    %248 = vector.broadcast %247 : vector<1x256xf32> to vector<64x256xf32>
    %249 = arith.addf %246, %248 : vector<64x256xf32>
    %c0_117 = arith.constant 0 : index
    %c0_118 = arith.constant 0 : index
    %250 = vector.load %arg14[%c0_117, %c0_118] : memref<64x256xf32, #tpu.memory_space<vmem>>, vector<64x256xf32>
    tpu.vector_store %arg14[%c0_117, %c0_118], %249 {strides = array<i32>} : memref<64x256xf32, #tpu.memory_space<vmem>>, vector<64x256xf32>,
    %c0_119 = arith.constant 0 : index
    %c0_120 = arith.constant 0 : index
    %251 = vector.load %arg18[%c0_119, %c0_120] : memref<64x256xf32, #tpu.memory_space<vmem>>, vector<64x256xf32>
    %c1 = arith.constant 1 : index
    %c0_121 = arith.constant 0 : index
    %c0_122 = arith.constant 0 : index
    %252 = vector.load %arg1[%c1, %c0_121, %c0_122] : memref<2x8x64xf32, #tpu.memory_space<vmem>>, vector<1x8x64xf32>
    %253 = vector.shape_cast %252 : vector<1x8x64xf32> to vector<8x64xf32>
    %c1_123 = arith.constant 1 : index
    %c0_124 = arith.constant 0 : index
    %c0_125 = arith.constant 0 : index
    %254 = vector.load %arg2[%c1_123, %c0_124, %c0_125] : memref<2x8x64xf32, #tpu.memory_space<vmem>>, vector<1x8x64xf32>
    %255 = vector.shape_cast %254 : vector<1x8x64xf32> to vector<8x64xf32>
    %c0_126 = arith.constant 0 : index
    %c0_127 = arith.constant 0 : index
    %256 = vector.load %arg14[%c0_126, %c0_127] : memref<64x256xf32, #tpu.memory_space<vmem>>, vector<8x256xf32>
    %cst_128 = arith.constant dense<0.000000e+00> : vector<8x256xf32>
    %257 = tpu.matmul %253, %251, %cst_128 {dimension_numbers = #tpu.dot_dimension_numbers<[1], [0], [0], [1], [0, 0, 1, 1], [], []>} : vector<8x64xf32>, vector<64x256xf32>, vector<8x256xf32> -> vector<8x256xf32>
    %258 = arith.addf %256, %257 : vector<8x256xf32>
    %259 = vector.extract_strided_slice %258 {offsets = [0, 0], sizes = [8, 192], strides = [1, 1]} : vector<8x256xf32> to vector<8x192xf32>
    %260 = arith.negf %259 : vector<8x192xf32>
    %261 = math.exp %260 : vector<8x192xf32>
    %cst_129 = arith.constant 1.000000e+00 : f32
    %262 = vector.broadcast %cst_129 : f32 to vector<8x192xf32>
    %263 = arith.addf %262, %261 : vector<8x192xf32>
    %264 = arith.divf %262, %263 : vector<8x192xf32>
    %265 = vector.extract_strided_slice %258 {offsets = [0, 192], sizes = [8, 64], strides = [1, 1]} : vector<8x256xf32> to vector<8x64xf32>
    %266 = math.tanh %265 : vector<8x64xf32>
    %267 = vector.extract_strided_slice %264 {offsets = [0, 0], sizes = [8, 64], strides = [1, 1]} : vector<8x192xf32> to vector<8x64xf32>
    %268 = vector.extract_strided_slice %264 {offsets = [0, 64], sizes = [8, 64], strides = [1, 1]} : vector<8x192xf32> to vector<8x64xf32>
    %269 = vector.extract_strided_slice %264 {offsets = [0, 128], sizes = [8, 64], strides = [1, 1]} : vector<8x192xf32> to vector<8x64xf32>
    %270 = arith.mulf %268, %255 : vector<8x64xf32>
    %271 = arith.mulf %267, %266 : vector<8x64xf32>
    %272 = arith.addf %270, %271 : vector<8x64xf32>
    %273 = math.tanh %272 : vector<8x64xf32>
    %274 = arith.mulf %269, %273 : vector<8x64xf32>
    %275 = vector.extract_strided_slice %274 {offsets = [0, 0], sizes = [8, 32], strides = [1, 1]} : vector<8x64xf32> to vector<8x32xf32>
    %c0_130 = arith.constant 0 : index
    %c0_131 = arith.constant 0 : index
    %276 = vector.load %arg16[%c0_130, %c0_131] : memref<64x64xf32, #tpu.memory_space<vmem>>, vector<8x32xf32>
    tpu.vector_store %arg16[%c0_130, %c0_131], %275 {strides = array<i32>} : memref<64x64xf32, #tpu.memory_space<vmem>>, vector<8x32xf32>,
    %277 = vector.extract_strided_slice %274 {offsets = [0, 32], sizes = [8, 32], strides = [1, 1]} : vector<8x64xf32> to vector<8x32xf32>
    %c56_132 = arith.constant 56 : index
    %c32_133 = arith.constant 32 : index
    %278 = vector.load %arg16[%c56_132, %c32_133] : memref<64x64xf32, #tpu.memory_space<vmem>>, vector<8x32xf32>
    tpu.vector_store %arg16[%c56_132, %c32_133], %277 {strides = array<i32>} : memref<64x64xf32, #tpu.memory_space<vmem>>, vector<8x32xf32>,
    %c8_134 = arith.constant 8 : index
    %c0_135 = arith.constant 0 : index
    %279 = vector.load %arg14[%c8_134, %c0_135] : memref<64x256xf32, #tpu.memory_space<vmem>>, vector<8x256xf32>
    %cst_136 = arith.constant dense<0.000000e+00> : vector<8x256xf32>
    %280 = tpu.matmul %274, %251, %cst_136 {dimension_numbers = #tpu.dot_dimension_numbers<[1], [0], [0], [1], [0, 0, 1, 1], [], []>} : vector<8x64xf32>, vector<64x256xf32>, vector<8x256xf32> -> vector<8x256xf32>
    %281 = arith.addf %279, %280 : vector<8x256xf32>
    %282 = vector.extract_strided_slice %281 {offsets = [0, 0], sizes = [8, 192], strides = [1, 1]} : vector<8x256xf32> to vector<8x192xf32>
    %283 = arith.negf %282 : vector<8x192xf32>
    %284 = math.exp %283 : vector<8x192xf32>
    %cst_137 = arith.constant 1.000000e+00 : f32
    %285 = vector.broadcast %cst_137 : f32 to vector<8x192xf32>
    %286 = arith.addf %285, %284 : vector<8x192xf32>
    %287 = arith.divf %285, %286 : vector<8x192xf32>
    %288 = vector.extract_strided_slice %281 {offsets = [0, 192], sizes = [8, 64], strides = [1, 1]} : vector<8x256xf32> to vector<8x64xf32>
    %289 = math.tanh %288 : vector<8x64xf32>
    %290 = vector.extract_strided_slice %287 {offsets = [0, 0], sizes = [8, 64], strides = [1, 1]} : vector<8x192xf32> to vector<8x64xf32>
    %291 = vector.extract_strided_slice %287 {offsets = [0, 64], sizes = [8, 64], strides = [1, 1]} : vector<8x192xf32> to vector<8x64xf32>
    %292 = vector.extract_strided_slice %287 {offsets = [0, 128], sizes = [8, 64], strides = [1, 1]} : vector<8x192xf32> to vector<8x64xf32>
    %293 = arith.mulf %291, %272 : vector<8x64xf32>
    %294 = arith.mulf %290, %289 : vector<8x64xf32>
    %295 = arith.addf %293, %294 : vector<8x64xf32>
    %296 = math.tanh %295 : vector<8x64xf32>
    %297 = arith.mulf %292, %296 : vector<8x64xf32>
    %298 = vector.extract_strided_slice %297 {offsets = [0, 0], sizes = [8, 32], strides = [1, 1]} : vector<8x64xf32> to vector<8x32xf32>
    %c8_138 = arith.constant 8 : index
    %c0_139 = arith.constant 0 : index
    %299 = vector.load %arg16[%c8_138, %c0_139] : memref<64x64xf32, #tpu.memory_space<vmem>>, vector<8x32xf32>
    tpu.vector_store %arg16[%c8_138, %c0_139], %298 {strides = array<i32>} : memref<64x64xf32, #tpu.memory_space<vmem>>, vector<8x32xf32>,
    %300 = vector.extract_strided_slice %297 {offsets = [0, 32], sizes = [8, 32], strides = [1, 1]} : vector<8x64xf32> to vector<8x32xf32>
    %c48_140 = arith.constant 48 : index
    %c32_141 = arith.constant 32 : index
    %301 = vector.load %arg16[%c48_140, %c32_141] : memref<64x64xf32, #tpu.memory_space<vmem>>, vector<8x32xf32>
    tpu.vector_store %arg16[%c48_140, %c32_141], %300 {strides = array<i32>} : memref<64x64xf32, #tpu.memory_space<vmem>>, vector<8x32xf32>,
    %c16_142 = arith.constant 16 : index
    %c0_143 = arith.constant 0 : index
    %302 = vector.load %arg14[%c16_142, %c0_143] : memref<64x256xf32, #tpu.memory_space<vmem>>, vector<8x256xf32>
    %cst_144 = arith.constant dense<0.000000e+00> : vector<8x256xf32>
    %303 = tpu.matmul %297, %251, %cst_144 {dimension_numbers = #tpu.dot_dimension_numbers<[1], [0], [0], [1], [0, 0, 1, 1], [], []>} : vector<8x64xf32>, vector<64x256xf32>, vector<8x256xf32> -> vector<8x256xf32>
    %304 = arith.addf %302, %303 : vector<8x256xf32>
    %305 = vector.extract_strided_slice %304 {offsets = [0, 0], sizes = [8, 192], strides = [1, 1]} : vector<8x256xf32> to vector<8x192xf32>
    %306 = arith.negf %305 : vector<8x192xf32>
    %307 = math.exp %306 : vector<8x192xf32>
    %cst_145 = arith.constant 1.000000e+00 : f32
    %308 = vector.broadcast %cst_145 : f32 to vector<8x192xf32>
    %309 = arith.addf %308, %307 : vector<8x192xf32>
    %310 = arith.divf %308, %309 : vector<8x192xf32>
    %311 = vector.extract_strided_slice %304 {offsets = [0, 192], sizes = [8, 64], strides = [1, 1]} : vector<8x256xf32> to vector<8x64xf32>
    %312 = math.tanh %311 : vector<8x64xf32>
    %313 = vector.extract_strided_slice %310 {offsets = [0, 0], sizes = [8, 64], strides = [1, 1]} : vector<8x192xf32> to vector<8x64xf32>
    %314 = vector.extract_strided_slice %310 {offsets = [0, 64], sizes = [8, 64], strides = [1, 1]} : vector<8x192xf32> to vector<8x64xf32>
    %315 = vector.extract_strided_slice %310 {offsets = [0, 128], sizes = [8, 64], strides = [1, 1]} : vector<8x192xf32> to vector<8x64xf32>
    %316 = arith.mulf %314, %295 : vector<8x64xf32>
    %317 = arith.mulf %313, %312 : vector<8x64xf32>
    %318 = arith.addf %316, %317 : vector<8x64xf32>
    %319 = math.tanh %318 : vector<8x64xf32>
    %320 = arith.mulf %315, %319 : vector<8x64xf32>
    %321 = vector.extract_strided_slice %320 {offsets = [0, 0], sizes = [8, 32], strides = [1, 1]} : vector<8x64xf32> to vector<8x32xf32>
    %c16_146 = arith.constant 16 : index
    %c0_147 = arith.constant 0 : index
    %322 = vector.load %arg16[%c16_146, %c0_147] : memref<64x64xf32, #tpu.memory_space<vmem>>, vector<8x32xf32>
    tpu.vector_store %arg16[%c16_146, %c0_147], %321 {strides = array<i32>} : memref<64x64xf32, #tpu.memory_space<vmem>>, vector<8x32xf32>,
    %323 = vector.extract_strided_slice %320 {offsets = [0, 32], sizes = [8, 32], strides = [1, 1]} : vector<8x64xf32> to vector<8x32xf32>
    %c40_148 = arith.constant 40 : index
    %c32_149 = arith.constant 32 : index
    %324 = vector.load %arg16[%c40_148, %c32_149] : memref<64x64xf32, #tpu.memory_space<vmem>>, vector<8x32xf32>
    tpu.vector_store %arg16[%c40_148, %c32_149], %323 {strides = array<i32>} : memref<64x64xf32, #tpu.memory_space<vmem>>, vector<8x32xf32>,
    %c24_150 = arith.constant 24 : index
    %c0_151 = arith.constant 0 : index
    %325 = vector.load %arg14[%c24_150, %c0_151] : memref<64x256xf32, #tpu.memory_space<vmem>>, vector<8x256xf32>
    %cst_152 = arith.constant dense<0.000000e+00> : vector<8x256xf32>
    %326 = tpu.matmul %320, %251, %cst_152 {dimension_numbers = #tpu.dot_dimension_numbers<[1], [0], [0], [1], [0, 0, 1, 1], [], []>} : vector<8x64xf32>, vector<64x256xf32>, vector<8x256xf32> -> vector<8x256xf32>
    %327 = arith.addf %325, %326 : vector<8x256xf32>
    %328 = vector.extract_strided_slice %327 {offsets = [0, 0], sizes = [8, 192], strides = [1, 1]} : vector<8x256xf32> to vector<8x192xf32>
    %329 = arith.negf %328 : vector<8x192xf32>
    %330 = math.exp %329 : vector<8x192xf32>
    %cst_153 = arith.constant 1.000000e+00 : f32
    %331 = vector.broadcast %cst_153 : f32 to vector<8x192xf32>
    %332 = arith.addf %331, %330 : vector<8x192xf32>
    %333 = arith.divf %331, %332 : vector<8x192xf32>
    %334 = vector.extract_strided_slice %327 {offsets = [0, 192], sizes = [8, 64], strides = [1, 1]} : vector<8x256xf32> to vector<8x64xf32>
    %335 = math.tanh %334 : vector<8x64xf32>
    %336 = vector.extract_strided_slice %333 {offsets = [0, 0], sizes = [8, 64], strides = [1, 1]} : vector<8x192xf32> to vector<8x64xf32>
    %337 = vector.extract_strided_slice %333 {offsets = [0, 64], sizes = [8, 64], strides = [1, 1]} : vector<8x192xf32> to vector<8x64xf32>
    %338 = vector.extract_strided_slice %333 {offsets = [0, 128], sizes = [8, 64], strides = [1, 1]} : vector<8x192xf32> to vector<8x64xf32>
    %339 = arith.mulf %337, %318 : vector<8x64xf32>
    %340 = arith.mulf %336, %335 : vector<8x64xf32>
    %341 = arith.addf %339, %340 : vector<8x64xf32>
    %342 = math.tanh %341 : vector<8x64xf32>
    %343 = arith.mulf %338, %342 : vector<8x64xf32>
    %344 = vector.extract_strided_slice %343 {offsets = [0, 0], sizes = [8, 32], strides = [1, 1]} : vector<8x64xf32> to vector<8x32xf32>
    %c24_154 = arith.constant 24 : index
    %c0_155 = arith.constant 0 : index
    %345 = vector.load %arg16[%c24_154, %c0_155] : memref<64x64xf32, #tpu.memory_space<vmem>>, vector<8x32xf32>
    tpu.vector_store %arg16[%c24_154, %c0_155], %344 {strides = array<i32>} : memref<64x64xf32, #tpu.memory_space<vmem>>, vector<8x32xf32>,
    %346 = vector.extract_strided_slice %343 {offsets = [0, 32], sizes = [8, 32], strides = [1, 1]} : vector<8x64xf32> to vector<8x32xf32>
    %c32_156 = arith.constant 32 : index
    %c32_157 = arith.constant 32 : index
    %347 = vector.load %arg16[%c32_156, %c32_157] : memref<64x64xf32, #tpu.memory_space<vmem>>, vector<8x32xf32>
    tpu.vector_store %arg16[%c32_156, %c32_157], %346 {strides = array<i32>} : memref<64x64xf32, #tpu.memory_space<vmem>>, vector<8x32xf32>,
    %c32_158 = arith.constant 32 : index
    %c0_159 = arith.constant 0 : index
    %348 = vector.load %arg14[%c32_158, %c0_159] : memref<64x256xf32, #tpu.memory_space<vmem>>, vector<8x256xf32>
    %cst_160 = arith.constant dense<0.000000e+00> : vector<8x256xf32>
    %349 = tpu.matmul %343, %251, %cst_160 {dimension_numbers = #tpu.dot_dimension_numbers<[1], [0], [0], [1], [0, 0, 1, 1], [], []>} : vector<8x64xf32>, vector<64x256xf32>, vector<8x256xf32> -> vector<8x256xf32>
    %350 = arith.addf %348, %349 : vector<8x256xf32>
    %351 = vector.extract_strided_slice %350 {offsets = [0, 0], sizes = [8, 192], strides = [1, 1]} : vector<8x256xf32> to vector<8x192xf32>
    %352 = arith.negf %351 : vector<8x192xf32>
    %353 = math.exp %352 : vector<8x192xf32>
    %cst_161 = arith.constant 1.000000e+00 : f32
    %354 = vector.broadcast %cst_161 : f32 to vector<8x192xf32>
    %355 = arith.addf %354, %353 : vector<8x192xf32>
    %356 = arith.divf %354, %355 : vector<8x192xf32>
    %357 = vector.extract_strided_slice %350 {offsets = [0, 192], sizes = [8, 64], strides = [1, 1]} : vector<8x256xf32> to vector<8x64xf32>
    %358 = math.tanh %357 : vector<8x64xf32>
    %359 = vector.extract_strided_slice %356 {offsets = [0, 0], sizes = [8, 64], strides = [1, 1]} : vector<8x192xf32> to vector<8x64xf32>
    %360 = vector.extract_strided_slice %356 {offsets = [0, 64], sizes = [8, 64], strides = [1, 1]} : vector<8x192xf32> to vector<8x64xf32>
    %361 = vector.extract_strided_slice %356 {offsets = [0, 128], sizes = [8, 64], strides = [1, 1]} : vector<8x192xf32> to vector<8x64xf32>
    %362 = arith.mulf %360, %341 : vector<8x64xf32>
    %363 = arith.mulf %359, %358 : vector<8x64xf32>
    %364 = arith.addf %362, %363 : vector<8x64xf32>
    %365 = math.tanh %364 : vector<8x64xf32>
    %366 = arith.mulf %361, %365 : vector<8x64xf32>
    %367 = vector.extract_strided_slice %366 {offsets = [0, 0], sizes = [8, 32], strides = [1, 1]} : vector<8x64xf32> to vector<8x32xf32>
    %c32_162 = arith.constant 32 : index
    %c0_163 = arith.constant 0 : index
    %368 = vector.load %arg16[%c32_162, %c0_163] : memref<64x64xf32, #tpu.memory_space<vmem>>, vector<8x32xf32>
    tpu.vector_store %arg16[%c32_162, %c0_163], %367 {strides = array<i32>} : memref<64x64xf32, #tpu.memory_space<vmem>>, vector<8x32xf32>,
    %369 = vector.extract_strided_slice %366 {offsets = [0, 32], sizes = [8, 32], strides = [1, 1]} : vector<8x64xf32> to vector<8x32xf32>
    %c24_164 = arith.constant 24 : index
    %c32_165 = arith.constant 32 : index
    %370 = vector.load %arg16[%c24_164, %c32_165] : memref<64x64xf32, #tpu.memory_space<vmem>>, vector<8x32xf32>
    tpu.vector_store %arg16[%c24_164, %c32_165], %369 {strides = array<i32>} : memref<64x64xf32, #tpu.memory_space<vmem>>, vector<8x32xf32>,
    %c40_166 = arith.constant 40 : index
    %c0_167 = arith.constant 0 : index
    %371 = vector.load %arg14[%c40_166, %c0_167] : memref<64x256xf32, #tpu.memory_space<vmem>>, vector<8x256xf32>
    %cst_168 = arith.constant dense<0.000000e+00> : vector<8x256xf32>
    %372 = tpu.matmul %366, %251, %cst_168 {dimension_numbers = #tpu.dot_dimension_numbers<[1], [0], [0], [1], [0, 0, 1, 1], [], []>} : vector<8x64xf32>, vector<64x256xf32>, vector<8x256xf32> -> vector<8x256xf32>
    %373 = arith.addf %371, %372 : vector<8x256xf32>
    %374 = vector.extract_strided_slice %373 {offsets = [0, 0], sizes = [8, 192], strides = [1, 1]} : vector<8x256xf32> to vector<8x192xf32>
    %375 = arith.negf %374 : vector<8x192xf32>
    %376 = math.exp %375 : vector<8x192xf32>
    %cst_169 = arith.constant 1.000000e+00 : f32
    %377 = vector.broadcast %cst_169 : f32 to vector<8x192xf32>
    %378 = arith.addf %377, %376 : vector<8x192xf32>
    %379 = arith.divf %377, %378 : vector<8x192xf32>
    %380 = vector.extract_strided_slice %373 {offsets = [0, 192], sizes = [8, 64], strides = [1, 1]} : vector<8x256xf32> to vector<8x64xf32>
    %381 = math.tanh %380 : vector<8x64xf32>
    %382 = vector.extract_strided_slice %379 {offsets = [0, 0], sizes = [8, 64], strides = [1, 1]} : vector<8x192xf32> to vector<8x64xf32>
    %383 = vector.extract_strided_slice %379 {offsets = [0, 64], sizes = [8, 64], strides = [1, 1]} : vector<8x192xf32> to vector<8x64xf32>
    %384 = vector.extract_strided_slice %379 {offsets = [0, 128], sizes = [8, 64], strides = [1, 1]} : vector<8x192xf32> to vector<8x64xf32>
    %385 = arith.mulf %383, %364 : vector<8x64xf32>
    %386 = arith.mulf %382, %381 : vector<8x64xf32>
    %387 = arith.addf %385, %386 : vector<8x64xf32>
    %388 = math.tanh %387 : vector<8x64xf32>
    %389 = arith.mulf %384, %388 : vector<8x64xf32>
    %390 = vector.extract_strided_slice %389 {offsets = [0, 0], sizes = [8, 32], strides = [1, 1]} : vector<8x64xf32> to vector<8x32xf32>
    %c40_170 = arith.constant 40 : index
    %c0_171 = arith.constant 0 : index
    %391 = vector.load %arg16[%c40_170, %c0_171] : memref<64x64xf32, #tpu.memory_space<vmem>>, vector<8x32xf32>
    tpu.vector_store %arg16[%c40_170, %c0_171], %390 {strides = array<i32>} : memref<64x64xf32, #tpu.memory_space<vmem>>, vector<8x32xf32>,
    %392 = vector.extract_strided_slice %389 {offsets = [0, 32], sizes = [8, 32], strides = [1, 1]} : vector<8x64xf32> to vector<8x32xf32>
    %c16_172 = arith.constant 16 : index
    %c32_173 = arith.constant 32 : index
    %393 = vector.load %arg16[%c16_172, %c32_173] : memref<64x64xf32, #tpu.memory_space<vmem>>, vector<8x32xf32>
    tpu.vector_store %arg16[%c16_172, %c32_173], %392 {strides = array<i32>} : memref<64x64xf32, #tpu.memory_space<vmem>>, vector<8x32xf32>,
    %c48_174 = arith.constant 48 : index
    %c0_175 = arith.constant 0 : index
    %394 = vector.load %arg14[%c48_174, %c0_175] : memref<64x256xf32, #tpu.memory_space<vmem>>, vector<8x256xf32>
    %cst_176 = arith.constant dense<0.000000e+00> : vector<8x256xf32>
    %395 = tpu.matmul %389, %251, %cst_176 {dimension_numbers = #tpu.dot_dimension_numbers<[1], [0], [0], [1], [0, 0, 1, 1], [], []>} : vector<8x64xf32>, vector<64x256xf32>, vector<8x256xf32> -> vector<8x256xf32>
    %396 = arith.addf %394, %395 : vector<8x256xf32>
    %397 = vector.extract_strided_slice %396 {offsets = [0, 0], sizes = [8, 192], strides = [1, 1]} : vector<8x256xf32> to vector<8x192xf32>
    %398 = arith.negf %397 : vector<8x192xf32>
    %399 = math.exp %398 : vector<8x192xf32>
    %cst_177 = arith.constant 1.000000e+00 : f32
    %400 = vector.broadcast %cst_177 : f32 to vector<8x192xf32>
    %401 = arith.addf %400, %399 : vector<8x192xf32>
    %402 = arith.divf %400, %401 : vector<8x192xf32>
    %403 = vector.extract_strided_slice %396 {offsets = [0, 192], sizes = [8, 64], strides = [1, 1]} : vector<8x256xf32> to vector<8x64xf32>
    %404 = math.tanh %403 : vector<8x64xf32>
    %405 = vector.extract_strided_slice %402 {offsets = [0, 0], sizes = [8, 64], strides = [1, 1]} : vector<8x192xf32> to vector<8x64xf32>
    %406 = vector.extract_strided_slice %402 {offsets = [0, 64], sizes = [8, 64], strides = [1, 1]} : vector<8x192xf32> to vector<8x64xf32>
    %407 = vector.extract_strided_slice %402 {offsets = [0, 128], sizes = [8, 64], strides = [1, 1]} : vector<8x192xf32> to vector<8x64xf32>
    %408 = arith.mulf %406, %387 : vector<8x64xf32>
    %409 = arith.mulf %405, %404 : vector<8x64xf32>
    %410 = arith.addf %408, %409 : vector<8x64xf32>
    %411 = math.tanh %410 : vector<8x64xf32>
    %412 = arith.mulf %407, %411 : vector<8x64xf32>
    %413 = vector.extract_strided_slice %412 {offsets = [0, 0], sizes = [8, 32], strides = [1, 1]} : vector<8x64xf32> to vector<8x32xf32>
    %c48_178 = arith.constant 48 : index
    %c0_179 = arith.constant 0 : index
    %414 = vector.load %arg16[%c48_178, %c0_179] : memref<64x64xf32, #tpu.memory_space<vmem>>, vector<8x32xf32>
    tpu.vector_store %arg16[%c48_178, %c0_179], %413 {strides = array<i32>} : memref<64x64xf32, #tpu.memory_space<vmem>>, vector<8x32xf32>,
    %415 = vector.extract_strided_slice %412 {offsets = [0, 32], sizes = [8, 32], strides = [1, 1]} : vector<8x64xf32> to vector<8x32xf32>
    %c8_180 = arith.constant 8 : index
    %c32_181 = arith.constant 32 : index
    %416 = vector.load %arg16[%c8_180, %c32_181] : memref<64x64xf32, #tpu.memory_space<vmem>>, vector<8x32xf32>
    tpu.vector_store %arg16[%c8_180, %c32_181], %415 {strides = array<i32>} : memref<64x64xf32, #tpu.memory_space<vmem>>, vector<8x32xf32>,
    %c56_182 = arith.constant 56 : index
    %c0_183 = arith.constant 0 : index
    %417 = vector.load %arg14[%c56_182, %c0_183] : memref<64x256xf32, #tpu.memory_space<vmem>>, vector<8x256xf32>
    %cst_184 = arith.constant dense<0.000000e+00> : vector<8x256xf32>
    %418 = tpu.matmul %412, %251, %cst_184 {dimension_numbers = #tpu.dot_dimension_numbers<[1], [0], [0], [1], [0, 0, 1, 1], [], []>} : vector<8x64xf32>, vector<64x256xf32>, vector<8x256xf32> -> vector<8x256xf32>
    %419 = arith.addf %417, %418 : vector<8x256xf32>
    %420 = vector.extract_strided_slice %419 {offsets = [0, 0], sizes = [8, 192], strides = [1, 1]} : vector<8x256xf32> to vector<8x192xf32>
    %421 = arith.negf %420 : vector<8x192xf32>
    %422 = math.exp %421 : vector<8x192xf32>
    %cst_185 = arith.constant 1.000000e+00 : f32
    %423 = vector.broadcast %cst_185 : f32 to vector<8x192xf32>
    %424 = arith.addf %423, %422 : vector<8x192xf32>
    %425 = arith.divf %423, %424 : vector<8x192xf32>
    %426 = vector.extract_strided_slice %419 {offsets = [0, 192], sizes = [8, 64], strides = [1, 1]} : vector<8x256xf32> to vector<8x64xf32>
    %427 = math.tanh %426 : vector<8x64xf32>
    %428 = vector.extract_strided_slice %425 {offsets = [0, 0], sizes = [8, 64], strides = [1, 1]} : vector<8x192xf32> to vector<8x64xf32>
    %429 = vector.extract_strided_slice %425 {offsets = [0, 64], sizes = [8, 64], strides = [1, 1]} : vector<8x192xf32> to vector<8x64xf32>
    %430 = vector.extract_strided_slice %425 {offsets = [0, 128], sizes = [8, 64], strides = [1, 1]} : vector<8x192xf32> to vector<8x64xf32>
    %431 = arith.mulf %429, %410 : vector<8x64xf32>
    %432 = arith.mulf %428, %427 : vector<8x64xf32>
    %433 = arith.addf %431, %432 : vector<8x64xf32>
    %434 = math.tanh %433 : vector<8x64xf32>
    %435 = arith.mulf %430, %434 : vector<8x64xf32>
    %436 = vector.extract_strided_slice %435 {offsets = [0, 0], sizes = [8, 32], strides = [1, 1]} : vector<8x64xf32> to vector<8x32xf32>
    %c56_186 = arith.constant 56 : index
    %c0_187 = arith.constant 0 : index
    %437 = vector.load %arg16[%c56_186, %c0_187] : memref<64x64xf32, #tpu.memory_space<vmem>>, vector<8x32xf32>
    tpu.vector_store %arg16[%c56_186, %c0_187], %436 {strides = array<i32>} : memref<64x64xf32, #tpu.memory_space<vmem>>, vector<8x32xf32>,
    %438 = vector.extract_strided_slice %435 {offsets = [0, 32], sizes = [8, 32], strides = [1, 1]} : vector<8x64xf32> to vector<8x32xf32>
    %c0_188 = arith.constant 0 : index
    %c32_189 = arith.constant 32 : index
    %439 = vector.load %arg16[%c0_188, %c32_189] : memref<64x64xf32, #tpu.memory_space<vmem>>, vector<8x32xf32>
    tpu.vector_store %arg16[%c0_188, %c32_189], %438 {strides = array<i32>} : memref<64x64xf32, #tpu.memory_space<vmem>>, vector<8x32xf32>,
    %c1_190 = arith.constant 1 : index
    %c0_191 = arith.constant 0 : index
    %c0_192 = arith.constant 0 : index
    %440 = vector.load %arg12[%c1_190, %c0_191, %c0_192] : memref<2x8x64xf32, #tpu.memory_space<vmem>>, vector<1x8x64xf32>
    %441 = vector.shape_cast %440 : vector<1x8x64xf32> to vector<8x64xf32>
    %442 = vector.shape_cast %435 : vector<8x64xf32> to vector<1x8x64xf32>
    tpu.vector_store %arg12[%c1_190, %c0_191, %c0_192], %442 {strides = array<i32>} : memref<2x8x64xf32, #tpu.memory_space<vmem>>, vector<1x8x64xf32>,
    %c1_193 = arith.constant 1 : index
    %c0_194 = arith.constant 0 : index
    %c0_195 = arith.constant 0 : index
    %443 = vector.load %arg13[%c1_193, %c0_194, %c0_195] : memref<2x8x64xf32, #tpu.memory_space<vmem>>, vector<1x8x64xf32>
    %444 = vector.shape_cast %443 : vector<1x8x64xf32> to vector<8x64xf32>
    %445 = vector.shape_cast %433 : vector<8x64xf32> to vector<1x8x64xf32>
    tpu.vector_store %arg13[%c1_193, %c0_194, %c0_195], %445 {strides = array<i32>} : memref<2x8x64xf32, #tpu.memory_space<vmem>>, vector<1x8x64xf32>,
    %c2_i32_196 = arith.constant 2 : i32
    %446 = tpu.memref_slice %arg20[%c2_i32_196] : memref<3x!tpu.dma_semaphore, #tpu.memory_space<semaphore_mem>> -> memref<1x!tpu.dma_semaphore, #tpu.memory_space<semaphore_mem>>
    %447 = tpu.memref_squeeze %446 : memref<1x!tpu.dma_semaphore, #tpu.memory_space<semaphore_mem>> -> memref<!tpu.dma_semaphore, #tpu.memory_space<semaphore_mem>>
    tpu.wait_dma2 semaphore(%447 : memref<!tpu.dma_semaphore, #tpu.memory_space<semaphore_mem>>) src(%arg9 : memref<64x128xf32, #tpu.memory_space<any>>) dst(%arg19 : memref<64x128xf32, #tpu.memory_space<vmem>>)
    %c0_197 = arith.constant 0 : index
    %c0_198 = arith.constant 0 : index
    %448 = vector.load %arg16[%c0_197, %c0_198] : memref<64x64xf32, #tpu.memory_space<vmem>>, vector<64x64xf32>
    %c0_199 = arith.constant 0 : index
    %c0_200 = arith.constant 0 : index
    %449 = vector.load %arg19[%c0_199, %c0_200] : memref<64x128xf32, #tpu.memory_space<vmem>>, vector<64x128xf32>
    %cst_201 = arith.constant dense<0.000000e+00> : vector<64x128xf32>
    %450 = tpu.matmul %448, %449, %cst_201 {dimension_numbers = #tpu.dot_dimension_numbers<[1], [0], [0], [1], [0, 0, 1, 1], [], []>} : vector<64x64xf32>, vector<64x128xf32>, vector<64x128xf32> -> vector<64x128xf32>
    %c0_202 = arith.constant 0 : index
    %c0_203 = arith.constant 0 : index
    %451 = vector.load %arg10[%c0_202, %c0_203] : memref<1x128xf32, #tpu.memory_space<vmem>>, vector<1x128xf32>
    %452 = vector.broadcast %451 : vector<1x128xf32> to vector<64x128xf32>
    %453 = arith.addf %450, %452 : vector<64x128xf32>
    %c0_204 = arith.constant 0 : index
    %c0_205 = arith.constant 0 : index
    %454 = vector.load %arg11[%c0_204, %c0_205] : memref<64x128xf32, #tpu.memory_space<vmem>>, vector<64x128xf32>
    tpu.vector_store %arg11[%c0_204, %c0_205], %453 {strides = array<i32>} : memref<64x128xf32, #tpu.memory_space<vmem>>, vector<64x128xf32>,
    return
  }
}

</mosaic_0001>

<llo_original>
// kernel: blstm_forward.1
$region0: #{blstm_forward.1}
  #allocation0 [shape = 'u32[]', space=smem, size = 0x4, offset = 0x4, fixed_abs, tag = 'smem constant byte address 0x4 - core index']
  #allocation1 [shape = 'u32[144,128]{1,0:T(1,128)}', space=vmem, size = 0x12000, scoped, tag = 'internal scratch']
  #allocation2 [shape = 'f32[64,256]{1,0:T(8,128)}', space=vmem, size = 0x10000, scoped, tag = 'scratch operand']
  #allocation3 [shape = 'f32[64,128]{1,0:T(8,128)}', space=vmem, size = 0x8000, scoped, tag = 'scratch operand']
  #allocation4 [shape = 'f32[64,64]{1,0:T(8,128)}', space=vmem, size = 0x8000, scoped, tag = 'scratch operand']
  #allocation5 [shape = 'f32[128,256]{1,0:T(8,128)}', space=vmem, size = 0x20000, scoped, tag = 'scratch operand']
  #allocation6 [shape = 'f32[64,256]{1,0:T(8,128)}', space=vmem, size = 0x10000, scoped, tag = 'scratch operand']
  #allocation7 [shape = 'f32[64,128]{1,0:T(8,128)}', space=vmem, size = 0x8000, scoped, tag = 'scratch operand']
  #allocation8 [shape = 's32[3]{0}', space=sflag, size = 0xc, scoped, tag = 'scratch operand']
  #allocation9 [shape = 's32[]', space=sflag, size = 0x4, offset = 0, fixed_abs, tag = 'sflag constant byte address 0x0 - dummy sync flag']
  #allocation10 [shape = 's32[]', space=sflag, size = 0x4, offset = 0, fixed_abs, tag = 'sflag constant byte address 0x0 - dummy sync flag']
  #allocation11 [shape = 's32[]', space=sflag, size = 0x4, offset = 0, fixed_abs, tag = 'sflag constant byte address 0x0 - dummy sync flag']
  %s0 = inlined_call_operand.vmem [shape: f32[64,64], index: 0, kind: input, shape index: {}]
  %s1 = inlined_call_operand.vmem [shape: f32[2,8,64], index: 1, kind: input, shape index: {}, may-alias: {1,2}]
  %s2 = inlined_call_operand.vmem [shape: f32[2,8,64], index: 2, kind: input, shape index: {}, may-alias: {1,2}]
  %s3 = inlined_call_operand.vmem [shape: f32[64,256], index: 3, kind: input, shape index: {}]
  %s4 = inlined_call_operand.vmem [shape: f32[64,256], index: 4, kind: input, shape index: {}]
  %s5 = inlined_call_operand.vmem [shape: f32[1,256], index: 5, kind: input, shape index: {}]
  %s6 = inlined_call_operand.vmem [shape: f32[128,256], index: 6, kind: input, shape index: {}]
  %s7 = inlined_call_operand.vmem [shape: f32[64,256], index: 7, kind: input, shape index: {}]
  %s8 = inlined_call_operand.vmem [shape: f32[1,256], index: 8, kind: input, shape index: {}]
  %s9 = inlined_call_operand.vmem [shape: f32[64,128], index: 9, kind: input, shape index: {}]
  %s10 = inlined_call_operand.vmem [shape: f32[1,128], index: 10, kind: input, shape index: {}]
  %s11 = inlined_call_operand.vmem [shape: f32[64,128], index: 11, kind: output, shape index: {0}]
  %s12 = inlined_call_operand.vmem [shape: f32[2,8,64], index: 12, kind: output, shape index: {1}]
  %s13 = inlined_call_operand.vmem [shape: f32[2,8,64], index: 13, kind: output, shape index: {2}]
  %14 = xla_tuple %s11, %s12, %s13
  %s15 = sld [smem:[#allocation0]]
  $region160: #{blstm_forward.1} parent=0
    _
  %s17 = ssub.s32 1, %s15
  %s18 = scalar_select 0, %s17, %s15
  // Predicated region
  $region2: #{blstm_forward.1} parent=0 // pred_check
    _
  $region3: #{blstm_forward.1} parent=0 // pred_check_branch
    %20 = sbr.rel (0) target = $region5
  $region4: #{blstm_forward.1} parent=0 // pred_region
    _
  $region5: #{blstm_forward.1} parent=0 // pred_fallthru
    _
  // Predicated region
  $region6: #{blstm_forward.1} parent=0 // pred_check
    _
  $region7: #{blstm_forward.1} parent=0 // pred_check_branch
    %22 = sbr.rel (0) target = $region9
  $region8: #{blstm_forward.1} parent=0 // pred_region
    _
  $region9: #{blstm_forward.1} parent=0 // pred_fallthru
    _
  // Predicated region
  $region10: #{blstm_forward.1} parent=0 // pred_check
    _
  $region11: #{blstm_forward.1} parent=0 // pred_check_branch
    %24 = sbr.rel (0) target = $region13
  $region12: #{blstm_forward.1} parent=0 // pred_region
    _
  $region13: #{blstm_forward.1} parent=0 // pred_fallthru
    _
  // Predicated region
  $region14: #{blstm_forward.1} parent=0 // pred_check
    _
  $region15: #{blstm_forward.1} parent=0 // pred_check_branch
    %26 = sbr.rel (0) target = $region17
  $region16: #{blstm_forward.1} parent=0 // pred_region
    _
  $region17: #{blstm_forward.1} parent=0 // pred_fallthru
    _
  // Predicated region
  $region18: #{blstm_forward.1} parent=0 // pred_check
    _
  $region19: #{blstm_forward.1} parent=0 // pred_check_branch
    %28 = sbr.rel (0) target = $region21
  $region20: #{blstm_forward.1} parent=0 // pred_region
    _
  $region21: #{blstm_forward.1} parent=0 // pred_fallthru
    _
  // Predicated region
  $region22: #{blstm_forward.1} parent=0 // pred_check
    _
  $region23: #{blstm_forward.1} parent=0 // pred_check_branch
    %30 = sbr.rel (0) target = $region25
  $region24: #{blstm_forward.1} parent=0 // pred_region
    _
  $region25: #{blstm_forward.1} parent=0 // pred_fallthru
    _
  // Predicated region
  $region26: #{blstm_forward.1} parent=0 // pred_check
    _
  $region27: #{blstm_forward.1} parent=0 // pred_check_branch
    %32 = sbr.rel (0) target = $region29
  $region28: #{blstm_forward.1} parent=0 // pred_region
    _
  $region29: #{blstm_forward.1} parent=0 // pred_fallthru
    _
  // Predicated region
  $region30: #{blstm_forward.1} parent=0 // pred_check
    _
  $region31: #{blstm_forward.1} parent=0 // pred_check_branch
    %34 = sbr.rel (0) target = $region33
  $region32: #{blstm_forward.1} parent=0 // pred_region
    _
  $region33: #{blstm_forward.1} parent=0 // pred_fallthru
    _
  %p36 = scmp.lt.u32.totalorder 256, 8
  %p37 = pneg %p36
  // Predicated region
  $region34: #{blstm_forward.1} parent=0 // pred_check
    _
  $region35: #{blstm_forward.1} parent=0 // pred_check_branch
    %39 = sbr.rel (%p36) target = $region37
  $region36: #{blstm_forward.1} parent=0 // pred_region
    %s55 = sand.u32 256, 7
    %p56 = scmp.eq.s32.totalorder %s55, 0
    // Predicated region
    $region49: #{blstm_forward.1} parent=36 // pred_check
      %p57 = pneg %p56
    $region50: #{blstm_forward.1} parent=36 // pred_check_branch
      %59 = sbr.rel (%p57) target = $region52
    $region51: #{blstm_forward.1} parent=36 // pred_region
      loop: start=0, step=1, limit=1
      $region53: #{blstm_forward.1} parent=51 // loop_pre_header
        _
      $region54: #{blstm_forward.1} parent=51 // loop_header
        %s61 = sphi 0, %s65
        %p62 = scmp.ge.s32.totalorder %s61, 1
        %s66 = sphi %s6, %s6
        %s67 = sphi [#allocation5], [#allocation5]
      $region55: #{blstm_forward.1} parent=51 // loop_header_branch
        %64 = sbr.rel (%p62) target = $region59
      $region56: #{blstm_forward.1} parent=51 // loop_body
        %v68 = vld [vmem:[%s66] sm:$0xff]
        %69 = vst [vmem:[%s67] sm:$0xff] %v68
        %v70 = vld [vmem:[%s66 + $0x8] sm:$0xff]
        %71 = vst [vmem:[%s67 + $0x8] sm:$0xff] %v70
        %v72 = vld [vmem:[%s66 + $0x10] sm:$0xff]
        %73 = vst [vmem:[%s67 + $0x10] sm:$0xff] %v72
        %v74 = vld [vmem:[%s66 + $0x18] sm:$0xff]
        %75 = vst [vmem:[%s67 + $0x18] sm:$0xff] %v74
        %v76 = vld [vmem:[%s66 + $0x20] sm:$0xff]
        %77 = vst [vmem:[%s67 + $0x20] sm:$0xff] %v76
        %v78 = vld [vmem:[%s66 + $0x28] sm:$0xff]
        %79 = vst [vmem:[%s67 + $0x28] sm:$0xff] %v78
        %v80 = vld [vmem:[%s66 + $0x30] sm:$0xff]
        %81 = vst [vmem:[%s67 + $0x30] sm:$0xff] %v80
        %v82 = vld [vmem:[%s66 + $0x38] sm:$0xff]
        %83 = vst [vmem:[%s67 + $0x38] sm:$0xff] %v82
        %v84 = vld [vmem:[%s66 + $0x40] sm:$0xff]
        %85 = vst [vmem:[%s67 + $0x40] sm:$0xff] %v84
        %v86 = vld [vmem:[%s66 + $0x48] sm:$0xff]
        %87 = vst [vmem:[%s67 + $0x48] sm:$0xff] %v86
        %v88 = vld [vmem:[%s66 + $0x50] sm:$0xff]
        %89 = vst [vmem:[%s67 + $0x50] sm:$0xff] %v88
        %v90 = vld [vmem:[%s66 + $0x58] sm:$0xff]
        %91 = vst [vmem:[%s67 + $0x58] sm:$0xff] %v90
        %v92 = vld [vmem:[%s66 + $0x60] sm:$0xff]
        %93 = vst [vmem:[%s67 + $0x60] sm:$0xff] %v92
        %v94 = vld [vmem:[%s66 + $0x68] sm:$0xff]
        %95 = vst [vmem:[%s67 + $0x68] sm:$0xff] %v94
        %v96 = vld [vmem:[%s66 + $0x70] sm:$0xff]
        %97 = vst [vmem:[%s67 + $0x70] sm:$0xff] %v96
        %v98 = vld [vmem:[%s66 + $0x78] sm:$0xff]
        %99 = vst [vmem:[%s67 + $0x78] sm:$0xff] %v98
        %v100 = vld [vmem:[%s66 + $0x80] sm:$0xff]
        %101 = vst [vmem:[%s67 + $0x80] sm:$0xff] %v100
        %v102 = vld [vmem:[%s66 + $0x88] sm:$0xff]
        %103 = vst [vmem:[%s67 + $0x88] sm:$0xff] %v102
        %v104 = vld [vmem:[%s66 + $0x90] sm:$0xff]
        %105 = vst [vmem:[%s67 + $0x90] sm:$0xff] %v104
        %v106 = vld [vmem:[%s66 + $0x98] sm:$0xff]
        %107 = vst [vmem:[%s67 + $0x98] sm:$0xff] %v106
        %v108 = vld [vmem:[%s66 + $0xa0] sm:$0xff]
        %109 = vst [vmem:[%s67 + $0xa0] sm:$0xff] %v108
        %v110 = vld [vmem:[%s66 + $0xa8] sm:$0xff]
        %111 = vst [vmem:[%s67 + $0xa8] sm:$0xff] %v110
        %v112 = vld [vmem:[%s66 + $0xb0] sm:$0xff]
        %113 = vst [vmem:[%s67 + $0xb0] sm:$0xff] %v112
        %v114 = vld [vmem:[%s66 + $0xb8] sm:$0xff]
        %115 = vst [vmem:[%s67 + $0xb8] sm:$0xff] %v114
        %v116 = vld [vmem:[%s66 + $0xc0] sm:$0xff]
        %117 = vst [vmem:[%s67 + $0xc0] sm:$0xff] %v116
        %v118 = vld [vmem:[%s66 + $0xc8] sm:$0xff]
        %119 = vst [vmem:[%s67 + $0xc8] sm:$0xff] %v118
        %v120 = vld [vmem:[%s66 + $0xd0] sm:$0xff]
        %121 = vst [vmem:[%s67 + $0xd0] sm:$0xff] %v120
        %v122 = vld [vmem:[%s66 + $0xd8] sm:$0xff]
        %123 = vst [vmem:[%s67 + $0xd8] sm:$0xff] %v122
        %v124 = vld [vmem:[%s66 + $0xe0] sm:$0xff]
        %125 = vst [vmem:[%s67 + $0xe0] sm:$0xff] %v124
        %v126 = vld [vmem:[%s66 + $0xe8] sm:$0xff]
        %127 = vst [vmem:[%s67 + $0xe8] sm:$0xff] %v126
        %v128 = vld [vmem:[%s66 + $0xf0] sm:$0xff]
        %129 = vst [vmem:[%s67 + $0xf0] sm:$0xff] %v128
        %v130 = vld [vmem:[%s66 + $0xf8] sm:$0xff]
        %131 = vst [vmem:[%s67 + $0xf8] sm:$0xff] %v130
      $region57: #{blstm_forward.1} parent=51 // loop_footer
        %s65 = sadd.s32 1, %s61
      $region58: #{blstm_forward.1} parent=51 // loop_footer_branch
        %60 = sbr.rel target = $region54
      $region59: #{blstm_forward.1} parent=51 // loop_exit
        _
    $region52: #{blstm_forward.1} parent=36 // pred_fallthru
      _
    %p132 = pneg %p56
    // Predicated region
    $region60: #{blstm_forward.1} parent=36 // pred_check
      _
    $region61: #{blstm_forward.1} parent=36 // pred_check_branch
      %134 = sbr.rel (%p56) target = $region63
    $region62: #{blstm_forward.1} parent=36 // pred_region
      %s135 = sand.u32 256, 7
    $region63: #{blstm_forward.1} parent=36 // pred_fallthru
      _
  $region37: #{blstm_forward.1} parent=0 // pred_fallthru
    _
  // Predicated region
  $region38: #{blstm_forward.1} parent=0 // pred_check
    %p40 = pneg %p36
  $region39: #{blstm_forward.1} parent=0 // pred_check_branch
    %42 = sbr.rel (%p40) target = $region41
  $region40: #{blstm_forward.1} parent=0 // pred_region
    %s43 = sshll.u32 1, 256
    %s44 = ssub.s32 %s43, 1
    loop: start=0, step=1, limit=1
    $region42: #{blstm_forward.1} parent=40 // loop_pre_header
      _
    $region43: #{blstm_forward.1} parent=40 // loop_header
      %s46 = sphi 0, %s50
      %p47 = scmp.ge.s32.totalorder %s46, 1
      %s51 = sphi %s6, %s6
      %s52 = sphi [#allocation5], [#allocation5]
    $region44: #{blstm_forward.1} parent=40 // loop_header_branch
      %49 = sbr.rel (%p47) target = $region48
    $region45: #{blstm_forward.1} parent=40 // loop_body
      %v53 = vld [vmem:[%s51] sm:%s44]
      %54 = vst [vmem:[%s52] sm:%s44] %v53
    $region46: #{blstm_forward.1} parent=40 // loop_footer
      %s50 = sadd.s32 1, %s46
    $region47: #{blstm_forward.1} parent=40 // loop_footer_branch
      %45 = sbr.rel target = $region43
    $region48: #{blstm_forward.1} parent=40 // loop_exit
      _
  $region41: #{blstm_forward.1} parent=0 // pred_fallthru
    _
  // Predicated region
  $region64: #{blstm_forward.1} parent=0 // pred_check
    _
  $region65: #{blstm_forward.1} parent=0 // pred_check_branch
    %138 = sbr.rel (0) target = $region67
  $region66: #{blstm_forward.1} parent=0 // pred_region
    %139 = vsyncadd [#allocation8], 4096
  $region67: #{blstm_forward.1} parent=0 // pred_fallthru
    _
  %s140 = scalar_lea.sflag [#allocation8], 1
  %p142 = scmp.lt.u32.totalorder 128, 8
  %p143 = pneg %p142
  // Predicated region
  $region68: #{blstm_forward.1} parent=0 // pred_check
    _
  $region69: #{blstm_forward.1} parent=0 // pred_check_branch
    %145 = sbr.rel (%p142) target = $region71
  $region70: #{blstm_forward.1} parent=0 // pred_region
    %s161 = sand.u32 128, 7
    %p162 = scmp.eq.s32.totalorder %s161, 0
    // Predicated region
    $region83: #{blstm_forward.1} parent=70 // pred_check
      %p163 = pneg %p162
    $region84: #{blstm_forward.1} parent=70 // pred_check_branch
      %165 = sbr.rel (%p163) target = $region86
    $region85: #{blstm_forward.1} parent=70 // pred_region
      loop: start=0, step=1, limit=1
      $region87: #{blstm_forward.1} parent=85 // loop_pre_header
        _
      $region88: #{blstm_forward.1} parent=85 // loop_header
        %s167 = sphi 0, %s171
        %p168 = scmp.ge.s32.totalorder %s167, 1
        %s172 = sphi %s7, %s7
        %s173 = sphi [#allocation6], [#allocation6]
      $region89: #{blstm_forward.1} parent=85 // loop_header_branch
        %170 = sbr.rel (%p168) target = $region93
      $region90: #{blstm_forward.1} parent=85 // loop_body
        %v174 = vld [vmem:[%s172] sm:$0xff]
        %175 = vst [vmem:[%s173] sm:$0xff] %v174
        %v176 = vld [vmem:[%s172 + $0x8] sm:$0xff]
        %177 = vst [vmem:[%s173 + $0x8] sm:$0xff] %v176
        %v178 = vld [vmem:[%s172 + $0x10] sm:$0xff]
        %179 = vst [vmem:[%s173 + $0x10] sm:$0xff] %v178
        %v180 = vld [vmem:[%s172 + $0x18] sm:$0xff]
        %181 = vst [vmem:[%s173 + $0x18] sm:$0xff] %v180
        %v182 = vld [vmem:[%s172 + $0x20] sm:$0xff]
        %183 = vst [vmem:[%s173 + $0x20] sm:$0xff] %v182
        %v184 = vld [vmem:[%s172 + $0x28] sm:$0xff]
        %185 = vst [vmem:[%s173 + $0x28] sm:$0xff] %v184
        %v186 = vld [vmem:[%s172 + $0x30] sm:$0xff]
        %187 = vst [vmem:[%s173 + $0x30] sm:$0xff] %v186
        %v188 = vld [vmem:[%s172 + $0x38] sm:$0xff]
        %189 = vst [vmem:[%s173 + $0x38] sm:$0xff] %v188
        %v190 = vld [vmem:[%s172 + $0x40] sm:$0xff]
        %191 = vst [vmem:[%s173 + $0x40] sm:$0xff] %v190
        %v192 = vld [vmem:[%s172 + $0x48] sm:$0xff]
        %193 = vst [vmem:[%s173 + $0x48] sm:$0xff] %v192
        %v194 = vld [vmem:[%s172 + $0x50] sm:$0xff]
        %195 = vst [vmem:[%s173 + $0x50] sm:$0xff] %v194
        %v196 = vld [vmem:[%s172 + $0x58] sm:$0xff]
        %197 = vst [vmem:[%s173 + $0x58] sm:$0xff] %v196
        %v198 = vld [vmem:[%s172 + $0x60] sm:$0xff]
        %199 = vst [vmem:[%s173 + $0x60] sm:$0xff] %v198
        %v200 = vld [vmem:[%s172 + $0x68] sm:$0xff]
        %201 = vst [vmem:[%s173 + $0x68] sm:$0xff] %v200
        %v202 = vld [vmem:[%s172 + $0x70] sm:$0xff]
        %203 = vst [vmem:[%s173 + $0x70] sm:$0xff] %v202
        %v204 = vld [vmem:[%s172 + $0x78] sm:$0xff]
        %205 = vst [vmem:[%s173 + $0x78] sm:$0xff] %v204
      $region91: #{blstm_forward.1} parent=85 // loop_footer
        %s171 = sadd.s32 1, %s167
      $region92: #{blstm_forward.1} parent=85 // loop_footer_branch
        %166 = sbr.rel target = $region88
      $region93: #{blstm_forward.1} parent=85 // loop_exit
        _
    $region86: #{blstm_forward.1} parent=70 // pred_fallthru
      _
    %p206 = pneg %p162
    // Predicated region
    $region94: #{blstm_forward.1} parent=70 // pred_check
      _
    $region95: #{blstm_forward.1} parent=70 // pred_check_branch
      %208 = sbr.rel (%p162) target = $region97
    $region96: #{blstm_forward.1} parent=70 // pred_region
      %s209 = sand.u32 128, 7
    $region97: #{blstm_forward.1} parent=70 // pred_fallthru
      _
  $region71: #{blstm_forward.1} parent=0 // pred_fallthru
    _
  // Predicated region
  $region72: #{blstm_forward.1} parent=0 // pred_check
    %p146 = pneg %p142
  $region73: #{blstm_forward.1} parent=0 // pred_check_branch
    %148 = sbr.rel (%p146) target = $region75
  $region74: #{blstm_forward.1} parent=0 // pred_region
    %s149 = sshll.u32 1, 128
    %s150 = ssub.s32 %s149, 1
    loop: start=0, step=1, limit=1
    $region76: #{blstm_forward.1} parent=74 // loop_pre_header
      _
    $region77: #{blstm_forward.1} parent=74 // loop_header
      %s152 = sphi 0, %s156
      %p153 = scmp.ge.s32.totalorder %s152, 1
      %s157 = sphi %s7, %s7
      %s158 = sphi [#allocation6], [#allocation6]
    $region78: #{blstm_forward.1} parent=74 // loop_header_branch
      %155 = sbr.rel (%p153) target = $region82
    $region79: #{blstm_forward.1} parent=74 // loop_body
      %v159 = vld [vmem:[%s157] sm:%s150]
      %160 = vst [vmem:[%s158] sm:%s150] %v159
    $region80: #{blstm_forward.1} parent=74 // loop_footer
      %s156 = sadd.s32 1, %s152
    $region81: #{blstm_forward.1} parent=74 // loop_footer_branch
      %151 = sbr.rel target = $region77
    $region82: #{blstm_forward.1} parent=74 // loop_exit
      _
  $region75: #{blstm_forward.1} parent=0 // pred_fallthru
    _
  // Predicated region
  $region98: #{blstm_forward.1} parent=0 // pred_check
    _
  $region99: #{blstm_forward.1} parent=0 // pred_check_branch
    %212 = sbr.rel (0) target = $region101
  $region100: #{blstm_forward.1} parent=0 // pred_region
    %213 = vsyncadd %s140, 2048
  $region101: #{blstm_forward.1} parent=0 // pred_fallthru
    _
  %s214 = scalar_lea.sflag [#allocation8], 2
  %p216 = scmp.lt.u32.totalorder 64, 8
  %p217 = pneg %p216
  // Predicated region
  $region102: #{blstm_forward.1} parent=0 // pred_check
    _
  $region103: #{blstm_forward.1} parent=0 // pred_check_branch
    %219 = sbr.rel (%p216) target = $region105
  $region104: #{blstm_forward.1} parent=0 // pred_region
    %s235 = sand.u32 64, 7
    %p236 = scmp.eq.s32.totalorder %s235, 0
    // Predicated region
    $region117: #{blstm_forward.1} parent=104 // pred_check
      %p237 = pneg %p236
    $region118: #{blstm_forward.1} parent=104 // pred_check_branch
      %239 = sbr.rel (%p237) target = $region120
    $region119: #{blstm_forward.1} parent=104 // pred_region
      loop: start=0, step=1, limit=1
      $region121: #{blstm_forward.1} parent=119 // loop_pre_header
        _
      $region122: #{blstm_forward.1} parent=119 // loop_header
        %s241 = sphi 0, %s245
        %p242 = scmp.ge.s32.totalorder %s241, 1
        %s246 = sphi %s9, %s9
        %s247 = sphi [#allocation7], [#allocation7]
      $region123: #{blstm_forward.1} parent=119 // loop_header_branch
        %244 = sbr.rel (%p242) target = $region127
      $region124: #{blstm_forward.1} parent=119 // loop_body
        %v248 = vld [vmem:[%s246] sm:$0xff]
        %249 = vst [vmem:[%s247] sm:$0xff] %v248
        %v250 = vld [vmem:[%s246 + $0x8] sm:$0xff]
        %251 = vst [vmem:[%s247 + $0x8] sm:$0xff] %v250
        %v252 = vld [vmem:[%s246 + $0x10] sm:$0xff]
        %253 = vst [vmem:[%s247 + $0x10] sm:$0xff] %v252
        %v254 = vld [vmem:[%s246 + $0x18] sm:$0xff]
        %255 = vst [vmem:[%s247 + $0x18] sm:$0xff] %v254
        %v256 = vld [vmem:[%s246 + $0x20] sm:$0xff]
        %257 = vst [vmem:[%s247 + $0x20] sm:$0xff] %v256
        %v258 = vld [vmem:[%s246 + $0x28] sm:$0xff]
        %259 = vst [vmem:[%s247 + $0x28] sm:$0xff] %v258
        %v260 = vld [vmem:[%s246 + $0x30] sm:$0xff]
        %261 = vst [vmem:[%s247 + $0x30] sm:$0xff] %v260
        %v262 = vld [vmem:[%s246 + $0x38] sm:$0xff]
        %263 = vst [vmem:[%s247 + $0x38] sm:$0xff] %v262
      $region125: #{blstm_forward.1} parent=119 // loop_footer
        %s245 = sadd.s32 1, %s241
      $region126: #{blstm_forward.1} parent=119 // loop_footer_branch
        %240 = sbr.rel target = $region122
      $region127: #{blstm_forward.1} parent=119 // loop_exit
        _
    $region120: #{blstm_forward.1} parent=104 // pred_fallthru
      _
    %p264 = pneg %p236
    // Predicated region
    $region128: #{blstm_forward.1} parent=104 // pred_check
      _
    $region129: #{blstm_forward.1} parent=104 // pred_check_branch
      %266 = sbr.rel (%p236) target = $region131
    $region130: #{blstm_forward.1} parent=104 // pred_region
      %s267 = sand.u32 64, 7
    $region131: #{blstm_forward.1} parent=104 // pred_fallthru
      _
  $region105: #{blstm_forward.1} parent=0 // pred_fallthru
    _
  // Predicated region
  $region106: #{blstm_forward.1} parent=0 // pred_check
    %p220 = pneg %p216
  $region107: #{blstm_forward.1} parent=0 // pred_check_branch
    %222 = sbr.rel (%p220) target = $region109
  $region108: #{blstm_forward.1} parent=0 // pred_region
    %s223 = sshll.u32 1, 64
    %s224 = ssub.s32 %s223, 1
    loop: start=0, step=1, limit=1
    $region110: #{blstm_forward.1} parent=108 // loop_pre_header
      _
    $region111: #{blstm_forward.1} parent=108 // loop_header
      %s226 = sphi 0, %s230
      %p227 = scmp.ge.s32.totalorder %s226, 1
      %s231 = sphi %s9, %s9
      %s232 = sphi [#allocation7], [#allocation7]
    $region112: #{blstm_forward.1} parent=108 // loop_header_branch
      %229 = sbr.rel (%p227) target = $region116
    $region113: #{blstm_forward.1} parent=108 // loop_body
      %v233 = vld [vmem:[%s231] sm:%s224]
      %234 = vst [vmem:[%s232] sm:%s224] %v233
    $region114: #{blstm_forward.1} parent=108 // loop_footer
      %s230 = sadd.s32 1, %s226
    $region115: #{blstm_forward.1} parent=108 // loop_footer_branch
      %225 = sbr.rel target = $region111
    $region116: #{blstm_forward.1} parent=108 // loop_exit
      _
  $region109: #{blstm_forward.1} parent=0 // pred_fallthru
    _
  // Predicated region
  $region132: #{blstm_forward.1} parent=0 // pred_check
    _
  $region133: #{blstm_forward.1} parent=0 // pred_check_branch
    %270 = sbr.rel (0) target = $region135
  $region134: #{blstm_forward.1} parent=0 // pred_region
    %271 = vsyncadd %s214, 1024
  $region135: #{blstm_forward.1} parent=0 // pred_fallthru
    _
  %v272 = vld [vmem:[%s0] sm:$0xff]
  %v273 = vld [vmem:[%s0 + $0x8] sm:$0xff]
  %v274 = vld [vmem:[%s0 + $0x10] sm:$0xff]
  %v275 = vld [vmem:[%s0 + $0x18] sm:$0xff]
  %v276 = vld [vmem:[%s0 + $0x20] sm:$0xff]
  %v277 = vld [vmem:[%s0 + $0x28] sm:$0xff]
  %v278 = vld [vmem:[%s0 + $0x30] sm:$0xff]
  %v279 = vld [vmem:[%s0 + $0x38] sm:$0xff]
  %v280 = vld [vmem:[%s3] sm:$0xff]
  %v281 = vld [vmem:[%s3 + $0x8] sm:$0xff]
  %v282 = vld [vmem:[%s3 + $0x10] sm:$0xff]
  %v283 = vld [vmem:[%s3 + $0x18] sm:$0xff]
  %v284 = vld [vmem:[%s3 + $0x20] sm:$0xff]
  %v285 = vld [vmem:[%s3 + $0x28] sm:$0xff]
  %v286 = vld [vmem:[%s3 + $0x30] sm:$0xff]
  %v287 = vld [vmem:[%s3 + $0x38] sm:$0xff]
  %v288 = vld [vmem:[%s3 + $0x40] sm:$0xff]
  %v289 = vld [vmem:[%s3 + $0x48] sm:$0xff]
  %v290 = vld [vmem:[%s3 + $0x50] sm:$0xff]
  %v291 = vld [vmem:[%s3 + $0x58] sm:$0xff]
  %v292 = vld [vmem:[%s3 + $0x60] sm:$0xff]
  %v293 = vld [vmem:[%s3 + $0x68] sm:$0xff]
  %v294 = vld [vmem:[%s3 + $0x70] sm:$0xff]
  %v295 = vld [vmem:[%s3 + $0x78] sm:$0xff]
  %v296 = vld [vmem:[%s5] sm:$0x3]
  %v298 = vlaneseq
  %v299 = vshrl.u32 %v298, 7
  %v300 = vsub.s32 0, %v299
  %v301 = vrot.slane %v296, %v300
  %v302 = vlaneseq
  %v303 = vshrl.u32 %v302, 7
  %v304 = vsub.s32 1, %v303
  %v305 = vrot.slane %v296, %v304
  %vm308 = vcmask 523264
  %v310 = vsel %vm308, %v272, 0
  %v313 = vsel %vm308, %v273, 0
  %v316 = vsel %vm308, %v274, 0
  %v319 = vsel %vm308, %v275, 0
  %v322 = vsel %vm308, %v276, 0
  %v325 = vsel %vm308, %v277, 0
  %v328 = vsel %vm308, %v278, 0
  %v331 = vsel %vm308, %v279, 0
  %333 = vmatprep.subr.mxu0 0.0
  %334 = vmatpush1.msra.mxu0 0.0
  %335 = vmatprep.subr.mxu0 0.0
  %336 = vmatpush1.msra.mxu0 0.0
  %337 = vmatprep.subr.mxu0 0.0
  %338 = vmatpush1.msra.mxu0 0.0
  %339 = vmatprep.subr.mxu0 0.0
  %340 = vmatpush1.msra.mxu0 0.0
  %341 = vmatprep.subr.mxu0 0.0
  %342 = vmatpush1.msra.mxu0 0.0
  %343 = vmatprep.subr.mxu0 0.0
  %344 = vmatpush1.msra.mxu0 0.0
  %345 = vmatprep.subr.mxu0 0.0
  %346 = vmatpush1.msra.mxu0 0.0
  %347 = vmatprep.subr.mxu0 0.0
  %348 = vmatpush1.msra.mxu0 0.0
  %349 = vmatprep.subr.mxu0 %v295
  %350 = vmatpush1.msra.mxu0 %v294
  %351 = vmatprep.subr.mxu0 %v293
  %352 = vmatpush1.msra.mxu0 %v292
  %353 = vmatprep.subr.mxu0 %v291
  %354 = vmatpush1.msra.mxu0 %v290
  %355 = vmatprep.subr.mxu0 %v289
  %356 = vmatpush1.msra.mxu0 %v288
  %357 = vmatprep.subr.mxu0 %v287
  %358 = vmatpush1.msra.mxu0 %v286
  %359 = vmatprep.subr.mxu0 %v285
  %360 = vmatpush1.msra.mxu0 %v284
  %361 = vmatprep.subr.mxu0 %v283
  %362 = vmatpush1.msra.mxu0 %v282
  %363 = vmatprep.subr.mxu0 %v281
  %364 = vmatpush1.msra.mxu0 %v280
  %365 = vmatprep.subr.mxu0 0.0
  %366 = vmatpush2.msra.mxu0 0.0
  %367 = vmatprep.subr.mxu0 0.0
  %368 = vmatpush2.msra.mxu0 0.0
  %369 = vmatprep.subr.mxu0 0.0
  %370 = vmatpush2.msra.mxu0 0.0
  %371 = vmatprep.subr.mxu0 0.0
  %372 = vmatpush2.msra.mxu0 0.0
  %373 = vmatprep.subr.mxu0 0.0
  %374 = vmatpush2.msra.mxu0 0.0
  %375 = vmatprep.subr.mxu0 0.0
  %376 = vmatpush2.msra.mxu0 0.0
  %377 = vmatprep.subr.mxu0 0.0
  %378 = vmatpush2.msra.mxu0 0.0
  %379 = vmatprep.subr.mxu0 0.0
  %380 = vmatpush2.msra.mxu0 0.0
  %381 = vmatprep.subr.mxu0 0.0
  %382 = vmatpush2.msra.mxu0 0.0
  %383 = vmatprep.subr.mxu0 0.0
  %384 = vmatpush2.msra.mxu0 0.0
  %385 = vmatprep.subr.mxu0 0.0
  %386 = vmatpush2.msra.mxu0 0.0
  %387 = vmatprep.subr.mxu0 0.0
  %388 = vmatpush2.msra.mxu0 0.0
  %389 = vmatprep.subr.mxu0 0.0
  %390 = vmatpush2.msra.mxu0 0.0
  %391 = vmatprep.subr.mxu0 0.0
  %392 = vmatpush2.msra.mxu0 0.0
  %393 = vmatprep.subr.mxu0 0.0
  %394 = vmatpush2.msra.mxu0 0.0
  %395 = vmatprep.subr.mxu0 0.0
  %396 = vmatpush2.msra.mxu0 0.0
  %397 = vmatprep.mubr.f32.mxu0 0.0
  %398 = vmatmul.mubr.f32.gmra.mxu0 %v310
  %v399 = vpop.f32.mrf.mxu0
  %v400 = vadd.f32 %v301, %v399
  %v401 = vpop.f32.mrf.mxu0
  %v402 = vadd.f32 %v305, %v401
  %403 = vmatprep.mubr.f32.mxu0 0.0
  %404 = vmatmul.mubr.f32.gmra.mxu0 %v313
  %v405 = vpop.f32.mrf.mxu0
  %v406 = vadd.f32 %v301, %v405
  %v407 = vpop.f32.mrf.mxu0
  %v408 = vadd.f32 %v305, %v407
  %409 = vmatprep.mubr.f32.mxu0 0.0
  %410 = vmatmul.mubr.f32.gmra.mxu0 %v316
  %v411 = vpop.f32.mrf.mxu0
  %v412 = vadd.f32 %v301, %v411
  %v413 = vpop.f32.mrf.mxu0
  %v414 = vadd.f32 %v305, %v413
  %415 = vmatprep.mubr.f32.mxu0 0.0
  %416 = vmatmul.mubr.f32.gmra.mxu0 %v319
  %v417 = vpop.f32.mrf.mxu0
  %v418 = vadd.f32 %v301, %v417
  %v419 = vpop.f32.mrf.mxu0
  %v420 = vadd.f32 %v305, %v419
  %421 = vmatprep.mubr.f32.mxu0 0.0
  %422 = vmatmul.mubr.f32.gmra.mxu0 %v322
  %v423 = vpop.f32.mrf.mxu0
  %v424 = vadd.f32 %v301, %v423
  %v425 = vpop.f32.mrf.mxu0
  %v426 = vadd.f32 %v305, %v425
  %427 = vmatprep.mubr.f32.mxu0 0.0
  %428 = vmatmul.mubr.f32.gmra.mxu0 %v325
  %v429 = vpop.f32.mrf.mxu0
  %v430 = vadd.f32 %v301, %v429
  %v431 = vpop.f32.mrf.mxu0
  %v432 = vadd.f32 %v305, %v431
  %433 = vmatprep.mubr.f32.mxu0 0.0
  %434 = vmatmul.mubr.f32.gmra.mxu0 %v328
  %v435 = vpop.f32.mrf.mxu0
  %v436 = vadd.f32 %v301, %v435
  %v437 = vpop.f32.mrf.mxu0
  %v438 = vadd.f32 %v305, %v437
  %439 = vmatprep.mubr.f32.mxu0 0.0
  %440 = vmatmul.mubr.f32.gmra.mxu0 %v331
  %v441 = vpop.f32.mrf.mxu0
  %v442 = vadd.f32 %v301, %v441
  %v443 = vpop.f32.mrf.mxu0
  %v444 = vadd.f32 %v305, %v443
  %445 = vdwg.mxu0
  %446 = vst [vmem:[#allocation2] sm:$0xff] %v400
  %447 = vst [vmem:[#allocation2 + $0x8] sm:$0xff] %v402
  %448 = vst [vmem:[#allocation2 + $0x10] sm:$0xff] %v406
  %449 = vst [vmem:[#allocation2 + $0x18] sm:$0xff] %v408
  %450 = vst [vmem:[#allocation2 + $0x20] sm:$0xff] %v412
  %451 = vst [vmem:[#allocation2 + $0x28] sm:$0xff] %v414
  %452 = vst [vmem:[#allocation2 + $0x30] sm:$0xff] %v418
  %453 = vst [vmem:[#allocation2 + $0x38] sm:$0xff] %v420
  %454 = vst [vmem:[#allocation2 + $0x40] sm:$0xff] %v424
  %455 = vst [vmem:[#allocation2 + $0x48] sm:$0xff] %v426
  %456 = vst [vmem:[#allocation2 + $0x50] sm:$0xff] %v430
  %457 = vst [vmem:[#allocation2 + $0x58] sm:$0xff] %v432
  %458 = vst [vmem:[#allocation2 + $0x60] sm:$0xff] %v436
  %459 = vst [vmem:[#allocation2 + $0x68] sm:$0xff] %v438
  %460 = vst [vmem:[#allocation2 + $0x70] sm:$0xff] %v442
  %461 = vst [vmem:[#allocation2 + $0x78] sm:$0xff] %v444
  %v462 = vld [vmem:[%s4] sm:$0xff]
  %v463 = vld [vmem:[%s4 + $0x8] sm:$0xff]
  %v464 = vld [vmem:[%s4 + $0x10] sm:$0xff]
  %v465 = vld [vmem:[%s4 + $0x18] sm:$0xff]
  %v466 = vld [vmem:[%s4 + $0x20] sm:$0xff]
  %v467 = vld [vmem:[%s4 + $0x28] sm:$0xff]
  %v468 = vld [vmem:[%s4 + $0x30] sm:$0xff]
  %v469 = vld [vmem:[%s4 + $0x38] sm:$0xff]
  %v470 = vld [vmem:[%s4 + $0x40] sm:$0xff]
  %v471 = vld [vmem:[%s4 + $0x48] sm:$0xff]
  %v472 = vld [vmem:[%s4 + $0x50] sm:$0xff]
  %v473 = vld [vmem:[%s4 + $0x58] sm:$0xff]
  %v474 = vld [vmem:[%s4 + $0x60] sm:$0xff]
  %v475 = vld [vmem:[%s4 + $0x68] sm:$0xff]
  %v476 = vld [vmem:[%s4 + $0x70] sm:$0xff]
  %v477 = vld [vmem:[%s4 + $0x78] sm:$0xff]
  %v478 = vld [vmem:[%s1] sm:$0xff]
  %v479 = vld [vmem:[%s2] sm:$0xff]
  %v480 = vld [vmem:[#allocation2] sm:$0xff]
  %v481 = vld [vmem:[#allocation2 + $0x8] sm:$0xff]
  %v483 = vsel %vm308, %v478, 0
  %485 = vmatprep.subr.mxu0 0.0
  %486 = vmatpush1.msra.mxu0 0.0
  %487 = vmatprep.subr.mxu0 0.0
  %488 = vmatpush1.msra.mxu0 0.0
  %489 = vmatprep.subr.mxu0 0.0
  %490 = vmatpush1.msra.mxu0 0.0
  %491 = vmatprep.subr.mxu0 0.0
  %492 = vmatpush1.msra.mxu0 0.0
  %493 = vmatprep.subr.mxu0 0.0
  %494 = vmatpush1.msra.mxu0 0.0
  %495 = vmatprep.subr.mxu0 0.0
  %496 = vmatpush1.msra.mxu0 0.0
  %497 = vmatprep.subr.mxu0 0.0
  %498 = vmatpush1.msra.mxu0 0.0
  %499 = vmatprep.subr.mxu0 0.0
  %500 = vmatpush1.msra.mxu0 0.0
  %501 = vmatprep.subr.mxu0 %v477
  %502 = vmatpush1.msra.mxu0 %v476
  %503 = vmatprep.subr.mxu0 %v475
  %504 = vmatpush1.msra.mxu0 %v474
  %505 = vmatprep.subr.mxu0 %v473
  %506 = vmatpush1.msra.mxu0 %v472
  %507 = vmatprep.subr.mxu0 %v471
  %508 = vmatpush1.msra.mxu0 %v470
  %509 = vmatprep.subr.mxu0 %v469
  %510 = vmatpush1.msra.mxu0 %v468
  %511 = vmatprep.subr.mxu0 %v467
  %512 = vmatpush1.msra.mxu0 %v466
  %513 = vmatprep.subr.mxu0 %v465
  %514 = vmatpush1.msra.mxu0 %v464
  %515 = vmatprep.subr.mxu0 %v463
  %516 = vmatpush1.msra.mxu0 %v462
  %517 = vmatprep.subr.mxu0 0.0
  %518 = vmatpush2.msra.mxu0 0.0
  %519 = vmatprep.subr.mxu0 0.0
  %520 = vmatpush2.msra.mxu0 0.0
  %521 = vmatprep.subr.mxu0 0.0
  %522 = vmatpush2.msra.mxu0 0.0
  %523 = vmatprep.subr.mxu0 0.0
  %524 = vmatpush2.msra.mxu0 0.0
  %525 = vmatprep.subr.mxu0 0.0
  %526 = vmatpush2.msra.mxu0 0.0
  %527 = vmatprep.subr.mxu0 0.0
  %528 = vmatpush2.msra.mxu0 0.0
  %529 = vmatprep.subr.mxu0 0.0
  %530 = vmatpush2.msra.mxu0 0.0
  %531 = vmatprep.subr.mxu0 0.0
  %532 = vmatpush2.msra.mxu0 0.0
  %533 = vmatprep.subr.mxu0 0.0
  %534 = vmatpush2.msra.mxu0 0.0
  %535 = vmatprep.subr.mxu0 0.0
  %536 = vmatpush2.msra.mxu0 0.0
  %537 = vmatprep.subr.mxu0 0.0
  %538 = vmatpush2.msra.mxu0 0.0
  %539 = vmatprep.subr.mxu0 0.0
  %540 = vmatpush2.msra.mxu0 0.0
  %541 = vmatprep.subr.mxu0 0.0
  %542 = vmatpush2.msra.mxu0 0.0
  %543 = vmatprep.subr.mxu0 0.0
  %544 = vmatpush2.msra.mxu0 0.0
  %545 = vmatprep.subr.mxu0 0.0
  %546 = vmatpush2.msra.mxu0 0.0
  %547 = vmatprep.subr.mxu0 0.0
  %548 = vmatpush2.msra.mxu0 0.0
  %549 = vmatprep.mubr.f32.mxu0 0.0
  %550 = vmatmul.mubr.f32.gmra.mxu0 %v483
  %v551 = vpop.f32.mrf.mxu0
  %v552 = vadd.f32 0.0, %v551
  %v553 = vpop.f32.mrf.mxu0
  %v554 = vadd.f32 0.0, %v553
  %555 = vdwg.mxu0
  %v556 = vadd.f32 %v480, %v552
  %v557 = vadd.f32 %v481, %v554
  %v558 = vxor.u32 %v556, 2147483648
  %v559 = vxor.u32 %v557, 2147483648
  %v560 = vmul.f32 %v558, 1.442695
  %v561 = vpow.pop %v560
  %v562 = vmul.f32 %v559, 1.442695
  %v563 = vpow.pop %v562
  %v564 = vadd.f32 %v561, 1.0
  %v565 = vadd.f32 %v563, 1.0
  %v566 = vrcp.pop %v564
  %v567 = vmul.f32 1.0, %v566
  %v568 = vrcp.pop %v565
  %v569 = vmul.f32 1.0, %v568
  %v570 = vtanh.pop %v557
  %572 = vrot.lane.b32.xlu0 %v479, 64
  %v573 = vpop.permute.xlu0 %572
  %v575 = vmul.f32 %v567, %v573
  %577 = vrot.lane.b32.xlu0 %v570, 64
  %v578 = vpop.permute.xlu0 %577
  %v580 = vmul.f32 %v567, %v578
  %582 = vrot.lane.b32.xlu0 %v580, 64
  %v583 = vpop.permute.xlu0 %582
  %v585 = vadd.f32 %v575, %v583
  %v586 = vtanh.pop %v585
  %588 = vrot.lane.b32.xlu0 %v586, 64
  %v589 = vpop.permute.xlu0 %588
  %v591 = vmul.f32 %v569, %v589
  %vm592 = vcmask 261120
  %593 = vst.msk [vmem:[#allocation3] sm:$0xff] %vm592, %v591
  %vm594 = vcmask 523520
  %595 = vst.msk [vmem:[#allocation3 + $0x38] sm:$0xff] %vm594, %v591
  %597 = vrot.lane.b32.xlu0 %v591, 64
  %v598 = vpop.permute.xlu0 %597
  %vm600 = vcmask 785920
  %601 = vst.msk [vmem:[#allocation3 + $0x38] sm:$0xff] %vm600, %v598
  %vm602 = vcmask 1048320
  %603 = vst.msk [vmem:[#allocation3] sm:$0xff] %vm602, %v598
  %v604 = vld [vmem:[#allocation2 + $0x10] sm:$0xff]
  %v605 = vld [vmem:[#allocation2 + $0x18] sm:$0xff]
  %v606 = vsel %vm308, %v591, 0
  %608 = vmatprep.subr.mxu0 0.0
  %609 = vmatpush1.msra.mxu0 0.0
  %610 = vmatprep.subr.mxu0 0.0
  %611 = vmatpush1.msra.mxu0 0.0
  %612 = vmatprep.subr.mxu0 0.0
  %613 = vmatpush1.msra.mxu0 0.0
  %614 = vmatprep.subr.mxu0 0.0
  %615 = vmatpush1.msra.mxu0 0.0
  %616 = vmatprep.subr.mxu0 0.0
  %617 = vmatpush1.msra.mxu0 0.0
  %618 = vmatprep.subr.mxu0 0.0
  %619 = vmatpush1.msra.mxu0 0.0
  %620 = vmatprep.subr.mxu0 0.0
  %621 = vmatpush1.msra.mxu0 0.0
  %622 = vmatprep.subr.mxu0 0.0
  %623 = vmatpush1.msra.mxu0 0.0
  %624 = vmatprep.subr.mxu0 %v477
  %625 = vmatpush1.msra.mxu0 %v476
  %626 = vmatprep.subr.mxu0 %v475
  %627 = vmatpush1.msra.mxu0 %v474
  %628 = vmatprep.subr.mxu0 %v473
  %629 = vmatpush1.msra.mxu0 %v472
  %630 = vmatprep.subr.mxu0 %v471
  %631 = vmatpush1.msra.mxu0 %v470
  %632 = vmatprep.subr.mxu0 %v469
  %633 = vmatpush1.msra.mxu0 %v468
  %634 = vmatprep.subr.mxu0 %v467
  %635 = vmatpush1.msra.mxu0 %v466
  %636 = vmatprep.subr.mxu0 %v465
  %637 = vmatpush1.msra.mxu0 %v464
  %638 = vmatprep.subr.mxu0 %v463
  %639 = vmatpush1.msra.mxu0 %v462
  %640 = vmatprep.subr.mxu0 0.0
  %641 = vmatpush2.msra.mxu0 0.0
  %642 = vmatprep.subr.mxu0 0.0
  %643 = vmatpush2.msra.mxu0 0.0
  %644 = vmatprep.subr.mxu0 0.0
  %645 = vmatpush2.msra.mxu0 0.0
  %646 = vmatprep.subr.mxu0 0.0
  %647 = vmatpush2.msra.mxu0 0.0
  %648 = vmatprep.subr.mxu0 0.0
  %649 = vmatpush2.msra.mxu0 0.0
  %650 = vmatprep.subr.mxu0 0.0
  %651 = vmatpush2.msra.mxu0 0.0
  %652 = vmatprep.subr.mxu0 0.0
  %653 = vmatpush2.msra.mxu0 0.0
  %654 = vmatprep.subr.mxu0 0.0
  %655 = vmatpush2.msra.mxu0 0.0
  %656 = vmatprep.subr.mxu0 0.0
  %657 = vmatpush2.msra.mxu0 0.0
  %658 = vmatprep.subr.mxu0 0.0
  %659 = vmatpush2.msra.mxu0 0.0
  %660 = vmatprep.subr.mxu0 0.0
  %661 = vmatpush2.msra.mxu0 0.0
  %662 = vmatprep.subr.mxu0 0.0
  %663 = vmatpush2.msra.mxu0 0.0
  %664 = vmatprep.subr.mxu0 0.0
  %665 = vmatpush2.msra.mxu0 0.0
  %666 = vmatprep.subr.mxu0 0.0
  %667 = vmatpush2.msra.mxu0 0.0
  %668 = vmatprep.subr.mxu0 0.0
  %669 = vmatpush2.msra.mxu0 0.0
  %670 = vmatprep.subr.mxu0 0.0
  %671 = vmatpush2.msra.mxu0 0.0
  %672 = vmatprep.mubr.f32.mxu0 0.0
  %673 = vmatmul.mubr.f32.gmra.mxu0 %v606
  %v674 = vpop.f32.mrf.mxu0
  %v675 = vadd.f32 0.0, %v674
  %v676 = vpop.f32.mrf.mxu0
  %v677 = vadd.f32 0.0, %v676
  %678 = vdwg.mxu0
  %v679 = vadd.f32 %v604, %v675
  %v680 = vadd.f32 %v605, %v677
  %v681 = vxor.u32 %v679, 2147483648
  %v682 = vxor.u32 %v680, 2147483648
  %v683 = vmul.f32 %v681, 1.442695
  %v684 = vpow.pop %v683
  %v685 = vmul.f32 %v682, 1.442695
  %v686 = vpow.pop %v685
  %v687 = vadd.f32 %v684, 1.0
  %v688 = vadd.f32 %v686, 1.0
  %v689 = vrcp.pop %v687
  %v690 = vmul.f32 1.0, %v689
  %v691 = vrcp.pop %v688
  %v692 = vmul.f32 1.0, %v691
  %v693 = vtanh.pop %v680
  %v694 = vmul.f32 %v690, %v585
  %696 = vrot.lane.b32.xlu0 %v693, 64
  %v697 = vpop.permute.xlu0 %696
  %v699 = vmul.f32 %v690, %v697
  %701 = vrot.lane.b32.xlu0 %v699, 64
  %v702 = vpop.permute.xlu0 %701
  %v704 = vadd.f32 %v694, %v702
  %v705 = vtanh.pop %v704
  %707 = vrot.lane.b32.xlu0 %v705, 64
  %v708 = vpop.permute.xlu0 %707
  %v710 = vmul.f32 %v692, %v708
  %711 = vst.msk [vmem:[#allocation3 + $0x8] sm:$0xff] %vm592, %v710
  %712 = vst.msk [vmem:[#allocation3 + $0x30] sm:$0xff] %vm594, %v710
  %714 = vrot.lane.b32.xlu0 %v710, 64
  %v715 = vpop.permute.xlu0 %714
  %717 = vst.msk [vmem:[#allocation3 + $0x30] sm:$0xff] %vm600, %v715
  %718 = vst.msk [vmem:[#allocation3 + $0x8] sm:$0xff] %vm602, %v715
  %v719 = vld [vmem:[#allocation2 + $0x20] sm:$0xff]
  %v720 = vld [vmem:[#allocation2 + $0x28] sm:$0xff]
  %v721 = vsel %vm308, %v710, 0
  %723 = vmatprep.subr.mxu0 0.0
  %724 = vmatpush1.msra.mxu0 0.0
  %725 = vmatprep.subr.mxu0 0.0
  %726 = vmatpush1.msra.mxu0 0.0
  %727 = vmatprep.subr.mxu0 0.0
  %728 = vmatpush1.msra.mxu0 0.0
  %729 = vmatprep.subr.mxu0 0.0
  %730 = vmatpush1.msra.mxu0 0.0
  %731 = vmatprep.subr.mxu0 0.0
  %732 = vmatpush1.msra.mxu0 0.0
  %733 = vmatprep.subr.mxu0 0.0
  %734 = vmatpush1.msra.mxu0 0.0
  %735 = vmatprep.subr.mxu0 0.0
  %736 = vmatpush1.msra.mxu0 0.0
  %737 = vmatprep.subr.mxu0 0.0
  %738 = vmatpush1.msra.mxu0 0.0
  %739 = vmatprep.subr.mxu0 %v477
  %740 = vmatpush1.msra.mxu0 %v476
  %741 = vmatprep.subr.mxu0 %v475
  %742 = vmatpush1.msra.mxu0 %v474
  %743 = vmatprep.subr.mxu0 %v473
  %744 = vmatpush1.msra.mxu0 %v472
  %745 = vmatprep.subr.mxu0 %v471
  %746 = vmatpush1.msra.mxu0 %v470
  %747 = vmatprep.subr.mxu0 %v469
  %748 = vmatpush1.msra.mxu0 %v468
  %749 = vmatprep.subr.mxu0 %v467
  %750 = vmatpush1.msra.mxu0 %v466
  %751 = vmatprep.subr.mxu0 %v465
  %752 = vmatpush1.msra.mxu0 %v464
  %753 = vmatprep.subr.mxu0 %v463
  %754 = vmatpush1.msra.mxu0 %v462
  %755 = vmatprep.subr.mxu0 0.0
  %756 = vmatpush2.msra.mxu0 0.0
  %757 = vmatprep.subr.mxu0 0.0
  %758 = vmatpush2.msra.mxu0 0.0
  %759 = vmatprep.subr.mxu0 0.0
  %760 = vmatpush2.msra.mxu0 0.0
  %761 = vmatprep.subr.mxu0 0.0
  %762 = vmatpush2.msra.mxu0 0.0
  %763 = vmatprep.subr.mxu0 0.0
  %764 = vmatpush2.msra.mxu0 0.0
  %765 = vmatprep.subr.mxu0 0.0
  %766 = vmatpush2.msra.mxu0 0.0
  %767 = vmatprep.subr.mxu0 0.0
  %768 = vmatpush2.msra.mxu0 0.0
  %769 = vmatprep.subr.mxu0 0.0
  %770 = vmatpush2.msra.mxu0 0.0
  %771 = vmatprep.subr.mxu0 0.0
  %772 = vmatpush2.msra.mxu0 0.0
  %773 = vmatprep.subr.mxu0 0.0
  %774 = vmatpush2.msra.mxu0 0.0
  %775 = vmatprep.subr.mxu0 0.0
  %776 = vmatpush2.msra.mxu0 0.0
  %777 = vmatprep.subr.mxu0 0.0
  %778 = vmatpush2.msra.mxu0 0.0
  %779 = vmatprep.subr.mxu0 0.0
  %780 = vmatpush2.msra.mxu0 0.0
  %781 = vmatprep.subr.mxu0 0.0
  %782 = vmatpush2.msra.mxu0 0.0
  %783 = vmatprep.subr.mxu0 0.0
  %784 = vmatpush2.msra.mxu0 0.0
  %785 = vmatprep.subr.mxu0 0.0
  %786 = vmatpush2.msra.mxu0 0.0
  %787 = vmatprep.mubr.f32.mxu0 0.0
  %788 = vmatmul.mubr.f32.gmra.mxu0 %v721
  %v789 = vpop.f32.mrf.mxu0
  %v790 = vadd.f32 0.0, %v789
  %v791 = vpop.f32.mrf.mxu0
  %v792 = vadd.f32 0.0, %v791
  %793 = vdwg.mxu0
  %v794 = vadd.f32 %v719, %v790
  %v795 = vadd.f32 %v720, %v792
  %v796 = vxor.u32 %v794, 2147483648
  %v797 = vxor.u32 %v795, 2147483648
  %v798 = vmul.f32 %v796, 1.442695
  %v799 = vpow.pop %v798
  %v800 = vmul.f32 %v797, 1.442695
  %v801 = vpow.pop %v800
  %v802 = vadd.f32 %v799, 1.0
  %v803 = vadd.f32 %v801, 1.0
  %v804 = vrcp.pop %v802
  %v805 = vmul.f32 1.0, %v804
  %v806 = vrcp.pop %v803
  %v807 = vmul.f32 1.0, %v806
  %v808 = vtanh.pop %v795
  %v809 = vmul.f32 %v805, %v704
  %811 = vrot.lane.b32.xlu0 %v808, 64
  %v812 = vpop.permute.xlu0 %811
  %v814 = vmul.f32 %v805, %v812
  %816 = vrot.lane.b32.xlu0 %v814, 64
  %v817 = vpop.permute.xlu0 %816
  %v819 = vadd.f32 %v809, %v817
  %v820 = vtanh.pop %v819
  %822 = vrot.lane.b32.xlu0 %v820, 64
  %v823 = vpop.permute.xlu0 %822
  %v825 = vmul.f32 %v807, %v823
  %826 = vst.msk [vmem:[#allocation3 + $0x10] sm:$0xff] %vm592, %v825
  %827 = vst.msk [vmem:[#allocation3 + $0x28] sm:$0xff] %vm594, %v825
  %829 = vrot.lane.b32.xlu0 %v825, 64
  %v830 = vpop.permute.xlu0 %829
  %832 = vst.msk [vmem:[#allocation3 + $0x28] sm:$0xff] %vm600, %v830
  %833 = vst.msk [vmem:[#allocation3 + $0x10] sm:$0xff] %vm602, %v830
  %v834 = vld [vmem:[#allocation2 + $0x30] sm:$0xff]
  %v835 = vld [vmem:[#allocation2 + $0x38] sm:$0xff]
  %v836 = vsel %vm308, %v825, 0
  %838 = vmatprep.subr.mxu0 0.0
  %839 = vmatpush1.msra.mxu0 0.0
  %840 = vmatprep.subr.mxu0 0.0
  %841 = vmatpush1.msra.mxu0 0.0
  %842 = vmatprep.subr.mxu0 0.0
  %843 = vmatpush1.msra.mxu0 0.0
  %844 = vmatprep.subr.mxu0 0.0
  %845 = vmatpush1.msra.mxu0 0.0
  %846 = vmatprep.subr.mxu0 0.0
  %847 = vmatpush1.msra.mxu0 0.0
  %848 = vmatprep.subr.mxu0 0.0
  %849 = vmatpush1.msra.mxu0 0.0
  %850 = vmatprep.subr.mxu0 0.0
  %851 = vmatpush1.msra.mxu0 0.0
  %852 = vmatprep.subr.mxu0 0.0
  %853 = vmatpush1.msra.mxu0 0.0
  %854 = vmatprep.subr.mxu0 %v477
  %855 = vmatpush1.msra.mxu0 %v476
  %856 = vmatprep.subr.mxu0 %v475
  %857 = vmatpush1.msra.mxu0 %v474
  %858 = vmatprep.subr.mxu0 %v473
  %859 = vmatpush1.msra.mxu0 %v472
  %860 = vmatprep.subr.mxu0 %v471
  %861 = vmatpush1.msra.mxu0 %v470
  %862 = vmatprep.subr.mxu0 %v469
  %863 = vmatpush1.msra.mxu0 %v468
  %864 = vmatprep.subr.mxu0 %v467
  %865 = vmatpush1.msra.mxu0 %v466
  %866 = vmatprep.subr.mxu0 %v465
  %867 = vmatpush1.msra.mxu0 %v464
  %868 = vmatprep.subr.mxu0 %v463
  %869 = vmatpush1.msra.mxu0 %v462
  %870 = vmatprep.subr.mxu0 0.0
  %871 = vmatpush2.msra.mxu0 0.0
  %872 = vmatprep.subr.mxu0 0.0
  %873 = vmatpush2.msra.mxu0 0.0
  %874 = vmatprep.subr.mxu0 0.0
  %875 = vmatpush2.msra.mxu0 0.0
  %876 = vmatprep.subr.mxu0 0.0
  %877 = vmatpush2.msra.mxu0 0.0
  %878 = vmatprep.subr.mxu0 0.0
  %879 = vmatpush2.msra.mxu0 0.0
  %880 = vmatprep.subr.mxu0 0.0
  %881 = vmatpush2.msra.mxu0 0.0
  %882 = vmatprep.subr.mxu0 0.0
  %883 = vmatpush2.msra.mxu0 0.0
  %884 = vmatprep.subr.mxu0 0.0
  %885 = vmatpush2.msra.mxu0 0.0
  %886 = vmatprep.subr.mxu0 0.0
  %887 = vmatpush2.msra.mxu0 0.0
  %888 = vmatprep.subr.mxu0 0.0
  %889 = vmatpush2.msra.mxu0 0.0
  %890 = vmatprep.subr.mxu0 0.0
  %891 = vmatpush2.msra.mxu0 0.0
  %892 = vmatprep.subr.mxu0 0.0
  %893 = vmatpush2.msra.mxu0 0.0
  %894 = vmatprep.subr.mxu0 0.0
  %895 = vmatpush2.msra.mxu0 0.0
  %896 = vmatprep.subr.mxu0 0.0
  %897 = vmatpush2.msra.mxu0 0.0
  %898 = vmatprep.subr.mxu0 0.0
  %899 = vmatpush2.msra.mxu0 0.0
  %900 = vmatprep.subr.mxu0 0.0
  %901 = vmatpush2.msra.mxu0 0.0
  %902 = vmatprep.mubr.f32.mxu0 0.0
  %903 = vmatmul.mubr.f32.gmra.mxu0 %v836
  %v904 = vpop.f32.mrf.mxu0
  %v905 = vadd.f32 0.0, %v904
  %v906 = vpop.f32.mrf.mxu0
  %v907 = vadd.f32 0.0, %v906
  %908 = vdwg.mxu0
  %v909 = vadd.f32 %v834, %v905
  %v910 = vadd.f32 %v835, %v907
  %v911 = vxor.u32 %v909, 2147483648
  %v912 = vxor.u32 %v910, 2147483648
  %v913 = vmul.f32 %v911, 1.442695
  %v914 = vpow.pop %v913
  %v915 = vmul.f32 %v912, 1.442695
  %v916 = vpow.pop %v915
  %v917 = vadd.f32 %v914, 1.0
  %v918 = vadd.f32 %v916, 1.0
  %v919 = vrcp.pop %v917
  %v920 = vmul.f32 1.0, %v919
  %v921 = vrcp.pop %v918
  %v922 = vmul.f32 1.0, %v921
  %v923 = vtanh.pop %v910
  %v924 = vmul.f32 %v920, %v819
  %926 = vrot.lane.b32.xlu0 %v923, 64
  %v927 = vpop.permute.xlu0 %926
  %v929 = vmul.f32 %v920, %v927
  %931 = vrot.lane.b32.xlu0 %v929, 64
  %v932 = vpop.permute.xlu0 %931
  %v934 = vadd.f32 %v924, %v932
  %v935 = vtanh.pop %v934
  %937 = vrot.lane.b32.xlu0 %v935, 64
  %v938 = vpop.permute.xlu0 %937
  %v940 = vmul.f32 %v922, %v938
  %941 = vst.msk [vmem:[#allocation3 + $0x18] sm:$0xff] %vm592, %v940
  %942 = vst.msk [vmem:[#allocation3 + $0x20] sm:$0xff] %vm594, %v940
  %944 = vrot.lane.b32.xlu0 %v940, 64
  %v945 = vpop.permute.xlu0 %944
  %947 = vst.msk [vmem:[#allocation3 + $0x20] sm:$0xff] %vm600, %v945
  %948 = vst.msk [vmem:[#allocation3 + $0x18] sm:$0xff] %vm602, %v945
  %v949 = vld [vmem:[#allocation2 + $0x40] sm:$0xff]
  %v950 = vld [vmem:[#allocation2 + $0x48] sm:$0xff]
  %v951 = vsel %vm308, %v940, 0
  %953 = vmatprep.subr.mxu0 0.0
  %954 = vmatpush1.msra.mxu0 0.0
  %955 = vmatprep.subr.mxu0 0.0
  %956 = vmatpush1.msra.mxu0 0.0
  %957 = vmatprep.subr.mxu0 0.0
  %958 = vmatpush1.msra.mxu0 0.0
  %959 = vmatprep.subr.mxu0 0.0
  %960 = vmatpush1.msra.mxu0 0.0
  %961 = vmatprep.subr.mxu0 0.0
  %962 = vmatpush1.msra.mxu0 0.0
  %963 = vmatprep.subr.mxu0 0.0
  %964 = vmatpush1.msra.mxu0 0.0
  %965 = vmatprep.subr.mxu0 0.0
  %966 = vmatpush1.msra.mxu0 0.0
  %967 = vmatprep.subr.mxu0 0.0
  %968 = vmatpush1.msra.mxu0 0.0
  %969 = vmatprep.subr.mxu0 %v477
  %970 = vmatpush1.msra.mxu0 %v476
  %971 = vmatprep.subr.mxu0 %v475
  %972 = vmatpush1.msra.mxu0 %v474
  %973 = vmatprep.subr.mxu0 %v473
  %974 = vmatpush1.msra.mxu0 %v472
  %975 = vmatprep.subr.mxu0 %v471
  %976 = vmatpush1.msra.mxu0 %v470
  %977 = vmatprep.subr.mxu0 %v469
  %978 = vmatpush1.msra.mxu0 %v468
  %979 = vmatprep.subr.mxu0 %v467
  %980 = vmatpush1.msra.mxu0 %v466
  %981 = vmatprep.subr.mxu0 %v465
  %982 = vmatpush1.msra.mxu0 %v464
  %983 = vmatprep.subr.mxu0 %v463
  %984 = vmatpush1.msra.mxu0 %v462
  %985 = vmatprep.subr.mxu0 0.0
  %986 = vmatpush2.msra.mxu0 0.0
  %987 = vmatprep.subr.mxu0 0.0
  %988 = vmatpush2.msra.mxu0 0.0
  %989 = vmatprep.subr.mxu0 0.0
  %990 = vmatpush2.msra.mxu0 0.0
  %991 = vmatprep.subr.mxu0 0.0
  %992 = vmatpush2.msra.mxu0 0.0
  %993 = vmatprep.subr.mxu0 0.0
  %994 = vmatpush2.msra.mxu0 0.0
  %995 = vmatprep.subr.mxu0 0.0
  %996 = vmatpush2.msra.mxu0 0.0
  %997 = vmatprep.subr.mxu0 0.0
  %998 = vmatpush2.msra.mxu0 0.0
  %999 = vmatprep.subr.mxu0 0.0
  %1000 = vmatpush2.msra.mxu0 0.0
  %1001 = vmatprep.subr.mxu0 0.0
  %1002 = vmatpush2.msra.mxu0 0.0
  %1003 = vmatprep.subr.mxu0 0.0
  %1004 = vmatpush2.msra.mxu0 0.0
  %1005 = vmatprep.subr.mxu0 0.0
  %1006 = vmatpush2.msra.mxu0 0.0
  %1007 = vmatprep.subr.mxu0 0.0
  %1008 = vmatpush2.msra.mxu0 0.0
  %1009 = vmatprep.subr.mxu0 0.0
  %1010 = vmatpush2.msra.mxu0 0.0
  %1011 = vmatprep.subr.mxu0 0.0
  %1012 = vmatpush2.msra.mxu0 0.0
  %1013 = vmatprep.subr.mxu0 0.0
  %1014 = vmatpush2.msra.mxu0 0.0
  %1015 = vmatprep.subr.mxu0 0.0
  %1016 = vmatpush2.msra.mxu0 0.0
  %1017 = vmatprep.mubr.f32.mxu0 0.0
  %1018 = vmatmul.mubr.f32.gmra.mxu0 %v951
  %v1019 = vpop.f32.mrf.mxu0
  %v1020 = vadd.f32 0.0, %v1019
  %v1021 = vpop.f32.mrf.mxu0
  %v1022 = vadd.f32 0.0, %v1021
  %1023 = vdwg.mxu0
  %v1024 = vadd.f32 %v949, %v1020
  %v1025 = vadd.f32 %v950, %v1022
  %v1026 = vxor.u32 %v1024, 2147483648
  %v1027 = vxor.u32 %v1025, 2147483648
  %v1028 = vmul.f32 %v1026, 1.442695
  %v1029 = vpow.pop %v1028
  %v1030 = vmul.f32 %v1027, 1.442695
  %v1031 = vpow.pop %v1030
  %v1032 = vadd.f32 %v1029, 1.0
  %v1033 = vadd.f32 %v1031, 1.0
  %v1034 = vrcp.pop %v1032
  %v1035 = vmul.f32 1.0, %v1034
  %v1036 = vrcp.pop %v1033
  %v1037 = vmul.f32 1.0, %v1036
  %v1038 = vtanh.pop %v1025
  %v1039 = vmul.f32 %v1035, %v934
  %1041 = vrot.lane.b32.xlu0 %v1038, 64
  %v1042 = vpop.permute.xlu0 %1041
  %v1044 = vmul.f32 %v1035, %v1042
  %1046 = vrot.lane.b32.xlu0 %v1044, 64
  %v1047 = vpop.permute.xlu0 %1046
  %v1049 = vadd.f32 %v1039, %v1047
  %v1050 = vtanh.pop %v1049
  %1052 = vrot.lane.b32.xlu0 %v1050, 64
  %v1053 = vpop.permute.xlu0 %1052
  %v1055 = vmul.f32 %v1037, %v1053
  %1056 = vst.msk [vmem:[#allocation3 + $0x20] sm:$0xff] %vm592, %v1055
  %1057 = vst.msk [vmem:[#allocation3 + $0x18] sm:$0xff] %vm594, %v1055
  %1059 = vrot.lane.b32.xlu0 %v1055, 64
  %v1060 = vpop.permute.xlu0 %1059
  %1062 = vst.msk [vmem:[#allocation3 + $0x18] sm:$0xff] %vm600, %v1060
  %1063 = vst.msk [vmem:[#allocation3 + $0x20] sm:$0xff] %vm602, %v1060
  %v1064 = vld [vmem:[#allocation2 + $0x50] sm:$0xff]
  %v1065 = vld [vmem:[#allocation2 + $0x58] sm:$0xff]
  %v1066 = vsel %vm308, %v1055, 0
  %1068 = vmatprep.subr.mxu0 0.0
  %1069 = vmatpush1.msra.mxu0 0.0
  %1070 = vmatprep.subr.mxu0 0.0
  %1071 = vmatpush1.msra.mxu0 0.0
  %1072 = vmatprep.subr.mxu0 0.0
  %1073 = vmatpush1.msra.mxu0 0.0
  %1074 = vmatprep.subr.mxu0 0.0
  %1075 = vmatpush1.msra.mxu0 0.0
  %1076 = vmatprep.subr.mxu0 0.0
  %1077 = vmatpush1.msra.mxu0 0.0
  %1078 = vmatprep.subr.mxu0 0.0
  %1079 = vmatpush1.msra.mxu0 0.0
  %1080 = vmatprep.subr.mxu0 0.0
  %1081 = vmatpush1.msra.mxu0 0.0
  %1082 = vmatprep.subr.mxu0 0.0
  %1083 = vmatpush1.msra.mxu0 0.0
  %1084 = vmatprep.subr.mxu0 %v477
  %1085 = vmatpush1.msra.mxu0 %v476
  %1086 = vmatprep.subr.mxu0 %v475
  %1087 = vmatpush1.msra.mxu0 %v474
  %1088 = vmatprep.subr.mxu0 %v473
  %1089 = vmatpush1.msra.mxu0 %v472
  %1090 = vmatprep.subr.mxu0 %v471
  %1091 = vmatpush1.msra.mxu0 %v470
  %1092 = vmatprep.subr.mxu0 %v469
  %1093 = vmatpush1.msra.mxu0 %v468
  %1094 = vmatprep.subr.mxu0 %v467
  %1095 = vmatpush1.msra.mxu0 %v466
  %1096 = vmatprep.subr.mxu0 %v465
  %1097 = vmatpush1.msra.mxu0 %v464
  %1098 = vmatprep.subr.mxu0 %v463
  %1099 = vmatpush1.msra.mxu0 %v462
  %1100 = vmatprep.subr.mxu0 0.0
  %1101 = vmatpush2.msra.mxu0 0.0
  %1102 = vmatprep.subr.mxu0 0.0
  %1103 = vmatpush2.msra.mxu0 0.0
  %1104 = vmatprep.subr.mxu0 0.0
  %1105 = vmatpush2.msra.mxu0 0.0
  %1106 = vmatprep.subr.mxu0 0.0
  %1107 = vmatpush2.msra.mxu0 0.0
  %1108 = vmatprep.subr.mxu0 0.0
  %1109 = vmatpush2.msra.mxu0 0.0
  %1110 = vmatprep.subr.mxu0 0.0
  %1111 = vmatpush2.msra.mxu0 0.0
  %1112 = vmatprep.subr.mxu0 0.0
  %1113 = vmatpush2.msra.mxu0 0.0
  %1114 = vmatprep.subr.mxu0 0.0
  %1115 = vmatpush2.msra.mxu0 0.0
  %1116 = vmatprep.subr.mxu0 0.0
  %1117 = vmatpush2.msra.mxu0 0.0
  %1118 = vmatprep.subr.mxu0 0.0
  %1119 = vmatpush2.msra.mxu0 0.0
  %1120 = vmatprep.subr.mxu0 0.0
  %1121 = vmatpush2.msra.mxu0 0.0
  %1122 = vmatprep.subr.mxu0 0.0
  %1123 = vmatpush2.msra.mxu0 0.0
  %1124 = vmatprep.subr.mxu0 0.0
  %1125 = vmatpush2.msra.mxu0 0.0
  %1126 = vmatprep.subr.mxu0 0.0
  %1127 = vmatpush2.msra.mxu0 0.0
  %1128 = vmatprep.subr.mxu0 0.0
  %1129 = vmatpush2.msra.mxu0 0.0
  %1130 = vmatprep.subr.mxu0 0.0
  %1131 = vmatpush2.msra.mxu0 0.0
  %1132 = vmatprep.mubr.f32.mxu0 0.0
  %1133 = vmatmul.mubr.f32.gmra.mxu0 %v1066
  %v1134 = vpop.f32.mrf.mxu0
  %v1135 = vadd.f32 0.0, %v1134
  %v1136 = vpop.f32.mrf.mxu0
  %v1137 = vadd.f32 0.0, %v1136
  %1138 = vdwg.mxu0
  %v1139 = vadd.f32 %v1064, %v1135
  %v1140 = vadd.f32 %v1065, %v1137
  %v1141 = vxor.u32 %v1139, 2147483648
  %v1142 = vxor.u32 %v1140, 2147483648
  %v1143 = vmul.f32 %v1141, 1.442695
  %v1144 = vpow.pop %v1143
  %v1145 = vmul.f32 %v1142, 1.442695
  %v1146 = vpow.pop %v1145
  %v1147 = vadd.f32 %v1144, 1.0
  %v1148 = vadd.f32 %v1146, 1.0
  %v1149 = vrcp.pop %v1147
  %v1150 = vmul.f32 1.0, %v1149
  %v1151 = vrcp.pop %v1148
  %v1152 = vmul.f32 1.0, %v1151
  %v1153 = vtanh.pop %v1140
  %v1154 = vmul.f32 %v1150, %v1049
  %1156 = vrot.lane.b32.xlu0 %v1153, 64
  %v1157 = vpop.permute.xlu0 %1156
  %v1159 = vmul.f32 %v1150, %v1157
  %1161 = vrot.lane.b32.xlu0 %v1159, 64
  %v1162 = vpop.permute.xlu0 %1161
  %v1164 = vadd.f32 %v1154, %v1162
  %v1165 = vtanh.pop %v1164
  %1167 = vrot.lane.b32.xlu0 %v1165, 64
  %v1168 = vpop.permute.xlu0 %1167
  %v1170 = vmul.f32 %v1152, %v1168
  %1171 = vst.msk [vmem:[#allocation3 + $0x28] sm:$0xff] %vm592, %v1170
  %1172 = vst.msk [vmem:[#allocation3 + $0x10] sm:$0xff] %vm594, %v1170
  %1174 = vrot.lane.b32.xlu0 %v1170, 64
  %v1175 = vpop.permute.xlu0 %1174
  %1177 = vst.msk [vmem:[#allocation3 + $0x10] sm:$0xff] %vm600, %v1175
  %1178 = vst.msk [vmem:[#allocation3 + $0x28] sm:$0xff] %vm602, %v1175
  %v1179 = vld [vmem:[#allocation2 + $0x60] sm:$0xff]
  %v1180 = vld [vmem:[#allocation2 + $0x68] sm:$0xff]
  %v1181 = vsel %vm308, %v1170, 0
  %1183 = vmatprep.subr.mxu0 0.0
  %1184 = vmatpush1.msra.mxu0 0.0
  %1185 = vmatprep.subr.mxu0 0.0
  %1186 = vmatpush1.msra.mxu0 0.0
  %1187 = vmatprep.subr.mxu0 0.0
  %1188 = vmatpush1.msra.mxu0 0.0
  %1189 = vmatprep.subr.mxu0 0.0
  %1190 = vmatpush1.msra.mxu0 0.0
  %1191 = vmatprep.subr.mxu0 0.0
  %1192 = vmatpush1.msra.mxu0 0.0
  %1193 = vmatprep.subr.mxu0 0.0
  %1194 = vmatpush1.msra.mxu0 0.0
  %1195 = vmatprep.subr.mxu0 0.0
  %1196 = vmatpush1.msra.mxu0 0.0
  %1197 = vmatprep.subr.mxu0 0.0
  %1198 = vmatpush1.msra.mxu0 0.0
  %1199 = vmatprep.subr.mxu0 %v477
  %1200 = vmatpush1.msra.mxu0 %v476
  %1201 = vmatprep.subr.mxu0 %v475
  %1202 = vmatpush1.msra.mxu0 %v474
  %1203 = vmatprep.subr.mxu0 %v473
  %1204 = vmatpush1.msra.mxu0 %v472
  %1205 = vmatprep.subr.mxu0 %v471
  %1206 = vmatpush1.msra.mxu0 %v470
  %1207 = vmatprep.subr.mxu0 %v469
  %1208 = vmatpush1.msra.mxu0 %v468
  %1209 = vmatprep.subr.mxu0 %v467
  %1210 = vmatpush1.msra.mxu0 %v466
  %1211 = vmatprep.subr.mxu0 %v465
  %1212 = vmatpush1.msra.mxu0 %v464
  %1213 = vmatprep.subr.mxu0 %v463
  %1214 = vmatpush1.msra.mxu0 %v462
  %1215 = vmatprep.subr.mxu0 0.0
  %1216 = vmatpush2.msra.mxu0 0.0
  %1217 = vmatprep.subr.mxu0 0.0
  %1218 = vmatpush2.msra.mxu0 0.0
  %1219 = vmatprep.subr.mxu0 0.0
  %1220 = vmatpush2.msra.mxu0 0.0
  %1221 = vmatprep.subr.mxu0 0.0
  %1222 = vmatpush2.msra.mxu0 0.0
  %1223 = vmatprep.subr.mxu0 0.0
  %1224 = vmatpush2.msra.mxu0 0.0
  %1225 = vmatprep.subr.mxu0 0.0
  %1226 = vmatpush2.msra.mxu0 0.0
  %1227 = vmatprep.subr.mxu0 0.0
  %1228 = vmatpush2.msra.mxu0 0.0
  %1229 = vmatprep.subr.mxu0 0.0
  %1230 = vmatpush2.msra.mxu0 0.0
  %1231 = vmatprep.subr.mxu0 0.0
  %1232 = vmatpush2.msra.mxu0 0.0
  %1233 = vmatprep.subr.mxu0 0.0
  %1234 = vmatpush2.msra.mxu0 0.0
  %1235 = vmatprep.subr.mxu0 0.0
  %1236 = vmatpush2.msra.mxu0 0.0
  %1237 = vmatprep.subr.mxu0 0.0
  %1238 = vmatpush2.msra.mxu0 0.0
  %1239 = vmatprep.subr.mxu0 0.0
  %1240 = vmatpush2.msra.mxu0 0.0
  %1241 = vmatprep.subr.mxu0 0.0
  %1242 = vmatpush2.msra.mxu0 0.0
  %1243 = vmatprep.subr.mxu0 0.0
  %1244 = vmatpush2.msra.mxu0 0.0
  %1245 = vmatprep.subr.mxu0 0.0
  %1246 = vmatpush2.msra.mxu0 0.0
  %1247 = vmatprep.mubr.f32.mxu0 0.0
  %1248 = vmatmul.mubr.f32.gmra.mxu0 %v1181
  %v1249 = vpop.f32.mrf.mxu0
  %v1250 = vadd.f32 0.0, %v1249
  %v1251 = vpop.f32.mrf.mxu0
  %v1252 = vadd.f32 0.0, %v1251
  %1253 = vdwg.mxu0
  %v1254 = vadd.f32 %v1179, %v1250
  %v1255 = vadd.f32 %v1180, %v1252
  %v1256 = vxor.u32 %v1254, 2147483648
  %v1257 = vxor.u32 %v1255, 2147483648
  %v1258 = vmul.f32 %v1256, 1.442695
  %v1259 = vpow.pop %v1258
  %v1260 = vmul.f32 %v1257, 1.442695
  %v1261 = vpow.pop %v1260
  %v1262 = vadd.f32 %v1259, 1.0
  %v1263 = vadd.f32 %v1261, 1.0
  %v1264 = vrcp.pop %v1262
  %v1265 = vmul.f32 1.0, %v1264
  %v1266 = vrcp.pop %v1263
  %v1267 = vmul.f32 1.0, %v1266
  %v1268 = vtanh.pop %v1255
  %v1269 = vmul.f32 %v1265, %v1164
  %1271 = vrot.lane.b32.xlu0 %v1268, 64
  %v1272 = vpop.permute.xlu0 %1271
  %v1274 = vmul.f32 %v1265, %v1272
  %1276 = vrot.lane.b32.xlu0 %v1274, 64
  %v1277 = vpop.permute.xlu0 %1276
  %v1279 = vadd.f32 %v1269, %v1277
  %v1280 = vtanh.pop %v1279
  %1282 = vrot.lane.b32.xlu0 %v1280, 64
  %v1283 = vpop.permute.xlu0 %1282
  %v1285 = vmul.f32 %v1267, %v1283
  %1286 = vst.msk [vmem:[#allocation3 + $0x30] sm:$0xff] %vm592, %v1285
  %1287 = vst.msk [vmem:[#allocation3 + $0x8] sm:$0xff] %vm594, %v1285
  %1289 = vrot.lane.b32.xlu0 %v1285, 64
  %v1290 = vpop.permute.xlu0 %1289
  %1292 = vst.msk [vmem:[#allocation3 + $0x8] sm:$0xff] %vm600, %v1290
  %1293 = vst.msk [vmem:[#allocation3 + $0x30] sm:$0xff] %vm602, %v1290
  %v1294 = vld [vmem:[#allocation2 + $0x70] sm:$0xff]
  %v1295 = vld [vmem:[#allocation2 + $0x78] sm:$0xff]
  %v1296 = vsel %vm308, %v1285, 0
  %1298 = vmatprep.subr.mxu0 0.0
  %1299 = vmatpush1.msra.mxu0 0.0
  %1300 = vmatprep.subr.mxu0 0.0
  %1301 = vmatpush1.msra.mxu0 0.0
  %1302 = vmatprep.subr.mxu0 0.0
  %1303 = vmatpush1.msra.mxu0 0.0
  %1304 = vmatprep.subr.mxu0 0.0
  %1305 = vmatpush1.msra.mxu0 0.0
  %1306 = vmatprep.subr.mxu0 0.0
  %1307 = vmatpush1.msra.mxu0 0.0
  %1308 = vmatprep.subr.mxu0 0.0
  %1309 = vmatpush1.msra.mxu0 0.0
  %1310 = vmatprep.subr.mxu0 0.0
  %1311 = vmatpush1.msra.mxu0 0.0
  %1312 = vmatprep.subr.mxu0 0.0
  %1313 = vmatpush1.msra.mxu0 0.0
  %1314 = vmatprep.subr.mxu0 %v477
  %1315 = vmatpush1.msra.mxu0 %v476
  %1316 = vmatprep.subr.mxu0 %v475
  %1317 = vmatpush1.msra.mxu0 %v474
  %1318 = vmatprep.subr.mxu0 %v473
  %1319 = vmatpush1.msra.mxu0 %v472
  %1320 = vmatprep.subr.mxu0 %v471
  %1321 = vmatpush1.msra.mxu0 %v470
  %1322 = vmatprep.subr.mxu0 %v469
  %1323 = vmatpush1.msra.mxu0 %v468
  %1324 = vmatprep.subr.mxu0 %v467
  %1325 = vmatpush1.msra.mxu0 %v466
  %1326 = vmatprep.subr.mxu0 %v465
  %1327 = vmatpush1.msra.mxu0 %v464
  %1328 = vmatprep.subr.mxu0 %v463
  %1329 = vmatpush1.msra.mxu0 %v462
  %1330 = vmatprep.subr.mxu0 0.0
  %1331 = vmatpush2.msra.mxu0 0.0
  %1332 = vmatprep.subr.mxu0 0.0
  %1333 = vmatpush2.msra.mxu0 0.0
  %1334 = vmatprep.subr.mxu0 0.0
  %1335 = vmatpush2.msra.mxu0 0.0
  %1336 = vmatprep.subr.mxu0 0.0
  %1337 = vmatpush2.msra.mxu0 0.0
  %1338 = vmatprep.subr.mxu0 0.0
  %1339 = vmatpush2.msra.mxu0 0.0
  %1340 = vmatprep.subr.mxu0 0.0
  %1341 = vmatpush2.msra.mxu0 0.0
  %1342 = vmatprep.subr.mxu0 0.0
  %1343 = vmatpush2.msra.mxu0 0.0
  %1344 = vmatprep.subr.mxu0 0.0
  %1345 = vmatpush2.msra.mxu0 0.0
  %1346 = vmatprep.subr.mxu0 0.0
  %1347 = vmatpush2.msra.mxu0 0.0
  %1348 = vmatprep.subr.mxu0 0.0
  %1349 = vmatpush2.msra.mxu0 0.0
  %1350 = vmatprep.subr.mxu0 0.0
  %1351 = vmatpush2.msra.mxu0 0.0
  %1352 = vmatprep.subr.mxu0 0.0
  %1353 = vmatpush2.msra.mxu0 0.0
  %1354 = vmatprep.subr.mxu0 0.0
  %1355 = vmatpush2.msra.mxu0 0.0
  %1356 = vmatprep.subr.mxu0 0.0
  %1357 = vmatpush2.msra.mxu0 0.0
  %1358 = vmatprep.subr.mxu0 0.0
  %1359 = vmatpush2.msra.mxu0 0.0
  %1360 = vmatprep.subr.mxu0 0.0
  %1361 = vmatpush2.msra.mxu0 0.0
  %1362 = vmatprep.mubr.f32.mxu0 0.0
  %1363 = vmatmul.mubr.f32.gmra.mxu0 %v1296
  %v1364 = vpop.f32.mrf.mxu0
  %v1365 = vadd.f32 0.0, %v1364
  %v1366 = vpop.f32.mrf.mxu0
  %v1367 = vadd.f32 0.0, %v1366
  %1368 = vdwg.mxu0
  %v1369 = vadd.f32 %v1294, %v1365
  %v1370 = vadd.f32 %v1295, %v1367
  %v1371 = vxor.u32 %v1369, 2147483648
  %v1372 = vxor.u32 %v1370, 2147483648
  %v1373 = vmul.f32 %v1371, 1.442695
  %v1374 = vpow.pop %v1373
  %v1375 = vmul.f32 %v1372, 1.442695
  %v1376 = vpow.pop %v1375
  %v1377 = vadd.f32 %v1374, 1.0
  %v1378 = vadd.f32 %v1376, 1.0
  %v1379 = vrcp.pop %v1377
  %v1380 = vmul.f32 1.0, %v1379
  %v1381 = vrcp.pop %v1378
  %v1382 = vmul.f32 1.0, %v1381
  %v1383 = vtanh.pop %v1370
  %v1384 = vmul.f32 %v1380, %v1279
  %1386 = vrot.lane.b32.xlu0 %v1383, 64
  %v1387 = vpop.permute.xlu0 %1386
  %v1389 = vmul.f32 %v1380, %v1387
  %1391 = vrot.lane.b32.xlu0 %v1389, 64
  %v1392 = vpop.permute.xlu0 %1391
  %v1394 = vadd.f32 %v1384, %v1392
  %v1395 = vtanh.pop %v1394
  %1397 = vrot.lane.b32.xlu0 %v1395, 64
  %v1398 = vpop.permute.xlu0 %1397
  %v1400 = vmul.f32 %v1382, %v1398
  %1401 = vst.msk [vmem:[#allocation3 + $0x38] sm:$0xff] %vm592, %v1400
  %1402 = vst.msk [vmem:[#allocation3] sm:$0xff] %vm594, %v1400
  %1404 = vrot.lane.b32.xlu0 %v1400, 64
  %v1405 = vpop.permute.xlu0 %1404
  %1407 = vst.msk [vmem:[#allocation3] sm:$0xff] %vm600, %v1405
  %1408 = vst.msk [vmem:[#allocation3 + $0x38] sm:$0xff] %vm602, %v1405
  %1409 = vst.msk [vmem:[%s12] sm:$0xff] %vm308, %v1400
  %1411 = vrot.lane.b32.xlu0 %v1394, 64
  %v1412 = vpop.permute.xlu0 %1411
  %1414 = vst.msk [vmem:[%s13] sm:$0xff] %vm308, %v1412
  %s1415 = smul.u32 8, 16
  %s1416 = smul.u32 %s1415, 2
  %s1417 = sshll.u32 %s1416, 4
  %1418 = dma.done [#allocation8], %s1417
  %s1419 = smul.u32 8, 8
  %s1420 = smul.u32 %s1419, 2
  %s1421 = sshll.u32 %s1420, 4
  %1422 = dma.done %s140, %s1421
  %v1423 = vld [vmem:[#allocation3] sm:$0xff]
  %v1424 = vld [vmem:[#allocation3 + $0x8] sm:$0xff]
  %v1425 = vld [vmem:[#allocation3 + $0x10] sm:$0xff]
  %v1426 = vld [vmem:[#allocation3 + $0x18] sm:$0xff]
  %v1427 = vld [vmem:[#allocation3 + $0x20] sm:$0xff]
  %v1428 = vld [vmem:[#allocation3 + $0x28] sm:$0xff]
  %v1429 = vld [vmem:[#allocation3 + $0x30] sm:$0xff]
  %v1430 = vld [vmem:[#allocation3 + $0x38] sm:$0xff]
  %v1431 = vld [vmem:[#allocation5] sm:$0xff]
  %v1432 = vld [vmem:[#allocation5 + $0x8] sm:$0xff]
  %v1433 = vld [vmem:[#allocation5 + $0x10] sm:$0xff]
  %v1434 = vld [vmem:[#allocation5 + $0x18] sm:$0xff]
  %v1435 = vld [vmem:[#allocation5 + $0x20] sm:$0xff]
  %v1436 = vld [vmem:[#allocation5 + $0x28] sm:$0xff]
  %v1437 = vld [vmem:[#allocation5 + $0x30] sm:$0xff]
  %v1438 = vld [vmem:[#allocation5 + $0x38] sm:$0xff]
  %v1439 = vld [vmem:[#allocation5 + $0x40] sm:$0xff]
  %v1440 = vld [vmem:[#allocation5 + $0x48] sm:$0xff]
  %v1441 = vld [vmem:[#allocation5 + $0x50] sm:$0xff]
  %v1442 = vld [vmem:[#allocation5 + $0x58] sm:$0xff]
  %v1443 = vld [vmem:[#allocation5 + $0x60] sm:$0xff]
  %v1444 = vld [vmem:[#allocation5 + $0x68] sm:$0xff]
  %v1445 = vld [vmem:[#allocation5 + $0x70] sm:$0xff]
  %v1446 = vld [vmem:[#allocation5 + $0x78] sm:$0xff]
  %v1447 = vld [vmem:[#allocation5 + $0x80] sm:$0xff]
  %v1448 = vld [vmem:[#allocation5 + $0x88] sm:$0xff]
  %v1449 = vld [vmem:[#allocation5 + $0x90] sm:$0xff]
  %v1450 = vld [vmem:[#allocation5 + $0x98] sm:$0xff]
  %v1451 = vld [vmem:[#allocation5 + $0xa0] sm:$0xff]
  %v1452 = vld [vmem:[#allocation5 + $0xa8] sm:$0xff]
  %v1453 = vld [vmem:[#allocation5 + $0xb0] sm:$0xff]
  %v1454 = vld [vmem:[#allocation5 + $0xb8] sm:$0xff]
  %v1455 = vld [vmem:[#allocation5 + $0xc0] sm:$0xff]
  %v1456 = vld [vmem:[#allocation5 + $0xc8] sm:$0xff]
  %v1457 = vld [vmem:[#allocation5 + $0xd0] sm:$0xff]
  %v1458 = vld [vmem:[#allocation5 + $0xd8] sm:$0xff]
  %v1459 = vld [vmem:[#allocation5 + $0xe0] sm:$0xff]
  %v1460 = vld [vmem:[#allocation5 + $0xe8] sm:$0xff]
  %v1461 = vld [vmem:[#allocation5 + $0xf0] sm:$0xff]
  %v1462 = vld [vmem:[#allocation5 + $0xf8] sm:$0xff]
  %v1463 = vld [vmem:[%s8] sm:$0x3]
  %v1465 = vlaneseq
  %v1466 = vshrl.u32 %v1465, 7
  %v1467 = vsub.s32 0, %v1466
  %v1468 = vrot.slane %v1463, %v1467
  %v1469 = vlaneseq
  %v1470 = vshrl.u32 %v1469, 7
  %v1471 = vsub.s32 1, %v1470
  %v1472 = vrot.slane %v1463, %v1471
  %1475 = vmatprep.subr.mxu0 %v1462
  %1476 = vmatpush1.msra.mxu0 %v1461
  %1477 = vmatprep.subr.mxu0 %v1460
  %1478 = vmatpush1.msra.mxu0 %v1459
  %1479 = vmatprep.subr.mxu0 %v1458
  %1480 = vmatpush1.msra.mxu0 %v1457
  %1481 = vmatprep.subr.mxu0 %v1456
  %1482 = vmatpush1.msra.mxu0 %v1455
  %1483 = vmatprep.subr.mxu0 %v1454
  %1484 = vmatpush1.msra.mxu0 %v1453
  %1485 = vmatprep.subr.mxu0 %v1452
  %1486 = vmatpush1.msra.mxu0 %v1451
  %1487 = vmatprep.subr.mxu0 %v1450
  %1488 = vmatpush1.msra.mxu0 %v1449
  %1489 = vmatprep.subr.mxu0 %v1448
  %1490 = vmatpush1.msra.mxu0 %v1447
  %1491 = vmatprep.subr.mxu0 %v1446
  %1492 = vmatpush1.msra.mxu0 %v1445
  %1493 = vmatprep.subr.mxu0 %v1444
  %1494 = vmatpush1.msra.mxu0 %v1443
  %1495 = vmatprep.subr.mxu0 %v1442
  %1496 = vmatpush1.msra.mxu0 %v1441
  %1497 = vmatprep.subr.mxu0 %v1440
  %1498 = vmatpush1.msra.mxu0 %v1439
  %1499 = vmatprep.subr.mxu0 %v1438
  %1500 = vmatpush1.msra.mxu0 %v1437
  %1501 = vmatprep.subr.mxu0 %v1436
  %1502 = vmatpush1.msra.mxu0 %v1435
  %1503 = vmatprep.subr.mxu0 %v1434
  %1504 = vmatpush1.msra.mxu0 %v1433
  %1505 = vmatprep.subr.mxu0 %v1432
  %1506 = vmatpush1.msra.mxu0 %v1431
  %1507 = vmatprep.subr.mxu0 0.0
  %1508 = vmatpush2.msra.mxu0 0.0
  %1509 = vmatprep.subr.mxu0 0.0
  %1510 = vmatpush2.msra.mxu0 0.0
  %1511 = vmatprep.subr.mxu0 0.0
  %1512 = vmatpush2.msra.mxu0 0.0
  %1513 = vmatprep.subr.mxu0 0.0
  %1514 = vmatpush2.msra.mxu0 0.0
  %1515 = vmatprep.subr.mxu0 0.0
  %1516 = vmatpush2.msra.mxu0 0.0
  %1517 = vmatprep.subr.mxu0 0.0
  %1518 = vmatpush2.msra.mxu0 0.0
  %1519 = vmatprep.subr.mxu0 0.0
  %1520 = vmatpush2.msra.mxu0 0.0
  %1521 = vmatprep.subr.mxu0 0.0
  %1522 = vmatpush2.msra.mxu0 0.0
  %1523 = vmatprep.subr.mxu0 0.0
  %1524 = vmatpush2.msra.mxu0 0.0
  %1525 = vmatprep.subr.mxu0 0.0
  %1526 = vmatpush2.msra.mxu0 0.0
  %1527 = vmatprep.subr.mxu0 0.0
  %1528 = vmatpush2.msra.mxu0 0.0
  %1529 = vmatprep.subr.mxu0 0.0
  %1530 = vmatpush2.msra.mxu0 0.0
  %1531 = vmatprep.subr.mxu0 0.0
  %1532 = vmatpush2.msra.mxu0 0.0
  %1533 = vmatprep.subr.mxu0 0.0
  %1534 = vmatpush2.msra.mxu0 0.0
  %1535 = vmatprep.subr.mxu0 0.0
  %1536 = vmatpush2.msra.mxu0 0.0
  %1537 = vmatprep.subr.mxu0 0.0
  %1538 = vmatpush2.msra.mxu0 0.0
  %1539 = vmatprep.mubr.f32.mxu0 0.0
  %1540 = vmatmul.mubr.f32.gmra.mxu0 %v1423
  %v1541 = vpop.f32.mrf.mxu0
  %v1542 = vadd.f32 %v1468, %v1541
  %v1543 = vpop.f32.mrf.mxu0
  %v1544 = vadd.f32 %v1472, %v1543
  %1545 = vmatprep.mubr.f32.mxu0 0.0
  %1546 = vmatmul.mubr.f32.gmra.mxu0 %v1424
  %v1547 = vpop.f32.mrf.mxu0
  %v1548 = vadd.f32 %v1468, %v1547
  %v1549 = vpop.f32.mrf.mxu0
  %v1550 = vadd.f32 %v1472, %v1549
  %1551 = vmatprep.mubr.f32.mxu0 0.0
  %1552 = vmatmul.mubr.f32.gmra.mxu0 %v1425
  %v1553 = vpop.f32.mrf.mxu0
  %v1554 = vadd.f32 %v1468, %v1553
  %v1555 = vpop.f32.mrf.mxu0
  %v1556 = vadd.f32 %v1472, %v1555
  %1557 = vmatprep.mubr.f32.mxu0 0.0
  %1558 = vmatmul.mubr.f32.gmra.mxu0 %v1426
  %v1559 = vpop.f32.mrf.mxu0
  %v1560 = vadd.f32 %v1468, %v1559
  %v1561 = vpop.f32.mrf.mxu0
  %v1562 = vadd.f32 %v1472, %v1561
  %1563 = vmatprep.mubr.f32.mxu0 0.0
  %1564 = vmatmul.mubr.f32.gmra.mxu0 %v1427
  %v1565 = vpop.f32.mrf.mxu0
  %v1566 = vadd.f32 %v1468, %v1565
  %v1567 = vpop.f32.mrf.mxu0
  %v1568 = vadd.f32 %v1472, %v1567
  %1569 = vmatprep.mubr.f32.mxu0 0.0
  %1570 = vmatmul.mubr.f32.gmra.mxu0 %v1428
  %v1571 = vpop.f32.mrf.mxu0
  %v1572 = vadd.f32 %v1468, %v1571
  %v1573 = vpop.f32.mrf.mxu0
  %v1574 = vadd.f32 %v1472, %v1573
  %1575 = vmatprep.mubr.f32.mxu0 0.0
  %1576 = vmatmul.mubr.f32.gmra.mxu0 %v1429
  %v1577 = vpop.f32.mrf.mxu0
  %v1578 = vadd.f32 %v1468, %v1577
  %v1579 = vpop.f32.mrf.mxu0
  %v1580 = vadd.f32 %v1472, %v1579
  %1581 = vmatprep.mubr.f32.mxu0 0.0
  %1582 = vmatmul.mubr.f32.gmra.mxu0 %v1430
  %v1583 = vpop.f32.mrf.mxu0
  %v1584 = vadd.f32 %v1468, %v1583
  %v1585 = vpop.f32.mrf.mxu0
  %v1586 = vadd.f32 %v1472, %v1585
  %1587 = vdwg.mxu0
  %1588 = vst [vmem:[#allocation2] sm:$0xff] %v1542
  %1589 = vst [vmem:[#allocation2 + $0x8] sm:$0xff] %v1544
  %1590 = vst [vmem:[#allocation2 + $0x10] sm:$0xff] %v1548
  %1591 = vst [vmem:[#allocation2 + $0x18] sm:$0xff] %v1550
  %1592 = vst [vmem:[#allocation2 + $0x20] sm:$0xff] %v1554
  %1593 = vst [vmem:[#allocation2 + $0x28] sm:$0xff] %v1556
  %1594 = vst [vmem:[#allocation2 + $0x30] sm:$0xff] %v1560
  %1595 = vst [vmem:[#allocation2 + $0x38] sm:$0xff] %v1562
  %1596 = vst [vmem:[#allocation2 + $0x40] sm:$0xff] %v1566
  %1597 = vst [vmem:[#allocation2 + $0x48] sm:$0xff] %v1568
  %1598 = vst [vmem:[#allocation2 + $0x50] sm:$0xff] %v1572
  %1599 = vst [vmem:[#allocation2 + $0x58] sm:$0xff] %v1574
  %1600 = vst [vmem:[#allocation2 + $0x60] sm:$0xff] %v1578
  %1601 = vst [vmem:[#allocation2 + $0x68] sm:$0xff] %v1580
  %1602 = vst [vmem:[#allocation2 + $0x70] sm:$0xff] %v1584
  %1603 = vst [vmem:[#allocation2 + $0x78] sm:$0xff] %v1586
  %v1604 = vld [vmem:[#allocation6] sm:$0xff]
  %v1605 = vld [vmem:[#allocation6 + $0x8] sm:$0xff]
  %v1606 = vld [vmem:[#allocation6 + $0x10] sm:$0xff]
  %v1607 = vld [vmem:[#allocation6 + $0x18] sm:$0xff]
  %v1608 = vld [vmem:[#allocation6 + $0x20] sm:$0xff]
  %v1609 = vld [vmem:[#allocation6 + $0x28] sm:$0xff]
  %v1610 = vld [vmem:[#allocation6 + $0x30] sm:$0xff]
  %v1611 = vld [vmem:[#allocation6 + $0x38] sm:$0xff]
  %v1612 = vld [vmem:[#allocation6 + $0x40] sm:$0xff]
  %v1613 = vld [vmem:[#allocation6 + $0x48] sm:$0xff]
  %v1614 = vld [vmem:[#allocation6 + $0x50] sm:$0xff]
  %v1615 = vld [vmem:[#allocation6 + $0x58] sm:$0xff]
  %v1616 = vld [vmem:[#allocation6 + $0x60] sm:$0xff]
  %v1617 = vld [vmem:[#allocation6 + $0x68] sm:$0xff]
  %v1618 = vld [vmem:[#allocation6 + $0x70] sm:$0xff]
  %v1619 = vld [vmem:[#allocation6 + $0x78] sm:$0xff]
  %s1620 = scalar_lea.vmem %s1, 8
  %v1621 = vld [vmem:[%s1620] sm:$0xff]
  %s1622 = scalar_lea.vmem %s2, 8
  %v1623 = vld [vmem:[%s1622] sm:$0xff]
  %v1624 = vld [vmem:[#allocation2] sm:$0xff]
  %v1625 = vld [vmem:[#allocation2 + $0x8] sm:$0xff]
  %v1627 = vsel %vm308, %v1621, 0
  %1629 = vmatprep.subr.mxu0 0.0
  %1630 = vmatpush1.msra.mxu0 0.0
  %1631 = vmatprep.subr.mxu0 0.0
  %1632 = vmatpush1.msra.mxu0 0.0
  %1633 = vmatprep.subr.mxu0 0.0
  %1634 = vmatpush1.msra.mxu0 0.0
  %1635 = vmatprep.subr.mxu0 0.0
  %1636 = vmatpush1.msra.mxu0 0.0
  %1637 = vmatprep.subr.mxu0 0.0
  %1638 = vmatpush1.msra.mxu0 0.0
  %1639 = vmatprep.subr.mxu0 0.0
  %1640 = vmatpush1.msra.mxu0 0.0
  %1641 = vmatprep.subr.mxu0 0.0
  %1642 = vmatpush1.msra.mxu0 0.0
  %1643 = vmatprep.subr.mxu0 0.0
  %1644 = vmatpush1.msra.mxu0 0.0
  %1645 = vmatprep.subr.mxu0 %v1619
  %1646 = vmatpush1.msra.mxu0 %v1618
  %1647 = vmatprep.subr.mxu0 %v1617
  %1648 = vmatpush1.msra.mxu0 %v1616
  %1649 = vmatprep.subr.mxu0 %v1615
  %1650 = vmatpush1.msra.mxu0 %v1614
  %1651 = vmatprep.subr.mxu0 %v1613
  %1652 = vmatpush1.msra.mxu0 %v1612
  %1653 = vmatprep.subr.mxu0 %v1611
  %1654 = vmatpush1.msra.mxu0 %v1610
  %1655 = vmatprep.subr.mxu0 %v1609
  %1656 = vmatpush1.msra.mxu0 %v1608
  %1657 = vmatprep.subr.mxu0 %v1607
  %1658 = vmatpush1.msra.mxu0 %v1606
  %1659 = vmatprep.subr.mxu0 %v1605
  %1660 = vmatpush1.msra.mxu0 %v1604
  %1661 = vmatprep.subr.mxu0 0.0
  %1662 = vmatpush2.msra.mxu0 0.0
  %1663 = vmatprep.subr.mxu0 0.0
  %1664 = vmatpush2.msra.mxu0 0.0
  %1665 = vmatprep.subr.mxu0 0.0
  %1666 = vmatpush2.msra.mxu0 0.0
  %1667 = vmatprep.subr.mxu0 0.0
  %1668 = vmatpush2.msra.mxu0 0.0
  %1669 = vmatprep.subr.mxu0 0.0
  %1670 = vmatpush2.msra.mxu0 0.0
  %1671 = vmatprep.subr.mxu0 0.0
  %1672 = vmatpush2.msra.mxu0 0.0
  %1673 = vmatprep.subr.mxu0 0.0
  %1674 = vmatpush2.msra.mxu0 0.0
  %1675 = vmatprep.subr.mxu0 0.0
  %1676 = vmatpush2.msra.mxu0 0.0
  %1677 = vmatprep.subr.mxu0 0.0
  %1678 = vmatpush2.msra.mxu0 0.0
  %1679 = vmatprep.subr.mxu0 0.0
  %1680 = vmatpush2.msra.mxu0 0.0
  %1681 = vmatprep.subr.mxu0 0.0
  %1682 = vmatpush2.msra.mxu0 0.0
  %1683 = vmatprep.subr.mxu0 0.0
  %1684 = vmatpush2.msra.mxu0 0.0
  %1685 = vmatprep.subr.mxu0 0.0
  %1686 = vmatpush2.msra.mxu0 0.0
  %1687 = vmatprep.subr.mxu0 0.0
  %1688 = vmatpush2.msra.mxu0 0.0
  %1689 = vmatprep.subr.mxu0 0.0
  %1690 = vmatpush2.msra.mxu0 0.0
  %1691 = vmatprep.subr.mxu0 0.0
  %1692 = vmatpush2.msra.mxu0 0.0
  %1693 = vmatprep.mubr.f32.mxu0 0.0
  %1694 = vmatmul.mubr.f32.gmra.mxu0 %v1627
  %v1695 = vpop.f32.mrf.mxu0
  %v1696 = vadd.f32 0.0, %v1695
  %v1697 = vpop.f32.mrf.mxu0
  %v1698 = vadd.f32 0.0, %v1697
  %1699 = vdwg.mxu0
  %v1700 = vadd.f32 %v1624, %v1696
  %v1701 = vadd.f32 %v1625, %v1698
  %v1702 = vxor.u32 %v1700, 2147483648
  %v1703 = vxor.u32 %v1701, 2147483648
  %v1704 = vmul.f32 %v1702, 1.442695
  %v1705 = vpow.pop %v1704
  %v1706 = vmul.f32 %v1703, 1.442695
  %v1707 = vpow.pop %v1706
  %v1708 = vadd.f32 %v1705, 1.0
  %v1709 = vadd.f32 %v1707, 1.0
  %v1710 = vrcp.pop %v1708
  %v1711 = vmul.f32 1.0, %v1710
  %v1712 = vrcp.pop %v1709
  %v1713 = vmul.f32 1.0, %v1712
  %v1714 = vtanh.pop %v1701
  %1716 = vrot.lane.b32.xlu0 %v1623, 64
  %v1717 = vpop.permute.xlu0 %1716
  %v1719 = vmul.f32 %v1711, %v1717
  %1721 = vrot.lane.b32.xlu0 %v1714, 64
  %v1722 = vpop.permute.xlu0 %1721
  %v1724 = vmul.f32 %v1711, %v1722
  %1726 = vrot.lane.b32.xlu0 %v1724, 64
  %v1727 = vpop.permute.xlu0 %1726
  %v1729 = vadd.f32 %v1719, %v1727
  %v1730 = vtanh.pop %v1729
  %1732 = vrot.lane.b32.xlu0 %v1730, 64
  %v1733 = vpop.permute.xlu0 %1732
  %v1735 = vmul.f32 %v1713, %v1733
  %1736 = vst.msk [vmem:[#allocation4] sm:$0xff] %vm592, %v1735
  %1737 = vst.msk [vmem:[#allocation4 + $0x38] sm:$0xff] %vm594, %v1735
  %v1738 = vld [vmem:[#allocation2 + $0x10] sm:$0xff]
  %v1739 = vld [vmem:[#allocation2 + $0x18] sm:$0xff]
  %v1741 = vsel %vm308, %v1735, 0
  %1743 = vmatprep.subr.mxu0 0.0
  %1744 = vmatpush1.msra.mxu0 0.0
  %1745 = vmatprep.subr.mxu0 0.0
  %1746 = vmatpush1.msra.mxu0 0.0
  %1747 = vmatprep.subr.mxu0 0.0
  %1748 = vmatpush1.msra.mxu0 0.0
  %1749 = vmatprep.subr.mxu0 0.0
  %1750 = vmatpush1.msra.mxu0 0.0
  %1751 = vmatprep.subr.mxu0 0.0
  %1752 = vmatpush1.msra.mxu0 0.0
  %1753 = vmatprep.subr.mxu0 0.0
  %1754 = vmatpush1.msra.mxu0 0.0
  %1755 = vmatprep.subr.mxu0 0.0
  %1756 = vmatpush1.msra.mxu0 0.0
  %1757 = vmatprep.subr.mxu0 0.0
  %1758 = vmatpush1.msra.mxu0 0.0
  %1759 = vmatprep.subr.mxu0 %v1619
  %1760 = vmatpush1.msra.mxu0 %v1618
  %1761 = vmatprep.subr.mxu0 %v1617
  %1762 = vmatpush1.msra.mxu0 %v1616
  %1763 = vmatprep.subr.mxu0 %v1615
  %1764 = vmatpush1.msra.mxu0 %v1614
  %1765 = vmatprep.subr.mxu0 %v1613
  %1766 = vmatpush1.msra.mxu0 %v1612
  %1767 = vmatprep.subr.mxu0 %v1611
  %1768 = vmatpush1.msra.mxu0 %v1610
  %1769 = vmatprep.subr.mxu0 %v1609
  %1770 = vmatpush1.msra.mxu0 %v1608
  %1771 = vmatprep.subr.mxu0 %v1607
  %1772 = vmatpush1.msra.mxu0 %v1606
  %1773 = vmatprep.subr.mxu0 %v1605
  %1774 = vmatpush1.msra.mxu0 %v1604
  %1775 = vmatprep.subr.mxu0 0.0
  %1776 = vmatpush2.msra.mxu0 0.0
  %1777 = vmatprep.subr.mxu0 0.0
  %1778 = vmatpush2.msra.mxu0 0.0
  %1779 = vmatprep.subr.mxu0 0.0
  %1780 = vmatpush2.msra.mxu0 0.0
  %1781 = vmatprep.subr.mxu0 0.0
  %1782 = vmatpush2.msra.mxu0 0.0
  %1783 = vmatprep.subr.mxu0 0.0
  %1784 = vmatpush2.msra.mxu0 0.0
  %1785 = vmatprep.subr.mxu0 0.0
  %1786 = vmatpush2.msra.mxu0 0.0
  %1787 = vmatprep.subr.mxu0 0.0
  %1788 = vmatpush2.msra.mxu0 0.0
  %1789 = vmatprep.subr.mxu0 0.0
  %1790 = vmatpush2.msra.mxu0 0.0
  %1791 = vmatprep.subr.mxu0 0.0
  %1792 = vmatpush2.msra.mxu0 0.0
  %1793 = vmatprep.subr.mxu0 0.0
  %1794 = vmatpush2.msra.mxu0 0.0
  %1795 = vmatprep.subr.mxu0 0.0
  %1796 = vmatpush2.msra.mxu0 0.0
  %1797 = vmatprep.subr.mxu0 0.0
  %1798 = vmatpush2.msra.mxu0 0.0
  %1799 = vmatprep.subr.mxu0 0.0
  %1800 = vmatpush2.msra.mxu0 0.0
  %1801 = vmatprep.subr.mxu0 0.0
  %1802 = vmatpush2.msra.mxu0 0.0
  %1803 = vmatprep.subr.mxu0 0.0
  %1804 = vmatpush2.msra.mxu0 0.0
  %1805 = vmatprep.subr.mxu0 0.0
  %1806 = vmatpush2.msra.mxu0 0.0
  %1807 = vmatprep.mubr.f32.mxu0 0.0
  %1808 = vmatmul.mubr.f32.gmra.mxu0 %v1741
  %v1809 = vpop.f32.mrf.mxu0
  %v1810 = vadd.f32 0.0, %v1809
  %v1811 = vpop.f32.mrf.mxu0
  %v1812 = vadd.f32 0.0, %v1811
  %1813 = vdwg.mxu0
  %v1814 = vadd.f32 %v1738, %v1810
  %v1815 = vadd.f32 %v1739, %v1812
  %v1816 = vxor.u32 %v1814, 2147483648
  %v1817 = vxor.u32 %v1815, 2147483648
  %v1818 = vmul.f32 %v1816, 1.442695
  %v1819 = vpow.pop %v1818
  %v1820 = vmul.f32 %v1817, 1.442695
  %v1821 = vpow.pop %v1820
  %v1822 = vadd.f32 %v1819, 1.0
  %v1823 = vadd.f32 %v1821, 1.0
  %v1824 = vrcp.pop %v1822
  %v1825 = vmul.f32 1.0, %v1824
  %v1826 = vrcp.pop %v1823
  %v1827 = vmul.f32 1.0, %v1826
  %v1828 = vtanh.pop %v1815
  %v1829 = vmul.f32 %v1825, %v1729
  %1831 = vrot.lane.b32.xlu0 %v1828, 64
  %v1832 = vpop.permute.xlu0 %1831
  %v1834 = vmul.f32 %v1825, %v1832
  %1836 = vrot.lane.b32.xlu0 %v1834, 64
  %v1837 = vpop.permute.xlu0 %1836
  %v1839 = vadd.f32 %v1829, %v1837
  %v1840 = vtanh.pop %v1839
  %1842 = vrot.lane.b32.xlu0 %v1840, 64
  %v1843 = vpop.permute.xlu0 %1842
  %v1845 = vmul.f32 %v1827, %v1843
  %1846 = vst.msk [vmem:[#allocation4 + $0x8] sm:$0xff] %vm592, %v1845
  %1847 = vst.msk [vmem:[#allocation4 + $0x30] sm:$0xff] %vm594, %v1845
  %v1848 = vld [vmem:[#allocation2 + $0x20] sm:$0xff]
  %v1849 = vld [vmem:[#allocation2 + $0x28] sm:$0xff]
  %v1851 = vsel %vm308, %v1845, 0
  %1853 = vmatprep.subr.mxu0 0.0
  %1854 = vmatpush1.msra.mxu0 0.0
  %1855 = vmatprep.subr.mxu0 0.0
  %1856 = vmatpush1.msra.mxu0 0.0
  %1857 = vmatprep.subr.mxu0 0.0
  %1858 = vmatpush1.msra.mxu0 0.0
  %1859 = vmatprep.subr.mxu0 0.0
  %1860 = vmatpush1.msra.mxu0 0.0
  %1861 = vmatprep.subr.mxu0 0.0
  %1862 = vmatpush1.msra.mxu0 0.0
  %1863 = vmatprep.subr.mxu0 0.0
  %1864 = vmatpush1.msra.mxu0 0.0
  %1865 = vmatprep.subr.mxu0 0.0
  %1866 = vmatpush1.msra.mxu0 0.0
  %1867 = vmatprep.subr.mxu0 0.0
  %1868 = vmatpush1.msra.mxu0 0.0
  %1869 = vmatprep.subr.mxu0 %v1619
  %1870 = vmatpush1.msra.mxu0 %v1618
  %1871 = vmatprep.subr.mxu0 %v1617
  %1872 = vmatpush1.msra.mxu0 %v1616
  %1873 = vmatprep.subr.mxu0 %v1615
  %1874 = vmatpush1.msra.mxu0 %v1614
  %1875 = vmatprep.subr.mxu0 %v1613
  %1876 = vmatpush1.msra.mxu0 %v1612
  %1877 = vmatprep.subr.mxu0 %v1611
  %1878 = vmatpush1.msra.mxu0 %v1610
  %1879 = vmatprep.subr.mxu0 %v1609
  %1880 = vmatpush1.msra.mxu0 %v1608
  %1881 = vmatprep.subr.mxu0 %v1607
  %1882 = vmatpush1.msra.mxu0 %v1606
  %1883 = vmatprep.subr.mxu0 %v1605
  %1884 = vmatpush1.msra.mxu0 %v1604
  %1885 = vmatprep.subr.mxu0 0.0
  %1886 = vmatpush2.msra.mxu0 0.0
  %1887 = vmatprep.subr.mxu0 0.0
  %1888 = vmatpush2.msra.mxu0 0.0
  %1889 = vmatprep.subr.mxu0 0.0
  %1890 = vmatpush2.msra.mxu0 0.0
  %1891 = vmatprep.subr.mxu0 0.0
  %1892 = vmatpush2.msra.mxu0 0.0
  %1893 = vmatprep.subr.mxu0 0.0
  %1894 = vmatpush2.msra.mxu0 0.0
  %1895 = vmatprep.subr.mxu0 0.0
  %1896 = vmatpush2.msra.mxu0 0.0
  %1897 = vmatprep.subr.mxu0 0.0
  %1898 = vmatpush2.msra.mxu0 0.0
  %1899 = vmatprep.subr.mxu0 0.0
  %1900 = vmatpush2.msra.mxu0 0.0
  %1901 = vmatprep.subr.mxu0 0.0
  %1902 = vmatpush2.msra.mxu0 0.0
  %1903 = vmatprep.subr.mxu0 0.0
  %1904 = vmatpush2.msra.mxu0 0.0
  %1905 = vmatprep.subr.mxu0 0.0
  %1906 = vmatpush2.msra.mxu0 0.0
  %1907 = vmatprep.subr.mxu0 0.0
  %1908 = vmatpush2.msra.mxu0 0.0
  %1909 = vmatprep.subr.mxu0 0.0
  %1910 = vmatpush2.msra.mxu0 0.0
  %1911 = vmatprep.subr.mxu0 0.0
  %1912 = vmatpush2.msra.mxu0 0.0
  %1913 = vmatprep.subr.mxu0 0.0
  %1914 = vmatpush2.msra.mxu0 0.0
  %1915 = vmatprep.subr.mxu0 0.0
  %1916 = vmatpush2.msra.mxu0 0.0
  %1917 = vmatprep.mubr.f32.mxu0 0.0
  %1918 = vmatmul.mubr.f32.gmra.mxu0 %v1851
  %v1919 = vpop.f32.mrf.mxu0
  %v1920 = vadd.f32 0.0, %v1919
  %v1921 = vpop.f32.mrf.mxu0
  %v1922 = vadd.f32 0.0, %v1921
  %1923 = vdwg.mxu0
  %v1924 = vadd.f32 %v1848, %v1920
  %v1925 = vadd.f32 %v1849, %v1922
  %v1926 = vxor.u32 %v1924, 2147483648
  %v1927 = vxor.u32 %v1925, 2147483648
  %v1928 = vmul.f32 %v1926, 1.442695
  %v1929 = vpow.pop %v1928
  %v1930 = vmul.f32 %v1927, 1.442695
  %v1931 = vpow.pop %v1930
  %v1932 = vadd.f32 %v1929, 1.0
  %v1933 = vadd.f32 %v1931, 1.0
  %v1934 = vrcp.pop %v1932
  %v1935 = vmul.f32 1.0, %v1934
  %v1936 = vrcp.pop %v1933
  %v1937 = vmul.f32 1.0, %v1936
  %v1938 = vtanh.pop %v1925
  %v1939 = vmul.f32 %v1935, %v1839
  %1941 = vrot.lane.b32.xlu0 %v1938, 64
  %v1942 = vpop.permute.xlu0 %1941
  %v1944 = vmul.f32 %v1935, %v1942
  %1946 = vrot.lane.b32.xlu0 %v1944, 64
  %v1947 = vpop.permute.xlu0 %1946
  %v1949 = vadd.f32 %v1939, %v1947
  %v1950 = vtanh.pop %v1949
  %1952 = vrot.lane.b32.xlu0 %v1950, 64
  %v1953 = vpop.permute.xlu0 %1952
  %v1955 = vmul.f32 %v1937, %v1953
  %1956 = vst.msk [vmem:[#allocation4 + $0x10] sm:$0xff] %vm592, %v1955
  %1957 = vst.msk [vmem:[#allocation4 + $0x28] sm:$0xff] %vm594, %v1955
  %v1958 = vld [vmem:[#allocation2 + $0x30] sm:$0xff]
  %v1959 = vld [vmem:[#allocation2 + $0x38] sm:$0xff]
  %v1961 = vsel %vm308, %v1955, 0
  %1963 = vmatprep.subr.mxu0 0.0
  %1964 = vmatpush1.msra.mxu0 0.0
  %1965 = vmatprep.subr.mxu0 0.0
  %1966 = vmatpush1.msra.mxu0 0.0
  %1967 = vmatprep.subr.mxu0 0.0
  %1968 = vmatpush1.msra.mxu0 0.0
  %1969 = vmatprep.subr.mxu0 0.0
  %1970 = vmatpush1.msra.mxu0 0.0
  %1971 = vmatprep.subr.mxu0 0.0
  %1972 = vmatpush1.msra.mxu0 0.0
  %1973 = vmatprep.subr.mxu0 0.0
  %1974 = vmatpush1.msra.mxu0 0.0
  %1975 = vmatprep.subr.mxu0 0.0
  %1976 = vmatpush1.msra.mxu0 0.0
  %1977 = vmatprep.subr.mxu0 0.0
  %1978 = vmatpush1.msra.mxu0 0.0
  %1979 = vmatprep.subr.mxu0 %v1619
  %1980 = vmatpush1.msra.mxu0 %v1618
  %1981 = vmatprep.subr.mxu0 %v1617
  %1982 = vmatpush1.msra.mxu0 %v1616
  %1983 = vmatprep.subr.mxu0 %v1615
  %1984 = vmatpush1.msra.mxu0 %v1614
  %1985 = vmatprep.subr.mxu0 %v1613
  %1986 = vmatpush1.msra.mxu0 %v1612
  %1987 = vmatprep.subr.mxu0 %v1611
  %1988 = vmatpush1.msra.mxu0 %v1610
  %1989 = vmatprep.subr.mxu0 %v1609
  %1990 = vmatpush1.msra.mxu0 %v1608
  %1991 = vmatprep.subr.mxu0 %v1607
  %1992 = vmatpush1.msra.mxu0 %v1606
  %1993 = vmatprep.subr.mxu0 %v1605
  %1994 = vmatpush1.msra.mxu0 %v1604
  %1995 = vmatprep.subr.mxu0 0.0
  %1996 = vmatpush2.msra.mxu0 0.0
  %1997 = vmatprep.subr.mxu0 0.0
  %1998 = vmatpush2.msra.mxu0 0.0
  %1999 = vmatprep.subr.mxu0 0.0
  %2000 = vmatpush2.msra.mxu0 0.0
  %2001 = vmatprep.subr.mxu0 0.0
  %2002 = vmatpush2.msra.mxu0 0.0
  %2003 = vmatprep.subr.mxu0 0.0
  %2004 = vmatpush2.msra.mxu0 0.0
  %2005 = vmatprep.subr.mxu0 0.0
  %2006 = vmatpush2.msra.mxu0 0.0
  %2007 = vmatprep.subr.mxu0 0.0
  %2008 = vmatpush2.msra.mxu0 0.0
  %2009 = vmatprep.subr.mxu0 0.0
  %2010 = vmatpush2.msra.mxu0 0.0
  %2011 = vmatprep.subr.mxu0 0.0
  %2012 = vmatpush2.msra.mxu0 0.0
  %2013 = vmatprep.subr.mxu0 0.0
  %2014 = vmatpush2.msra.mxu0 0.0
  %2015 = vmatprep.subr.mxu0 0.0
  %2016 = vmatpush2.msra.mxu0 0.0
  %2017 = vmatprep.subr.mxu0 0.0
  %2018 = vmatpush2.msra.mxu0 0.0
  %2019 = vmatprep.subr.mxu0 0.0
  %2020 = vmatpush2.msra.mxu0 0.0
  %2021 = vmatprep.subr.mxu0 0.0
  %2022 = vmatpush2.msra.mxu0 0.0
  %2023 = vmatprep.subr.mxu0 0.0
  %2024 = vmatpush2.msra.mxu0 0.0
  %2025 = vmatprep.subr.mxu0 0.0
  %2026 = vmatpush2.msra.mxu0 0.0
  %2027 = vmatprep.mubr.f32.mxu0 0.0
  %2028 = vmatmul.mubr.f32.gmra.mxu0 %v1961
  %v2029 = vpop.f32.mrf.mxu0
  %v2030 = vadd.f32 0.0, %v2029
  %v2031 = vpop.f32.mrf.mxu0
  %v2032 = vadd.f32 0.0, %v2031
  %2033 = vdwg.mxu0
  %v2034 = vadd.f32 %v1958, %v2030
  %v2035 = vadd.f32 %v1959, %v2032
  %v2036 = vxor.u32 %v2034, 2147483648
  %v2037 = vxor.u32 %v2035, 2147483648
  %v2038 = vmul.f32 %v2036, 1.442695
  %v2039 = vpow.pop %v2038
  %v2040 = vmul.f32 %v2037, 1.442695
  %v2041 = vpow.pop %v2040
  %v2042 = vadd.f32 %v2039, 1.0
  %v2043 = vadd.f32 %v2041, 1.0
  %v2044 = vrcp.pop %v2042
  %v2045 = vmul.f32 1.0, %v2044
  %v2046 = vrcp.pop %v2043
  %v2047 = vmul.f32 1.0, %v2046
  %v2048 = vtanh.pop %v2035
  %v2049 = vmul.f32 %v2045, %v1949
  %2051 = vrot.lane.b32.xlu0 %v2048, 64
  %v2052 = vpop.permute.xlu0 %2051
  %v2054 = vmul.f32 %v2045, %v2052
  %2056 = vrot.lane.b32.xlu0 %v2054, 64
  %v2057 = vpop.permute.xlu0 %2056
  %v2059 = vadd.f32 %v2049, %v2057
  %v2060 = vtanh.pop %v2059
  %2062 = vrot.lane.b32.xlu0 %v2060, 64
  %v2063 = vpop.permute.xlu0 %2062
  %v2065 = vmul.f32 %v2047, %v2063
  %2066 = vst.msk [vmem:[#allocation4 + $0x18] sm:$0xff] %vm592, %v2065
  %2067 = vst.msk [vmem:[#allocation4 + $0x20] sm:$0xff] %vm594, %v2065
  %v2068 = vld [vmem:[#allocation2 + $0x40] sm:$0xff]
  %v2069 = vld [vmem:[#allocation2 + $0x48] sm:$0xff]
  %v2071 = vsel %vm308, %v2065, 0
  %2073 = vmatprep.subr.mxu0 0.0
  %2074 = vmatpush1.msra.mxu0 0.0
  %2075 = vmatprep.subr.mxu0 0.0
  %2076 = vmatpush1.msra.mxu0 0.0
  %2077 = vmatprep.subr.mxu0 0.0
  %2078 = vmatpush1.msra.mxu0 0.0
  %2079 = vmatprep.subr.mxu0 0.0
  %2080 = vmatpush1.msra.mxu0 0.0
  %2081 = vmatprep.subr.mxu0 0.0
  %2082 = vmatpush1.msra.mxu0 0.0
  %2083 = vmatprep.subr.mxu0 0.0
  %2084 = vmatpush1.msra.mxu0 0.0
  %2085 = vmatprep.subr.mxu0 0.0
  %2086 = vmatpush1.msra.mxu0 0.0
  %2087 = vmatprep.subr.mxu0 0.0
  %2088 = vmatpush1.msra.mxu0 0.0
  %2089 = vmatprep.subr.mxu0 %v1619
  %2090 = vmatpush1.msra.mxu0 %v1618
  %2091 = vmatprep.subr.mxu0 %v1617
  %2092 = vmatpush1.msra.mxu0 %v1616
  %2093 = vmatprep.subr.mxu0 %v1615
  %2094 = vmatpush1.msra.mxu0 %v1614
  %2095 = vmatprep.subr.mxu0 %v1613
  %2096 = vmatpush1.msra.mxu0 %v1612
  %2097 = vmatprep.subr.mxu0 %v1611
  %2098 = vmatpush1.msra.mxu0 %v1610
  %2099 = vmatprep.subr.mxu0 %v1609
  %2100 = vmatpush1.msra.mxu0 %v1608
  %2101 = vmatprep.subr.mxu0 %v1607
  %2102 = vmatpush1.msra.mxu0 %v1606
  %2103 = vmatprep.subr.mxu0 %v1605
  %2104 = vmatpush1.msra.mxu0 %v1604
  %2105 = vmatprep.subr.mxu0 0.0
  %2106 = vmatpush2.msra.mxu0 0.0
  %2107 = vmatprep.subr.mxu0 0.0
  %2108 = vmatpush2.msra.mxu0 0.0
  %2109 = vmatprep.subr.mxu0 0.0
  %2110 = vmatpush2.msra.mxu0 0.0
  %2111 = vmatprep.subr.mxu0 0.0
  %2112 = vmatpush2.msra.mxu0 0.0
  %2113 = vmatprep.subr.mxu0 0.0
  %2114 = vmatpush2.msra.mxu0 0.0
  %2115 = vmatprep.subr.mxu0 0.0
  %2116 = vmatpush2.msra.mxu0 0.0
  %2117 = vmatprep.subr.mxu0 0.0
  %2118 = vmatpush2.msra.mxu0 0.0
  %2119 = vmatprep.subr.mxu0 0.0
  %2120 = vmatpush2.msra.mxu0 0.0
  %2121 = vmatprep.subr.mxu0 0.0
  %2122 = vmatpush2.msra.mxu0 0.0
  %2123 = vmatprep.subr.mxu0 0.0
  %2124 = vmatpush2.msra.mxu0 0.0
  %2125 = vmatprep.subr.mxu0 0.0
  %2126 = vmatpush2.msra.mxu0 0.0
  %2127 = vmatprep.subr.mxu0 0.0
  %2128 = vmatpush2.msra.mxu0 0.0
  %2129 = vmatprep.subr.mxu0 0.0
  %2130 = vmatpush2.msra.mxu0 0.0
  %2131 = vmatprep.subr.mxu0 0.0
  %2132 = vmatpush2.msra.mxu0 0.0
  %2133 = vmatprep.subr.mxu0 0.0
  %2134 = vmatpush2.msra.mxu0 0.0
  %2135 = vmatprep.subr.mxu0 0.0
  %2136 = vmatpush2.msra.mxu0 0.0
  %2137 = vmatprep.mubr.f32.mxu0 0.0
  %2138 = vmatmul.mubr.f32.gmra.mxu0 %v2071
  %v2139 = vpop.f32.mrf.mxu0
  %v2140 = vadd.f32 0.0, %v2139
  %v2141 = vpop.f32.mrf.mxu0
  %v2142 = vadd.f32 0.0, %v2141
  %2143 = vdwg.mxu0
  %v2144 = vadd.f32 %v2068, %v2140
  %v2145 = vadd.f32 %v2069, %v2142
  %v2146 = vxor.u32 %v2144, 2147483648
  %v2147 = vxor.u32 %v2145, 2147483648
  %v2148 = vmul.f32 %v2146, 1.442695
  %v2149 = vpow.pop %v2148
  %v2150 = vmul.f32 %v2147, 1.442695
  %v2151 = vpow.pop %v2150
  %v2152 = vadd.f32 %v2149, 1.0
  %v2153 = vadd.f32 %v2151, 1.0
  %v2154 = vrcp.pop %v2152
  %v2155 = vmul.f32 1.0, %v2154
  %v2156 = vrcp.pop %v2153
  %v2157 = vmul.f32 1.0, %v2156
  %v2158 = vtanh.pop %v2145
  %v2159 = vmul.f32 %v2155, %v2059
  %2161 = vrot.lane.b32.xlu0 %v2158, 64
  %v2162 = vpop.permute.xlu0 %2161
  %v2164 = vmul.f32 %v2155, %v2162
  %2166 = vrot.lane.b32.xlu0 %v2164, 64
  %v2167 = vpop.permute.xlu0 %2166
  %v2169 = vadd.f32 %v2159, %v2167
  %v2170 = vtanh.pop %v2169
  %2172 = vrot.lane.b32.xlu0 %v2170, 64
  %v2173 = vpop.permute.xlu0 %2172
  %v2175 = vmul.f32 %v2157, %v2173
  %2176 = vst.msk [vmem:[#allocation4 + $0x20] sm:$0xff] %vm592, %v2175
  %2177 = vst.msk [vmem:[#allocation4 + $0x18] sm:$0xff] %vm594, %v2175
  %v2178 = vld [vmem:[#allocation2 + $0x50] sm:$0xff]
  %v2179 = vld [vmem:[#allocation2 + $0x58] sm:$0xff]
  %v2181 = vsel %vm308, %v2175, 0
  %2183 = vmatprep.subr.mxu0 0.0
  %2184 = vmatpush1.msra.mxu0 0.0
  %2185 = vmatprep.subr.mxu0 0.0
  %2186 = vmatpush1.msra.mxu0 0.0
  %2187 = vmatprep.subr.mxu0 0.0
  %2188 = vmatpush1.msra.mxu0 0.0
  %2189 = vmatprep.subr.mxu0 0.0
  %2190 = vmatpush1.msra.mxu0 0.0
  %2191 = vmatprep.subr.mxu0 0.0
  %2192 = vmatpush1.msra.mxu0 0.0
  %2193 = vmatprep.subr.mxu0 0.0
  %2194 = vmatpush1.msra.mxu0 0.0
  %2195 = vmatprep.subr.mxu0 0.0
  %2196 = vmatpush1.msra.mxu0 0.0
  %2197 = vmatprep.subr.mxu0 0.0
  %2198 = vmatpush1.msra.mxu0 0.0
  %2199 = vmatprep.subr.mxu0 %v1619
  %2200 = vmatpush1.msra.mxu0 %v1618
  %2201 = vmatprep.subr.mxu0 %v1617
  %2202 = vmatpush1.msra.mxu0 %v1616
  %2203 = vmatprep.subr.mxu0 %v1615
  %2204 = vmatpush1.msra.mxu0 %v1614
  %2205 = vmatprep.subr.mxu0 %v1613
  %2206 = vmatpush1.msra.mxu0 %v1612
  %2207 = vmatprep.subr.mxu0 %v1611
  %2208 = vmatpush1.msra.mxu0 %v1610
  %2209 = vmatprep.subr.mxu0 %v1609
  %2210 = vmatpush1.msra.mxu0 %v1608
  %2211 = vmatprep.subr.mxu0 %v1607
  %2212 = vmatpush1.msra.mxu0 %v1606
  %2213 = vmatprep.subr.mxu0 %v1605
  %2214 = vmatpush1.msra.mxu0 %v1604
  %2215 = vmatprep.subr.mxu0 0.0
  %2216 = vmatpush2.msra.mxu0 0.0
  %2217 = vmatprep.subr.mxu0 0.0
  %2218 = vmatpush2.msra.mxu0 0.0
  %2219 = vmatprep.subr.mxu0 0.0
  %2220 = vmatpush2.msra.mxu0 0.0
  %2221 = vmatprep.subr.mxu0 0.0
  %2222 = vmatpush2.msra.mxu0 0.0
  %2223 = vmatprep.subr.mxu0 0.0
  %2224 = vmatpush2.msra.mxu0 0.0
  %2225 = vmatprep.subr.mxu0 0.0
  %2226 = vmatpush2.msra.mxu0 0.0
  %2227 = vmatprep.subr.mxu0 0.0
  %2228 = vmatpush2.msra.mxu0 0.0
  %2229 = vmatprep.subr.mxu0 0.0
  %2230 = vmatpush2.msra.mxu0 0.0
  %2231 = vmatprep.subr.mxu0 0.0
  %2232 = vmatpush2.msra.mxu0 0.0
  %2233 = vmatprep.subr.mxu0 0.0
  %2234 = vmatpush2.msra.mxu0 0.0
  %2235 = vmatprep.subr.mxu0 0.0
  %2236 = vmatpush2.msra.mxu0 0.0
  %2237 = vmatprep.subr.mxu0 0.0
  %2238 = vmatpush2.msra.mxu0 0.0
  %2239 = vmatprep.subr.mxu0 0.0
  %2240 = vmatpush2.msra.mxu0 0.0
  %2241 = vmatprep.subr.mxu0 0.0
  %2242 = vmatpush2.msra.mxu0 0.0
  %2243 = vmatprep.subr.mxu0 0.0
  %2244 = vmatpush2.msra.mxu0 0.0
  %2245 = vmatprep.subr.mxu0 0.0
  %2246 = vmatpush2.msra.mxu0 0.0
  %2247 = vmatprep.mubr.f32.mxu0 0.0
  %2248 = vmatmul.mubr.f32.gmra.mxu0 %v2181
  %v2249 = vpop.f32.mrf.mxu0
  %v2250 = vadd.f32 0.0, %v2249
  %v2251 = vpop.f32.mrf.mxu0
  %v2252 = vadd.f32 0.0, %v2251
  %2253 = vdwg.mxu0
  %v2254 = vadd.f32 %v2178, %v2250
  %v2255 = vadd.f32 %v2179, %v2252
  %v2256 = vxor.u32 %v2254, 2147483648
  %v2257 = vxor.u32 %v2255, 2147483648
  %v2258 = vmul.f32 %v2256, 1.442695
  %v2259 = vpow.pop %v2258
  %v2260 = vmul.f32 %v2257, 1.442695
  %v2261 = vpow.pop %v2260
  %v2262 = vadd.f32 %v2259, 1.0
  %v2263 = vadd.f32 %v2261, 1.0
  %v2264 = vrcp.pop %v2262
  %v2265 = vmul.f32 1.0, %v2264
  %v2266 = vrcp.pop %v2263
  %v2267 = vmul.f32 1.0, %v2266
  %v2268 = vtanh.pop %v2255
  %v2269 = vmul.f32 %v2265, %v2169
  %2271 = vrot.lane.b32.xlu0 %v2268, 64
  %v2272 = vpop.permute.xlu0 %2271
  %v2274 = vmul.f32 %v2265, %v2272
  %2276 = vrot.lane.b32.xlu0 %v2274, 64
  %v2277 = vpop.permute.xlu0 %2276
  %v2279 = vadd.f32 %v2269, %v2277
  %v2280 = vtanh.pop %v2279
  %2282 = vrot.lane.b32.xlu0 %v2280, 64
  %v2283 = vpop.permute.xlu0 %2282
  %v2285 = vmul.f32 %v2267, %v2283
  %2286 = vst.msk [vmem:[#allocation4 + $0x28] sm:$0xff] %vm592, %v2285
  %2287 = vst.msk [vmem:[#allocation4 + $0x10] sm:$0xff] %vm594, %v2285
  %v2288 = vld [vmem:[#allocation2 + $0x60] sm:$0xff]
  %v2289 = vld [vmem:[#allocation2 + $0x68] sm:$0xff]
  %v2291 = vsel %vm308, %v2285, 0
  %2293 = vmatprep.subr.mxu0 0.0
  %2294 = vmatpush1.msra.mxu0 0.0
  %2295 = vmatprep.subr.mxu0 0.0
  %2296 = vmatpush1.msra.mxu0 0.0
  %2297 = vmatprep.subr.mxu0 0.0
  %2298 = vmatpush1.msra.mxu0 0.0
  %2299 = vmatprep.subr.mxu0 0.0
  %2300 = vmatpush1.msra.mxu0 0.0
  %2301 = vmatprep.subr.mxu0 0.0
  %2302 = vmatpush1.msra.mxu0 0.0
  %2303 = vmatprep.subr.mxu0 0.0
  %2304 = vmatpush1.msra.mxu0 0.0
  %2305 = vmatprep.subr.mxu0 0.0
  %2306 = vmatpush1.msra.mxu0 0.0
  %2307 = vmatprep.subr.mxu0 0.0
  %2308 = vmatpush1.msra.mxu0 0.0
  %2309 = vmatprep.subr.mxu0 %v1619
  %2310 = vmatpush1.msra.mxu0 %v1618
  %2311 = vmatprep.subr.mxu0 %v1617
  %2312 = vmatpush1.msra.mxu0 %v1616
  %2313 = vmatprep.subr.mxu0 %v1615
  %2314 = vmatpush1.msra.mxu0 %v1614
  %2315 = vmatprep.subr.mxu0 %v1613
  %2316 = vmatpush1.msra.mxu0 %v1612
  %2317 = vmatprep.subr.mxu0 %v1611
  %2318 = vmatpush1.msra.mxu0 %v1610
  %2319 = vmatprep.subr.mxu0 %v1609
  %2320 = vmatpush1.msra.mxu0 %v1608
  %2321 = vmatprep.subr.mxu0 %v1607
  %2322 = vmatpush1.msra.mxu0 %v1606
  %2323 = vmatprep.subr.mxu0 %v1605
  %2324 = vmatpush1.msra.mxu0 %v1604
  %2325 = vmatprep.subr.mxu0 0.0
  %2326 = vmatpush2.msra.mxu0 0.0
  %2327 = vmatprep.subr.mxu0 0.0
  %2328 = vmatpush2.msra.mxu0 0.0
  %2329 = vmatprep.subr.mxu0 0.0
  %2330 = vmatpush2.msra.mxu0 0.0
  %2331 = vmatprep.subr.mxu0 0.0
  %2332 = vmatpush2.msra.mxu0 0.0
  %2333 = vmatprep.subr.mxu0 0.0
  %2334 = vmatpush2.msra.mxu0 0.0
  %2335 = vmatprep.subr.mxu0 0.0
  %2336 = vmatpush2.msra.mxu0 0.0
  %2337 = vmatprep.subr.mxu0 0.0
  %2338 = vmatpush2.msra.mxu0 0.0
  %2339 = vmatprep.subr.mxu0 0.0
  %2340 = vmatpush2.msra.mxu0 0.0
  %2341 = vmatprep.subr.mxu0 0.0
  %2342 = vmatpush2.msra.mxu0 0.0
  %2343 = vmatprep.subr.mxu0 0.0
  %2344 = vmatpush2.msra.mxu0 0.0
  %2345 = vmatprep.subr.mxu0 0.0
  %2346 = vmatpush2.msra.mxu0 0.0
  %2347 = vmatprep.subr.mxu0 0.0
  %2348 = vmatpush2.msra.mxu0 0.0
  %2349 = vmatprep.subr.mxu0 0.0
  %2350 = vmatpush2.msra.mxu0 0.0
  %2351 = vmatprep.subr.mxu0 0.0
  %2352 = vmatpush2.msra.mxu0 0.0
  %2353 = vmatprep.subr.mxu0 0.0
  %2354 = vmatpush2.msra.mxu0 0.0
  %2355 = vmatprep.subr.mxu0 0.0
  %2356 = vmatpush2.msra.mxu0 0.0
  %2357 = vmatprep.mubr.f32.mxu0 0.0
  %2358 = vmatmul.mubr.f32.gmra.mxu0 %v2291
  %v2359 = vpop.f32.mrf.mxu0
  %v2360 = vadd.f32 0.0, %v2359
  %v2361 = vpop.f32.mrf.mxu0
  %v2362 = vadd.f32 0.0, %v2361
  %2363 = vdwg.mxu0
  %v2364 = vadd.f32 %v2288, %v2360
  %v2365 = vadd.f32 %v2289, %v2362
  %v2366 = vxor.u32 %v2364, 2147483648
  %v2367 = vxor.u32 %v2365, 2147483648
  %v2368 = vmul.f32 %v2366, 1.442695
  %v2369 = vpow.pop %v2368
  %v2370 = vmul.f32 %v2367, 1.442695
  %v2371 = vpow.pop %v2370
  %v2372 = vadd.f32 %v2369, 1.0
  %v2373 = vadd.f32 %v2371, 1.0
  %v2374 = vrcp.pop %v2372
  %v2375 = vmul.f32 1.0, %v2374
  %v2376 = vrcp.pop %v2373
  %v2377 = vmul.f32 1.0, %v2376
  %v2378 = vtanh.pop %v2365
  %v2379 = vmul.f32 %v2375, %v2279
  %2381 = vrot.lane.b32.xlu0 %v2378, 64
  %v2382 = vpop.permute.xlu0 %2381
  %v2384 = vmul.f32 %v2375, %v2382
  %2386 = vrot.lane.b32.xlu0 %v2384, 64
  %v2387 = vpop.permute.xlu0 %2386
  %v2389 = vadd.f32 %v2379, %v2387
  %v2390 = vtanh.pop %v2389
  %2392 = vrot.lane.b32.xlu0 %v2390, 64
  %v2393 = vpop.permute.xlu0 %2392
  %v2395 = vmul.f32 %v2377, %v2393
  %2396 = vst.msk [vmem:[#allocation4 + $0x30] sm:$0xff] %vm592, %v2395
  %2397 = vst.msk [vmem:[#allocation4 + $0x8] sm:$0xff] %vm594, %v2395
  %v2398 = vld [vmem:[#allocation2 + $0x70] sm:$0xff]
  %v2399 = vld [vmem:[#allocation2 + $0x78] sm:$0xff]
  %v2401 = vsel %vm308, %v2395, 0
  %2403 = vmatprep.subr.mxu0 0.0
  %2404 = vmatpush1.msra.mxu0 0.0
  %2405 = vmatprep.subr.mxu0 0.0
  %2406 = vmatpush1.msra.mxu0 0.0
  %2407 = vmatprep.subr.mxu0 0.0
  %2408 = vmatpush1.msra.mxu0 0.0
  %2409 = vmatprep.subr.mxu0 0.0
  %2410 = vmatpush1.msra.mxu0 0.0
  %2411 = vmatprep.subr.mxu0 0.0
  %2412 = vmatpush1.msra.mxu0 0.0
  %2413 = vmatprep.subr.mxu0 0.0
  %2414 = vmatpush1.msra.mxu0 0.0
  %2415 = vmatprep.subr.mxu0 0.0
  %2416 = vmatpush1.msra.mxu0 0.0
  %2417 = vmatprep.subr.mxu0 0.0
  %2418 = vmatpush1.msra.mxu0 0.0
  %2419 = vmatprep.subr.mxu0 %v1619
  %2420 = vmatpush1.msra.mxu0 %v1618
  %2421 = vmatprep.subr.mxu0 %v1617
  %2422 = vmatpush1.msra.mxu0 %v1616
  %2423 = vmatprep.subr.mxu0 %v1615
  %2424 = vmatpush1.msra.mxu0 %v1614
  %2425 = vmatprep.subr.mxu0 %v1613
  %2426 = vmatpush1.msra.mxu0 %v1612
  %2427 = vmatprep.subr.mxu0 %v1611
  %2428 = vmatpush1.msra.mxu0 %v1610
  %2429 = vmatprep.subr.mxu0 %v1609
  %2430 = vmatpush1.msra.mxu0 %v1608
  %2431 = vmatprep.subr.mxu0 %v1607
  %2432 = vmatpush1.msra.mxu0 %v1606
  %2433 = vmatprep.subr.mxu0 %v1605
  %2434 = vmatpush1.msra.mxu0 %v1604
  %2435 = vmatprep.subr.mxu0 0.0
  %2436 = vmatpush2.msra.mxu0 0.0
  %2437 = vmatprep.subr.mxu0 0.0
  %2438 = vmatpush2.msra.mxu0 0.0
  %2439 = vmatprep.subr.mxu0 0.0
  %2440 = vmatpush2.msra.mxu0 0.0
  %2441 = vmatprep.subr.mxu0 0.0
  %2442 = vmatpush2.msra.mxu0 0.0
  %2443 = vmatprep.subr.mxu0 0.0
  %2444 = vmatpush2.msra.mxu0 0.0
  %2445 = vmatprep.subr.mxu0 0.0
  %2446 = vmatpush2.msra.mxu0 0.0
  %2447 = vmatprep.subr.mxu0 0.0
  %2448 = vmatpush2.msra.mxu0 0.0
  %2449 = vmatprep.subr.mxu0 0.0
  %2450 = vmatpush2.msra.mxu0 0.0
  %2451 = vmatprep.subr.mxu0 0.0
  %2452 = vmatpush2.msra.mxu0 0.0
  %2453 = vmatprep.subr.mxu0 0.0
  %2454 = vmatpush2.msra.mxu0 0.0
  %2455 = vmatprep.subr.mxu0 0.0
  %2456 = vmatpush2.msra.mxu0 0.0
  %2457 = vmatprep.subr.mxu0 0.0
  %2458 = vmatpush2.msra.mxu0 0.0
  %2459 = vmatprep.subr.mxu0 0.0
  %2460 = vmatpush2.msra.mxu0 0.0
  %2461 = vmatprep.subr.mxu0 0.0
  %2462 = vmatpush2.msra.mxu0 0.0
  %2463 = vmatprep.subr.mxu0 0.0
  %2464 = vmatpush2.msra.mxu0 0.0
  %2465 = vmatprep.subr.mxu0 0.0
  %2466 = vmatpush2.msra.mxu0 0.0
  %2467 = vmatprep.mubr.f32.mxu0 0.0
  %2468 = vmatmul.mubr.f32.gmra.mxu0 %v2401
  %v2469 = vpop.f32.mrf.mxu0
  %v2470 = vadd.f32 0.0, %v2469
  %v2471 = vpop.f32.mrf.mxu0
  %v2472 = vadd.f32 0.0, %v2471
  %2473 = vdwg.mxu0
  %v2474 = vadd.f32 %v2398, %v2470
  %v2475 = vadd.f32 %v2399, %v2472
  %v2476 = vxor.u32 %v2474, 2147483648
  %v2477 = vxor.u32 %v2475, 2147483648
  %v2478 = vmul.f32 %v2476, 1.442695
  %v2479 = vpow.pop %v2478
  %v2480 = vmul.f32 %v2477, 1.442695
  %v2481 = vpow.pop %v2480
  %v2482 = vadd.f32 %v2479, 1.0
  %v2483 = vadd.f32 %v2481, 1.0
  %v2484 = vrcp.pop %v2482
  %v2485 = vmul.f32 1.0, %v2484
  %v2486 = vrcp.pop %v2483
  %v2487 = vmul.f32 1.0, %v2486
  %v2488 = vtanh.pop %v2475
  %v2489 = vmul.f32 %v2485, %v2389
  %2491 = vrot.lane.b32.xlu0 %v2488, 64
  %v2492 = vpop.permute.xlu0 %2491
  %v2494 = vmul.f32 %v2485, %v2492
  %2496 = vrot.lane.b32.xlu0 %v2494, 64
  %v2497 = vpop.permute.xlu0 %2496
  %v2499 = vadd.f32 %v2489, %v2497
  %v2500 = vtanh.pop %v2499
  %2502 = vrot.lane.b32.xlu0 %v2500, 64
  %v2503 = vpop.permute.xlu0 %2502
  %v2505 = vmul.f32 %v2487, %v2503
  %2506 = vst.msk [vmem:[#allocation4 + $0x38] sm:$0xff] %vm592, %v2505
  %2507 = vst.msk [vmem:[#allocation4] sm:$0xff] %vm594, %v2505
  %s2508 = scalar_lea.vmem %s12, 8
  %2509 = vst.msk [vmem:[%s2508] sm:$0xff] %vm308, %v2505
  %2511 = vrot.lane.b32.xlu0 %v2499, 64
  %v2512 = vpop.permute.xlu0 %2511
  %s2514 = scalar_lea.vmem %s13, 8
  %2515 = vst.msk [vmem:[%s2514] sm:$0xff] %vm308, %v2512
  %s2516 = smul.u32 64, 1
  %s2517 = sshll.u32 %s2516, 4
  %2518 = dma.done %s214, %s2517
  %v2519 = vld [vmem:[#allocation4] sm:$0xff]
  %v2520 = vld [vmem:[#allocation4 + $0x8] sm:$0xff]
  %v2521 = vld [vmem:[#allocation4 + $0x10] sm:$0xff]
  %v2522 = vld [vmem:[#allocation4 + $0x18] sm:$0xff]
  %v2523 = vld [vmem:[#allocation4 + $0x20] sm:$0xff]
  %v2524 = vld [vmem:[#allocation4 + $0x28] sm:$0xff]
  %v2525 = vld [vmem:[#allocation4 + $0x30] sm:$0xff]
  %v2526 = vld [vmem:[#allocation4 + $0x38] sm:$0xff]
  %v2527 = vld [vmem:[#allocation7] sm:$0xff]
  %v2528 = vld [vmem:[#allocation7 + $0x8] sm:$0xff]
  %v2529 = vld [vmem:[#allocation7 + $0x10] sm:$0xff]
  %v2530 = vld [vmem:[#allocation7 + $0x18] sm:$0xff]
  %v2531 = vld [vmem:[#allocation7 + $0x20] sm:$0xff]
  %v2532 = vld [vmem:[#allocation7 + $0x28] sm:$0xff]
  %v2533 = vld [vmem:[#allocation7 + $0x30] sm:$0xff]
  %v2534 = vld [vmem:[#allocation7 + $0x38] sm:$0xff]
  %v2535 = vld [vmem:[%s10] sm:$0x1]
  %v2537 = vlaneseq
  %v2538 = vshrl.u32 %v2537, 7
  %v2539 = vsub.s32 0, %v2538
  %v2540 = vrot.slane %v2535, %v2539
  %v2543 = vsel %vm308, %v2519, 0
  %v2546 = vsel %vm308, %v2520, 0
  %v2549 = vsel %vm308, %v2521, 0
  %v2552 = vsel %vm308, %v2522, 0
  %v2555 = vsel %vm308, %v2523, 0
  %v2558 = vsel %vm308, %v2524, 0
  %v2561 = vsel %vm308, %v2525, 0
  %v2564 = vsel %vm308, %v2526, 0
  %2566 = vmatprep.subr.mxu0 0.0
  %2567 = vmatpush1.msra.mxu0 0.0
  %2568 = vmatprep.subr.mxu0 0.0
  %2569 = vmatpush1.msra.mxu0 0.0
  %2570 = vmatprep.subr.mxu0 0.0
  %2571 = vmatpush1.msra.mxu0 0.0
  %2572 = vmatprep.subr.mxu0 0.0
  %2573 = vmatpush1.msra.mxu0 0.0
  %2574 = vmatprep.subr.mxu0 0.0
  %2575 = vmatpush1.msra.mxu0 0.0
  %2576 = vmatprep.subr.mxu0 0.0
  %2577 = vmatpush1.msra.mxu0 0.0
  %2578 = vmatprep.subr.mxu0 0.0
  %2579 = vmatpush1.msra.mxu0 0.0
  %2580 = vmatprep.subr.mxu0 0.0
  %2581 = vmatpush1.msra.mxu0 0.0
  %2582 = vmatprep.subr.mxu0 0.0
  %2583 = vmatpush1.msra.mxu0 %v2534
  %2584 = vmatprep.subr.mxu0 0.0
  %2585 = vmatpush1.msra.mxu0 %v2533
  %2586 = vmatprep.subr.mxu0 0.0
  %2587 = vmatpush1.msra.mxu0 %v2532
  %2588 = vmatprep.subr.mxu0 0.0
  %2589 = vmatpush1.msra.mxu0 %v2531
  %2590 = vmatprep.subr.mxu0 0.0
  %2591 = vmatpush1.msra.mxu0 %v2530
  %2592 = vmatprep.subr.mxu0 0.0
  %2593 = vmatpush1.msra.mxu0 %v2529
  %2594 = vmatprep.subr.mxu0 0.0
  %2595 = vmatpush1.msra.mxu0 %v2528
  %2596 = vmatprep.subr.mxu0 0.0
  %2597 = vmatpush1.msra.mxu0 %v2527
  %2598 = vmatprep.subr.mxu0 0.0
  %2599 = vmatpush2.msra.mxu0 0.0
  %2600 = vmatprep.subr.mxu0 0.0
  %2601 = vmatpush2.msra.mxu0 0.0
  %2602 = vmatprep.subr.mxu0 0.0
  %2603 = vmatpush2.msra.mxu0 0.0
  %2604 = vmatprep.subr.mxu0 0.0
  %2605 = vmatpush2.msra.mxu0 0.0
  %2606 = vmatprep.subr.mxu0 0.0
  %2607 = vmatpush2.msra.mxu0 0.0
  %2608 = vmatprep.subr.mxu0 0.0
  %2609 = vmatpush2.msra.mxu0 0.0
  %2610 = vmatprep.subr.mxu0 0.0
  %2611 = vmatpush2.msra.mxu0 0.0
  %2612 = vmatprep.subr.mxu0 0.0
  %2613 = vmatpush2.msra.mxu0 0.0
  %2614 = vmatprep.subr.mxu0 0.0
  %2615 = vmatpush2.msra.mxu0 0.0
  %2616 = vmatprep.subr.mxu0 0.0
  %2617 = vmatpush2.msra.mxu0 0.0
  %2618 = vmatprep.subr.mxu0 0.0
  %2619 = vmatpush2.msra.mxu0 0.0
  %2620 = vmatprep.subr.mxu0 0.0
  %2621 = vmatpush2.msra.mxu0 0.0
  %2622 = vmatprep.subr.mxu0 0.0
  %2623 = vmatpush2.msra.mxu0 0.0
  %2624 = vmatprep.subr.mxu0 0.0
  %2625 = vmatpush2.msra.mxu0 0.0
  %2626 = vmatprep.subr.mxu0 0.0
  %2627 = vmatpush2.msra.mxu0 0.0
  %2628 = vmatprep.subr.mxu0 0.0
  %2629 = vmatpush2.msra.mxu0 0.0
  %2630 = vmatprep.mubr.f32.mxu0 0.0
  %2631 = vmatmul.mubr.f32.gmra.mxu0 %v2543
  %v2632 = vpop.f32.mrf.mxu0
  %v2633 = vadd.f32 %v2540, %v2632
  %v2634 = vpop.f32.mrf.mxu0
  %2635 = vmatprep.mubr.f32.mxu0 0.0
  %2636 = vmatmul.mubr.f32.gmra.mxu0 %v2546
  %v2637 = vpop.f32.mrf.mxu0
  %v2638 = vadd.f32 %v2540, %v2637
  %v2639 = vpop.f32.mrf.mxu0
  %2640 = vmatprep.mubr.f32.mxu0 0.0
  %2641 = vmatmul.mubr.f32.gmra.mxu0 %v2549
  %v2642 = vpop.f32.mrf.mxu0
  %v2643 = vadd.f32 %v2540, %v2642
  %v2644 = vpop.f32.mrf.mxu0
  %2645 = vmatprep.mubr.f32.mxu0 0.0
  %2646 = vmatmul.mubr.f32.gmra.mxu0 %v2552
  %v2647 = vpop.f32.mrf.mxu0
  %v2648 = vadd.f32 %v2540, %v2647
  %v2649 = vpop.f32.mrf.mxu0
  %2650 = vmatprep.mubr.f32.mxu0 0.0
  %2651 = vmatmul.mubr.f32.gmra.mxu0 %v2555
  %v2652 = vpop.f32.mrf.mxu0
  %v2653 = vadd.f32 %v2540, %v2652
  %v2654 = vpop.f32.mrf.mxu0
  %2655 = vmatprep.mubr.f32.mxu0 0.0
  %2656 = vmatmul.mubr.f32.gmra.mxu0 %v2558
  %v2657 = vpop.f32.mrf.mxu0
  %v2658 = vadd.f32 %v2540, %v2657
  %v2659 = vpop.f32.mrf.mxu0
  %2660 = vmatprep.mubr.f32.mxu0 0.0
  %2661 = vmatmul.mubr.f32.gmra.mxu0 %v2561
  %v2662 = vpop.f32.mrf.mxu0
  %v2663 = vadd.f32 %v2540, %v2662
  %v2664 = vpop.f32.mrf.mxu0
  %2665 = vmatprep.mubr.f32.mxu0 0.0
  %2666 = vmatmul.mubr.f32.gmra.mxu0 %v2564
  %v2667 = vpop.f32.mrf.mxu0
  %v2668 = vadd.f32 %v2540, %v2667
  %v2669 = vpop.f32.mrf.mxu0
  %2670 = vdwg.mxu0
  %2671 = vst [vmem:[%s11] sm:$0xff] %v2633
  %2672 = vst [vmem:[%s11 + $0x8] sm:$0xff] %v2638
  %2673 = vst [vmem:[%s11 + $0x10] sm:$0xff] %v2643
  %2674 = vst [vmem:[%s11 + $0x18] sm:$0xff] %v2648
  %2675 = vst [vmem:[%s11 + $0x20] sm:$0xff] %v2653
  %2676 = vst [vmem:[%s11 + $0x28] sm:$0xff] %v2658
  %2677 = vst [vmem:[%s11 + $0x30] sm:$0xff] %v2663
  %2678 = vst [vmem:[%s11 + $0x38] sm:$0xff] %v2668
  // Predicated region
  $region136: #{blstm_forward.1} parent=0 // pred_check
    _
  $region137: #{blstm_forward.1} parent=0 // pred_check_branch
    %2680 = sbr.rel (0) target = $region139
  $region138: #{blstm_forward.1} parent=0 // pred_region
    _
  $region139: #{blstm_forward.1} parent=0 // pred_fallthru
    _
  // Predicated region
  $region140: #{blstm_forward.1} parent=0 // pred_check
    _
  $region141: #{blstm_forward.1} parent=0 // pred_check_branch
    %2682 = sbr.rel (0) target = $region143
  $region142: #{blstm_forward.1} parent=0 // pred_region
    _
  $region143: #{blstm_forward.1} parent=0 // pred_fallthru
    _
  // Predicated region
  $region144: #{blstm_forward.1} parent=0 // pred_check
    _
  $region145: #{blstm_forward.1} parent=0 // pred_check_branch
    %2684 = sbr.rel (0) target = $region147
  $region146: #{blstm_forward.1} parent=0 // pred_region
    _
  $region147: #{blstm_forward.1} parent=0 // pred_fallthru
    _
  // Predicated region
  $region148: #{blstm_forward.1} parent=0 // pred_check
    _
  $region149: #{blstm_forward.1} parent=0 // pred_check_branch
    %2686 = sbr.rel (0) target = $region151
  $region150: #{blstm_forward.1} parent=0 // pred_region
    _
  $region151: #{blstm_forward.1} parent=0 // pred_fallthru
    _
  // Predicated region
  $region152: #{blstm_forward.1} parent=0 // pred_check
    _
  $region153: #{blstm_forward.1} parent=0 // pred_check_branch
    %2688 = sbr.rel (0) target = $region155
  $region154: #{blstm_forward.1} parent=0 // pred_region
    _
  $region155: #{blstm_forward.1} parent=0 // pred_fallthru
    _
  // Predicated region
  $region156: #{blstm_forward.1} parent=0 // pred_check
    _
  $region157: #{blstm_forward.1} parent=0 // pred_check_branch
    %2690 = sbr.rel (0) target = $region159
  $region158: #{blstm_forward.1} parent=0 // pred_region
    _
  $region159: #{blstm_forward.1} parent=0 // pred_fallthru
    _
  %2691 = vsyncmov [#allocation8]
  %s2692 = vpop.sfrf %2691
  %p2693 = scmp.eq.s32.totalorder %s2692, 0
  %p2694 = pneg %p2693
  %2696 = shalt.err (%p2694)
  %s2697 = scalar_lea.sflag [#allocation8], 1
  %2698 = vsyncmov %s2697
  %s2699 = vpop.sfrf %2698
  %p2700 = scmp.eq.s32.totalorder %s2699, 0
  %p2701 = pneg %p2700
  %2703 = shalt.err (%p2701)
  %s2704 = scalar_lea.sflag [#allocation8], 2
  %2705 = vsyncmov %s2704
  %s2706 = vpop.sfrf %2705
  %p2707 = scmp.eq.s32.totalorder %s2706, 0
  %p2708 = pneg %p2707
  %2710 = shalt.err (%p2708)

</llo_original>
